<compile_context>
chip_gen: v7x
topology: tpu7x:2x2x1
jax: 0.10.0
libtpu: 0.0.40
codegen_flags: <defaults>
</compile_context>

<pallas_src>
import functools

import jax
import jax.numpy as jnp
from jax.experimental import pallas as pl
from jax.experimental.pallas import tpu as pltpu

LANE = 128
SUBLANE = 8


def _pad_to(n, m):
    return ((n + m - 1) // m) * m


def _forecastnet_kernel(x_ref, eps_ref, w1_ref, w2_ref, wh_ref, b_ref, *rest,
                        T, hpad, opad, is_training):
    """Whole forward pass (all T decoder steps) in one kernel invocation."""
    if is_training:
        tgt_ref, out_ref = rest
    else:
        (out_ref,) = rest

    cd = w1_ref.dtype                    # matmul operand dtype (f32 or bf16)
    f32 = jnp.float32
    B = x_ref.shape[0]

    x_pad = x_ref[...]                   # [B, 128]  (lane-padded flattened input)
    h2 = jnp.zeros((B, hpad), f32)       # [B, 128]
    tail = jnp.zeros((B, opad), f32)     # [B, 128]

    for i in range(T):                   # static unroll; T is small
        # Recurrent cell input: three 128-lane-aligned segments -> cheap concat.
        carry = jnp.concatenate([x_pad, h2, tail], axis=1).astype(cd)  # [B, 384]

        b1 = b_ref[i, :, 0:hpad]                     # [1, 128]
        b2 = b_ref[i, :, hpad:2 * hpad]              # [1, 128]
        bh = b_ref[i, :, 2 * hpad:2 * hpad + 2 * opad]  # [1, 256]

        h1 = jnp.maximum(
            jnp.dot(carry, w1_ref[i], preferred_element_type=f32) + b1, 0.0)
        h2 = jnp.maximum(
            jnp.dot(h1.astype(cd), w2_ref[i], preferred_element_type=f32) + b2, 0.0)

        # Fused mu|sigma head: one matmul, split at a 128-lane boundary.
        head = jnp.dot(h2.astype(cd), wh_ref[i], preferred_element_type=f32) + bh
        mu_ = head[:, :opad]
        z = head[:, opad:]
        # F.softplus (beta=1, threshold=20)
        sigma_ = jnp.where(z > 20.0, z, jnp.log1p(jnp.exp(jnp.minimum(z, 20.0))))

        # TODO(synk): torch.normal's RNG stream cannot be reproduced bit-for-bit;
        # sampling is mu + sigma * eps with eps ~ N(0,1) precomputed in the wrapper.
        sample = mu_ + sigma_ * eps_ref[i, :, :]

        out_ref[0, i, :, :] = sample
        out_ref[1, i, :, :] = mu_
        out_ref[2, i, :, :] = sigma_

        tail = tgt_ref[i, :, :] if is_training else sample


def pack_params(params, din, H, O, compute_dtype=jnp.float32):
    """Re-pack natural (stacked) params into the lane-aligned / fused kernel layout."""
    W1, b1, W2, b2, Wmu, bmu, Wsig, bsig = params
    T = W1.shape[0]
    dpad, hpad, opad = _pad_to(din, LANE), _pad_to(H, LANE), _pad_to(O, LANE)

    # W1: fan_in segments (x | h2 | tail) each padded to 128 lanes; fan_out -> hpad.
    W1p = jnp.zeros((T, dpad + hpad + opad, hpad), jnp.float32)
    W1p = W1p.at[:, :din, :H].set(W1[:, :din, :])
    W1p = W1p.at[:, dpad:dpad + H, :H].set(W1[:, din:din + H, :])
    W1p = W1p.at[:, dpad + hpad:dpad + hpad + O, :H].set(W1[:, din + H:din + H + O, :])

    W2p = jnp.zeros((T, hpad, hpad), jnp.float32).at[:, :H, :H].set(W2)

    # Fused head: mu columns [0:opad], sigma columns [opad:2*opad].
    Whp = jnp.zeros((T, hpad, 2 * opad), jnp.float32)
    Whp = Whp.at[:, :H, :O].set(Wmu)
    Whp = Whp.at[:, :H, opad:opad + O].set(Wsig)

    # All biases stacked into one lane-aligned tensor: [b1 | b2 | bmu | bsig].
    Bs = jnp.zeros((T, 1, 2 * hpad + 2 * opad), jnp.float32)
    Bs = Bs.at[:, :, :H].set(b1)
    Bs = Bs.at[:, :, hpad:hpad + H].set(b2)
    Bs = Bs.at[:, :, 2 * hpad:2 * hpad + O].set(bmu)
    Bs = Bs.at[:, :, 2 * hpad + opad:2 * hpad + opad + O].set(bsig)

    return (W1p.astype(compute_dtype), W2p.astype(compute_dtype),
            Whp.astype(compute_dtype), Bs)


def forecastnet_dense_forward(x, target, eps, params, *, is_training=False,
                              compute_dtype=jnp.float32):
    W1, b1, W2, b2, Wmu, bmu, Wsig, bsig = params
    T, _, H = W1.shape
    B, din = x.shape
    O = Wmu.shape[-1]

    dpad, hpad, opad = _pad_to(din, LANE), _pad_to(H, LANE), _pad_to(O, LANE)
    Bpad = _pad_to(max(B, SUBLANE), SUBLANE)

    W1p, W2p, Whp, Bs = pack_params(params, din, H, O, compute_dtype)

    x_p = jnp.zeros((Bpad, dpad), jnp.float32).at[:B, :din].set(x)
    eps_p = jnp.zeros((T, Bpad, opad), jnp.float32).at[:, :B, :O].set(eps)

    inputs = [x_p, eps_p, W1p, W2p, Whp, Bs]
    if is_training:
        tgt_p = jnp.zeros((T, Bpad, opad), jnp.float32).at[:, :B, :O].set(target)
        inputs.append(tgt_p)

    kern = functools.partial(_forecastnet_kernel, T=T, hpad=hpad, opad=opad,
                             is_training=is_training)

    vmem = pl.BlockSpec(memory_space=pltpu.MemorySpace.VMEM)
    out = pl.pallas_call(
        kern,
        out_shape=jax.ShapeDtypeStruct((3, T, Bpad, opad), jnp.float32),
        in_specs=[vmem] * len(inputs),
        out_specs=vmem,
    )(*inputs)

    out = out[:, :, :B, :O]
    return out[0], out[1], out[2]          # outputs, mu, sigma


def init_params(key, input_dim, hidden_dim, output_dim, in_seq_length, out_seq_length):
    """Deterministic torch.nn.Linear-style init (uniform +-1/sqrt(fan_in))."""
    din = input_dim * in_seq_length
    in_full = din + hidden_dim + output_dim
    T = out_seq_length

    def linear(k, fan_in, fan_out):
        kw, kb = jax.random.split(k)
        bound = 1.0 / (fan_in ** 0.5)
        W = jax.random.uniform(kw, (fan_in, fan_out), jnp.float32, -bound, bound)
        b = jax.random.uniform(kb, (fan_out,), jnp.float32, -bound, bound)
        return W, b

    keys = jax.random.split(key, 4 * T)

    # hidden_layer1: step 0 has fan_in = din, steps >0 have fan_in = in_full.
    W1 = jnp.zeros((T, in_full, hidden_dim), jnp.float32)
    b1 = jnp.zeros((T, 1, hidden_dim), jnp.float32)
    for i in range(T):
        fan_in = din if i == 0 else in_full
        W, b = linear(keys[i], fan_in, hidden_dim)
        W1 = W1.at[i, :fan_in, :].set(W)
        b1 = b1.at[i, 0].set(b)

    def stack(koff, fan_in, fan_out):
        Ws, bs = [], []
        for i in range(T):
            W, b = linear(keys[koff + i], fan_in, fan_out)
            Ws.append(W)
            bs.append(b[None])
        return jnp.stack(Ws), jnp.stack(bs)

    W2, b2 = stack(T, hidden_dim, hidden_dim)
    Wmu, bmu = stack(2 * T, hidden_dim, output_dim)
    Wsig, bsig = stack(3 * T, hidden_dim, output_dim)
    return W1, b1, W2, b2, Wmu, bmu, Wsig, bsig


def reference_forward(x, target, eps, params, *, is_training=False):
    """Pure-JAX reference mirroring the PyTorch forward."""
    W1, b1, W2, b2, Wmu, bmu, Wsig, bsig = params
    T, in_full, _ = W1.shape
    B, din = x.shape
    carry = jnp.concatenate([x, jnp.zeros((B, in_full - din), jnp.float32)], axis=1)
    outs, mus, sigmas = [], [], []
    for i in range(T):
        h1 = jax.nn.relu(carry @ W1[i] + b1[i])
        h2 = jax.nn.relu(h1 @ W2[i] + b2[i])
        mu_ = h2 @ Wmu[i] + bmu[i]
        sigma_ = jax.nn.softplus(h2 @ Wsig[i] + bsig[i])
        sample = mu_ + sigma_ * eps[i]
        tail = target[i] if is_training else sample
        carry = jnp.concatenate([x, h2, tail], axis=1)
        outs.append(sample)
        mus.append(mu_)
        sigmas.append(sigma_)
    return jnp.stack(outs), jnp.stack(mus), jnp.stack(sigmas)


if __name__ == "__main__":
    # Small shapes consistent with the module
    input_dim, hidden_dim, output_dim = 4, 32, 4
    in_seq_length, out_seq_length = 8, 5
    batch = 2

    key = jax.random.PRNGKey(0)
    kx, kt, keps, kp = jax.random.split(key, 4)

    din = input_dim * in_seq_length
    x = jax.random.normal(kx, (batch, din), jnp.float32)
    target = jax.random.normal(kt, (out_seq_length, batch, output_dim), jnp.float32)
    eps = jax.random.normal(keps, (out_seq_length, batch, output_dim), jnp.float32)

    params = init_params(kp, input_dim, hidden_dim, output_dim,
                         in_seq_length, out_seq_length)

    # f32 matmuls: inference and training paths vs. the pure-JAX reference.
    for train in (False, True):
        outs = forecastnet_dense_forward(x, target, eps, params, is_training=train)
        jax.block_until_ready(outs)
        refs = reference_forward(x, target, eps, params, is_training=train)
        for a, b in zip(outs, refs):
            assert jnp.allclose(a, b, atol=1e-3, rtol=1e-3), f"mismatch (train={train})"

    # bf16 matmul operands with f32 accumulation (v6e/v7x MXU-native) — looser check.
    outs_bf16 = forecastnet_dense_forward(x, target, eps, params, is_training=False,
                                          compute_dtype=jnp.bfloat16)
    jax.block_until_ready(outs_bf16)
    refs = reference_forward(x, target, eps, params, is_training=False)
    for a, b in zip(outs_bf16, refs):
        assert jnp.allclose(a, b, atol=5e-2, rtol=5e-2), "bf16 path mismatch"

    print("KERNEL_OK")
</pallas_src>

<mosaic_0001>
module attributes {stable_mosaic.version = 11 : i64} {
  func.func @_forecastnet_kernel(%arg0: memref<8x128xf32, #tpu.memory_space<vmem>>, %arg1: memref<5x8x128xf32, #tpu.memory_space<vmem>>, %arg2: memref<5x384x128xf32, #tpu.memory_space<vmem>>, %arg3: memref<5x128x128xf32, #tpu.memory_space<vmem>>, %arg4: memref<5x128x256xf32, #tpu.memory_space<vmem>>, %arg5: memref<5x1x512xf32, #tpu.memory_space<vmem>>, %arg6: memref<3x5x8x128xf32, #tpu.memory_space<vmem>>) attributes {dimension_semantics = [], scalar_prefetch = 0 : i64, scratch_operands = 0 : i64, tpu.core_type = #tpu.core_type<tc>} {
    %c0 = arith.constant 0 : index
    %c0_0 = arith.constant 0 : index
    %0 = vector.load %arg0[%c0, %c0_0] : memref<8x128xf32, #tpu.memory_space<vmem>>, vector<8x128xf32>
    %cst = arith.constant 0.000000e+00 : f32
    %1 = vector.broadcast %cst : f32 to vector<8x128xf32>
    %cst_1 = arith.constant 0.000000e+00 : f32
    %2 = vector.broadcast %cst_1 : f32 to vector<8x128xf32>
    %3 = tpu.concatenate %0, %1, %2 in 1 : vector<8x128xf32>, vector<8x128xf32>, vector<8x128xf32> -> vector<8x384xf32>
    %c0_2 = arith.constant 0 : index
    %c0_3 = arith.constant 0 : index
    %c0_4 = arith.constant 0 : index
    %4 = vector.load %arg5[%c0_2, %c0_3, %c0_4] : memref<5x1x512xf32, #tpu.memory_space<vmem>>, vector<1x1x128xf32>
    %5 = vector.shape_cast %4 : vector<1x1x128xf32> to vector<1x128xf32>
    %c0_5 = arith.constant 0 : index
    %c0_6 = arith.constant 0 : index
    %c128 = arith.constant 128 : index
    %6 = vector.load %arg5[%c0_5, %c0_6, %c128] : memref<5x1x512xf32, #tpu.memory_space<vmem>>, vector<1x1x128xf32>
    %7 = vector.shape_cast %6 : vector<1x1x128xf32> to vector<1x128xf32>
    %c0_7 = arith.constant 0 : index
    %c0_8 = arith.constant 0 : index
    %c256 = arith.constant 256 : index
    %8 = vector.load %arg5[%c0_7, %c0_8, %c256] : memref<5x1x512xf32, #tpu.memory_space<vmem>>, vector<1x1x256xf32>
    %9 = vector.shape_cast %8 : vector<1x1x256xf32> to vector<1x256xf32>
    %c0_9 = arith.constant 0 : index
    %c0_10 = arith.constant 0 : index
    %c0_11 = arith.constant 0 : index
    %10 = vector.load %arg2[%c0_9, %c0_10, %c0_11] : memref<5x384x128xf32, #tpu.memory_space<vmem>>, vector<1x384x128xf32>
    %11 = vector.shape_cast %10 : vector<1x384x128xf32> to vector<384x128xf32>
    %cst_12 = arith.constant dense<0.000000e+00> : vector<8x128xf32>
    %12 = tpu.matmul %3, %11, %cst_12 {dimension_numbers = #tpu.dot_dimension_numbers<[1], [0], [0], [1], [0, 0, 1, 1], [], []>} : vector<8x384xf32>, vector<384x128xf32>, vector<8x128xf32> -> vector<8x128xf32>
    %13 = vector.broadcast %5 : vector<1x128xf32> to vector<8x128xf32>
    %14 = arith.addf %12, %13 : vector<8x128xf32>
    %cst_13 = arith.constant 0.000000e+00 : f32
    %15 = vector.broadcast %cst_13 : f32 to vector<8x128xf32>
    %16 = arith.maximumf %14, %15 : vector<8x128xf32>
    %c0_14 = arith.constant 0 : index
    %c0_15 = arith.constant 0 : index
    %c0_16 = arith.constant 0 : index
    %17 = vector.load %arg3[%c0_14, %c0_15, %c0_16] : memref<5x128x128xf32, #tpu.memory_space<vmem>>, vector<1x128x128xf32>
    %18 = vector.shape_cast %17 : vector<1x128x128xf32> to vector<128x128xf32>
    %cst_17 = arith.constant dense<0.000000e+00> : vector<8x128xf32>
    %19 = tpu.matmul %16, %18, %cst_17 {dimension_numbers = #tpu.dot_dimension_numbers<[1], [0], [0], [1], [0, 0, 1, 1], [], []>} : vector<8x128xf32>, vector<128x128xf32>, vector<8x128xf32> -> vector<8x128xf32>
    %20 = vector.broadcast %7 : vector<1x128xf32> to vector<8x128xf32>
    %21 = arith.addf %19, %20 : vector<8x128xf32>
    %cst_18 = arith.constant 0.000000e+00 : f32
    %22 = vector.broadcast %cst_18 : f32 to vector<8x128xf32>
    %23 = arith.maximumf %21, %22 : vector<8x128xf32>
    %c0_19 = arith.constant 0 : index
    %c0_20 = arith.constant 0 : index
    %c0_21 = arith.constant 0 : index
    %24 = vector.load %arg4[%c0_19, %c0_20, %c0_21] : memref<5x128x256xf32, #tpu.memory_space<vmem>>, vector<1x128x256xf32>
    %25 = vector.shape_cast %24 : vector<1x128x256xf32> to vector<128x256xf32>
    %cst_22 = arith.constant dense<0.000000e+00> : vector<8x256xf32>
    %26 = tpu.matmul %23, %25, %cst_22 {dimension_numbers = #tpu.dot_dimension_numbers<[1], [0], [0], [1], [0, 0, 1, 1], [], []>} : vector<8x128xf32>, vector<128x256xf32>, vector<8x256xf32> -> vector<8x256xf32>
    %27 = vector.broadcast %9 : vector<1x256xf32> to vector<8x256xf32>
    %28 = arith.addf %26, %27 : vector<8x256xf32>
    %29 = vector.extract_strided_slice %28 {offsets = [0, 0], sizes = [8, 128], strides = [1, 1]} : vector<8x256xf32> to vector<8x128xf32>
    %30 = vector.extract_strided_slice %28 {offsets = [0, 128], sizes = [8, 128], strides = [1, 1]} : vector<8x256xf32> to vector<8x128xf32>
    %cst_23 = arith.constant 2.000000e+01 : f32
    %31 = vector.broadcast %cst_23 : f32 to vector<8x128xf32>
    %32 = arith.cmpf ogt, %30, %31 : vector<8x128xf32>
    %cst_24 = arith.constant 2.000000e+01 : f32
    %33 = vector.broadcast %cst_24 : f32 to vector<8x128xf32>
    %34 = arith.minimumf %30, %33 : vector<8x128xf32>
    %35 = math.exp %34 : vector<8x128xf32>
    %36 = math.log1p %35 : vector<8x128xf32>
    %37 = arith.select %32, %30, %36 : vector<8x128xi1>, vector<8x128xf32>
    %c0_25 = arith.constant 0 : index
    %c0_26 = arith.constant 0 : index
    %c0_27 = arith.constant 0 : index
    %38 = vector.load %arg1[%c0_25, %c0_26, %c0_27] : memref<5x8x128xf32, #tpu.memory_space<vmem>>, vector<1x8x128xf32>
    %39 = vector.shape_cast %38 : vector<1x8x128xf32> to vector<8x128xf32>
    %40 = arith.mulf %37, %39 : vector<8x128xf32>
    %41 = arith.addf %29, %40 : vector<8x128xf32>
    %c0_28 = arith.constant 0 : index
    %c0_29 = arith.constant 0 : index
    %c0_30 = arith.constant 0 : index
    %c0_31 = arith.constant 0 : index
    %42 = vector.load %arg6[%c0_28, %c0_29, %c0_30, %c0_31] : memref<3x5x8x128xf32, #tpu.memory_space<vmem>>, vector<1x1x8x128xf32>
    %43 = vector.shape_cast %42 : vector<1x1x8x128xf32> to vector<8x128xf32>
    %44 = vector.shape_cast %41 : vector<8x128xf32> to vector<1x1x8x128xf32>
    tpu.vector_store %arg6[%c0_28, %c0_29, %c0_30, %c0_31], %44 {strides = array<i32>} : memref<3x5x8x128xf32, #tpu.memory_space<vmem>>, vector<1x1x8x128xf32>,
    %c1 = arith.constant 1 : index
    %c0_32 = arith.constant 0 : index
    %c0_33 = arith.constant 0 : index
    %c0_34 = arith.constant 0 : index
    %45 = vector.load %arg6[%c1, %c0_32, %c0_33, %c0_34] : memref<3x5x8x128xf32, #tpu.memory_space<vmem>>, vector<1x1x8x128xf32>
    %46 = vector.shape_cast %45 : vector<1x1x8x128xf32> to vector<8x128xf32>
    %47 = vector.shape_cast %29 : vector<8x128xf32> to vector<1x1x8x128xf32>
    tpu.vector_store %arg6[%c1, %c0_32, %c0_33, %c0_34], %47 {strides = array<i32>} : memref<3x5x8x128xf32, #tpu.memory_space<vmem>>, vector<1x1x8x128xf32>,
    %c2 = arith.constant 2 : index
    %c0_35 = arith.constant 0 : index
    %c0_36 = arith.constant 0 : index
    %c0_37 = arith.constant 0 : index
    %48 = vector.load %arg6[%c2, %c0_35, %c0_36, %c0_37] : memref<3x5x8x128xf32, #tpu.memory_space<vmem>>, vector<1x1x8x128xf32>
    %49 = vector.shape_cast %48 : vector<1x1x8x128xf32> to vector<8x128xf32>
    %50 = vector.shape_cast %37 : vector<8x128xf32> to vector<1x1x8x128xf32>
    tpu.vector_store %arg6[%c2, %c0_35, %c0_36, %c0_37], %50 {strides = array<i32>} : memref<3x5x8x128xf32, #tpu.memory_space<vmem>>, vector<1x1x8x128xf32>,
    %51 = tpu.concatenate %0, %23, %41 in 1 : vector<8x128xf32>, vector<8x128xf32>, vector<8x128xf32> -> vector<8x384xf32>
    %c1_38 = arith.constant 1 : index
    %c0_39 = arith.constant 0 : index
    %c0_40 = arith.constant 0 : index
    %52 = vector.load %arg5[%c1_38, %c0_39, %c0_40] : memref<5x1x512xf32, #tpu.memory_space<vmem>>, vector<1x1x128xf32>
    %53 = vector.shape_cast %52 : vector<1x1x128xf32> to vector<1x128xf32>
    %c1_41 = arith.constant 1 : index
    %c0_42 = arith.constant 0 : index
    %c128_43 = arith.constant 128 : index
    %54 = vector.load %arg5[%c1_41, %c0_42, %c128_43] : memref<5x1x512xf32, #tpu.memory_space<vmem>>, vector<1x1x128xf32>
    %55 = vector.shape_cast %54 : vector<1x1x128xf32> to vector<1x128xf32>
    %c1_44 = arith.constant 1 : index
    %c0_45 = arith.constant 0 : index
    %c256_46 = arith.constant 256 : index
    %56 = vector.load %arg5[%c1_44, %c0_45, %c256_46] : memref<5x1x512xf32, #tpu.memory_space<vmem>>, vector<1x1x256xf32>
    %57 = vector.shape_cast %56 : vector<1x1x256xf32> to vector<1x256xf32>
    %c1_47 = arith.constant 1 : index
    %c0_48 = arith.constant 0 : index
    %c0_49 = arith.constant 0 : index
    %58 = vector.load %arg2[%c1_47, %c0_48, %c0_49] : memref<5x384x128xf32, #tpu.memory_space<vmem>>, vector<1x384x128xf32>
    %59 = vector.shape_cast %58 : vector<1x384x128xf32> to vector<384x128xf32>
    %cst_50 = arith.constant dense<0.000000e+00> : vector<8x128xf32>
    %60 = tpu.matmul %51, %59, %cst_50 {dimension_numbers = #tpu.dot_dimension_numbers<[1], [0], [0], [1], [0, 0, 1, 1], [], []>} : vector<8x384xf32>, vector<384x128xf32>, vector<8x128xf32> -> vector<8x128xf32>
    %61 = vector.broadcast %53 : vector<1x128xf32> to vector<8x128xf32>
    %62 = arith.addf %60, %61 : vector<8x128xf32>
    %cst_51 = arith.constant 0.000000e+00 : f32
    %63 = vector.broadcast %cst_51 : f32 to vector<8x128xf32>
    %64 = arith.maximumf %62, %63 : vector<8x128xf32>
    %c1_52 = arith.constant 1 : index
    %c0_53 = arith.constant 0 : index
    %c0_54 = arith.constant 0 : index
    %65 = vector.load %arg3[%c1_52, %c0_53, %c0_54] : memref<5x128x128xf32, #tpu.memory_space<vmem>>, vector<1x128x128xf32>
    %66 = vector.shape_cast %65 : vector<1x128x128xf32> to vector<128x128xf32>
    %cst_55 = arith.constant dense<0.000000e+00> : vector<8x128xf32>
    %67 = tpu.matmul %64, %66, %cst_55 {dimension_numbers = #tpu.dot_dimension_numbers<[1], [0], [0], [1], [0, 0, 1, 1], [], []>} : vector<8x128xf32>, vector<128x128xf32>, vector<8x128xf32> -> vector<8x128xf32>
    %68 = vector.broadcast %55 : vector<1x128xf32> to vector<8x128xf32>
    %69 = arith.addf %67, %68 : vector<8x128xf32>
    %cst_56 = arith.constant 0.000000e+00 : f32
    %70 = vector.broadcast %cst_56 : f32 to vector<8x128xf32>
    %71 = arith.maximumf %69, %70 : vector<8x128xf32>
    %c1_57 = arith.constant 1 : index
    %c0_58 = arith.constant 0 : index
    %c0_59 = arith.constant 0 : index
    %72 = vector.load %arg4[%c1_57, %c0_58, %c0_59] : memref<5x128x256xf32, #tpu.memory_space<vmem>>, vector<1x128x256xf32>
    %73 = vector.shape_cast %72 : vector<1x128x256xf32> to vector<128x256xf32>
    %cst_60 = arith.constant dense<0.000000e+00> : vector<8x256xf32>
    %74 = tpu.matmul %71, %73, %cst_60 {dimension_numbers = #tpu.dot_dimension_numbers<[1], [0], [0], [1], [0, 0, 1, 1], [], []>} : vector<8x128xf32>, vector<128x256xf32>, vector<8x256xf32> -> vector<8x256xf32>
    %75 = vector.broadcast %57 : vector<1x256xf32> to vector<8x256xf32>
    %76 = arith.addf %74, %75 : vector<8x256xf32>
    %77 = vector.extract_strided_slice %76 {offsets = [0, 0], sizes = [8, 128], strides = [1, 1]} : vector<8x256xf32> to vector<8x128xf32>
    %78 = vector.extract_strided_slice %76 {offsets = [0, 128], sizes = [8, 128], strides = [1, 1]} : vector<8x256xf32> to vector<8x128xf32>
    %cst_61 = arith.constant 2.000000e+01 : f32
    %79 = vector.broadcast %cst_61 : f32 to vector<8x128xf32>
    %80 = arith.cmpf ogt, %78, %79 : vector<8x128xf32>
    %cst_62 = arith.constant 2.000000e+01 : f32
    %81 = vector.broadcast %cst_62 : f32 to vector<8x128xf32>
    %82 = arith.minimumf %78, %81 : vector<8x128xf32>
    %83 = math.exp %82 : vector<8x128xf32>
    %84 = math.log1p %83 : vector<8x128xf32>
    %85 = arith.select %80, %78, %84 : vector<8x128xi1>, vector<8x128xf32>
    %c1_63 = arith.constant 1 : index
    %c0_64 = arith.constant 0 : index
    %c0_65 = arith.constant 0 : index
    %86 = vector.load %arg1[%c1_63, %c0_64, %c0_65] : memref<5x8x128xf32, #tpu.memory_space<vmem>>, vector<1x8x128xf32>
    %87 = vector.shape_cast %86 : vector<1x8x128xf32> to vector<8x128xf32>
    %88 = arith.mulf %85, %87 : vector<8x128xf32>
    %89 = arith.addf %77, %88 : vector<8x128xf32>
    %c0_66 = arith.constant 0 : index
    %c1_67 = arith.constant 1 : index
    %c0_68 = arith.constant 0 : index
    %c0_69 = arith.constant 0 : index
    %90 = vector.load %arg6[%c0_66, %c1_67, %c0_68, %c0_69] : memref<3x5x8x128xf32, #tpu.memory_space<vmem>>, vector<1x1x8x128xf32>
    %91 = vector.shape_cast %90 : vector<1x1x8x128xf32> to vector<8x128xf32>
    %92 = vector.shape_cast %89 : vector<8x128xf32> to vector<1x1x8x128xf32>
    tpu.vector_store %arg6[%c0_66, %c1_67, %c0_68, %c0_69], %92 {strides = array<i32>} : memref<3x5x8x128xf32, #tpu.memory_space<vmem>>, vector<1x1x8x128xf32>,
    %c1_70 = arith.constant 1 : index
    %c1_71 = arith.constant 1 : index
    %c0_72 = arith.constant 0 : index
    %c0_73 = arith.constant 0 : index
    %93 = vector.load %arg6[%c1_70, %c1_71, %c0_72, %c0_73] : memref<3x5x8x128xf32, #tpu.memory_space<vmem>>, vector<1x1x8x128xf32>
    %94 = vector.shape_cast %93 : vector<1x1x8x128xf32> to vector<8x128xf32>
    %95 = vector.shape_cast %77 : vector<8x128xf32> to vector<1x1x8x128xf32>
    tpu.vector_store %arg6[%c1_70, %c1_71, %c0_72, %c0_73], %95 {strides = array<i32>} : memref<3x5x8x128xf32, #tpu.memory_space<vmem>>, vector<1x1x8x128xf32>,
    %c2_74 = arith.constant 2 : index
    %c1_75 = arith.constant 1 : index
    %c0_76 = arith.constant 0 : index
    %c0_77 = arith.constant 0 : index
    %96 = vector.load %arg6[%c2_74, %c1_75, %c0_76, %c0_77] : memref<3x5x8x128xf32, #tpu.memory_space<vmem>>, vector<1x1x8x128xf32>
    %97 = vector.shape_cast %96 : vector<1x1x8x128xf32> to vector<8x128xf32>
    %98 = vector.shape_cast %85 : vector<8x128xf32> to vector<1x1x8x128xf32>
    tpu.vector_store %arg6[%c2_74, %c1_75, %c0_76, %c0_77], %98 {strides = array<i32>} : memref<3x5x8x128xf32, #tpu.memory_space<vmem>>, vector<1x1x8x128xf32>,
    %99 = tpu.concatenate %0, %71, %89 in 1 : vector<8x128xf32>, vector<8x128xf32>, vector<8x128xf32> -> vector<8x384xf32>
    %c2_78 = arith.constant 2 : index
    %c0_79 = arith.constant 0 : index
    %c0_80 = arith.constant 0 : index
    %100 = vector.load %arg5[%c2_78, %c0_79, %c0_80] : memref<5x1x512xf32, #tpu.memory_space<vmem>>, vector<1x1x128xf32>
    %101 = vector.shape_cast %100 : vector<1x1x128xf32> to vector<1x128xf32>
    %c2_81 = arith.constant 2 : index
    %c0_82 = arith.constant 0 : index
    %c128_83 = arith.constant 128 : index
    %102 = vector.load %arg5[%c2_81, %c0_82, %c128_83] : memref<5x1x512xf32, #tpu.memory_space<vmem>>, vector<1x1x128xf32>
    %103 = vector.shape_cast %102 : vector<1x1x128xf32> to vector<1x128xf32>
    %c2_84 = arith.constant 2 : index
    %c0_85 = arith.constant 0 : index
    %c256_86 = arith.constant 256 : index
    %104 = vector.load %arg5[%c2_84, %c0_85, %c256_86] : memref<5x1x512xf32, #tpu.memory_space<vmem>>, vector<1x1x256xf32>
    %105 = vector.shape_cast %104 : vector<1x1x256xf32> to vector<1x256xf32>
    %c2_87 = arith.constant 2 : index
    %c0_88 = arith.constant 0 : index
    %c0_89 = arith.constant 0 : index
    %106 = vector.load %arg2[%c2_87, %c0_88, %c0_89] : memref<5x384x128xf32, #tpu.memory_space<vmem>>, vector<1x384x128xf32>
    %107 = vector.shape_cast %106 : vector<1x384x128xf32> to vector<384x128xf32>
    %cst_90 = arith.constant dense<0.000000e+00> : vector<8x128xf32>
    %108 = tpu.matmul %99, %107, %cst_90 {dimension_numbers = #tpu.dot_dimension_numbers<[1], [0], [0], [1], [0, 0, 1, 1], [], []>} : vector<8x384xf32>, vector<384x128xf32>, vector<8x128xf32> -> vector<8x128xf32>
    %109 = vector.broadcast %101 : vector<1x128xf32> to vector<8x128xf32>
    %110 = arith.addf %108, %109 : vector<8x128xf32>
    %cst_91 = arith.constant 0.000000e+00 : f32
    %111 = vector.broadcast %cst_91 : f32 to vector<8x128xf32>
    %112 = arith.maximumf %110, %111 : vector<8x128xf32>
    %c2_92 = arith.constant 2 : index
    %c0_93 = arith.constant 0 : index
    %c0_94 = arith.constant 0 : index
    %113 = vector.load %arg3[%c2_92, %c0_93, %c0_94] : memref<5x128x128xf32, #tpu.memory_space<vmem>>, vector<1x128x128xf32>
    %114 = vector.shape_cast %113 : vector<1x128x128xf32> to vector<128x128xf32>
    %cst_95 = arith.constant dense<0.000000e+00> : vector<8x128xf32>
    %115 = tpu.matmul %112, %114, %cst_95 {dimension_numbers = #tpu.dot_dimension_numbers<[1], [0], [0], [1], [0, 0, 1, 1], [], []>} : vector<8x128xf32>, vector<128x128xf32>, vector<8x128xf32> -> vector<8x128xf32>
    %116 = vector.broadcast %103 : vector<1x128xf32> to vector<8x128xf32>
    %117 = arith.addf %115, %116 : vector<8x128xf32>
    %cst_96 = arith.constant 0.000000e+00 : f32
    %118 = vector.broadcast %cst_96 : f32 to vector<8x128xf32>
    %119 = arith.maximumf %117, %118 : vector<8x128xf32>
    %c2_97 = arith.constant 2 : index
    %c0_98 = arith.constant 0 : index
    %c0_99 = arith.constant 0 : index
    %120 = vector.load %arg4[%c2_97, %c0_98, %c0_99] : memref<5x128x256xf32, #tpu.memory_space<vmem>>, vector<1x128x256xf32>
    %121 = vector.shape_cast %120 : vector<1x128x256xf32> to vector<128x256xf32>
    %cst_100 = arith.constant dense<0.000000e+00> : vector<8x256xf32>
    %122 = tpu.matmul %119, %121, %cst_100 {dimension_numbers = #tpu.dot_dimension_numbers<[1], [0], [0], [1], [0, 0, 1, 1], [], []>} : vector<8x128xf32>, vector<128x256xf32>, vector<8x256xf32> -> vector<8x256xf32>
    %123 = vector.broadcast %105 : vector<1x256xf32> to vector<8x256xf32>
    %124 = arith.addf %122, %123 : vector<8x256xf32>
    %125 = vector.extract_strided_slice %124 {offsets = [0, 0], sizes = [8, 128], strides = [1, 1]} : vector<8x256xf32> to vector<8x128xf32>
    %126 = vector.extract_strided_slice %124 {offsets = [0, 128], sizes = [8, 128], strides = [1, 1]} : vector<8x256xf32> to vector<8x128xf32>
    %cst_101 = arith.constant 2.000000e+01 : f32
    %127 = vector.broadcast %cst_101 : f32 to vector<8x128xf32>
    %128 = arith.cmpf ogt, %126, %127 : vector<8x128xf32>
    %cst_102 = arith.constant 2.000000e+01 : f32
    %129 = vector.broadcast %cst_102 : f32 to vector<8x128xf32>
    %130 = arith.minimumf %126, %129 : vector<8x128xf32>
    %131 = math.exp %130 : vector<8x128xf32>
    %132 = math.log1p %131 : vector<8x128xf32>
    %133 = arith.select %128, %126, %132 : vector<8x128xi1>, vector<8x128xf32>
    %c2_103 = arith.constant 2 : index
    %c0_104 = arith.constant 0 : index
    %c0_105 = arith.constant 0 : index
    %134 = vector.load %arg1[%c2_103, %c0_104, %c0_105] : memref<5x8x128xf32, #tpu.memory_space<vmem>>, vector<1x8x128xf32>
    %135 = vector.shape_cast %134 : vector<1x8x128xf32> to vector<8x128xf32>
    %136 = arith.mulf %133, %135 : vector<8x128xf32>
    %137 = arith.addf %125, %136 : vector<8x128xf32>
    %c0_106 = arith.constant 0 : index
    %c2_107 = arith.constant 2 : index
    %c0_108 = arith.constant 0 : index
    %c0_109 = arith.constant 0 : index
    %138 = vector.load %arg6[%c0_106, %c2_107, %c0_108, %c0_109] : memref<3x5x8x128xf32, #tpu.memory_space<vmem>>, vector<1x1x8x128xf32>
    %139 = vector.shape_cast %138 : vector<1x1x8x128xf32> to vector<8x128xf32>
    %140 = vector.shape_cast %137 : vector<8x128xf32> to vector<1x1x8x128xf32>
    tpu.vector_store %arg6[%c0_106, %c2_107, %c0_108, %c0_109], %140 {strides = array<i32>} : memref<3x5x8x128xf32, #tpu.memory_space<vmem>>, vector<1x1x8x128xf32>,
    %c1_110 = arith.constant 1 : index
    %c2_111 = arith.constant 2 : index
    %c0_112 = arith.constant 0 : index
    %c0_113 = arith.constant 0 : index
    %141 = vector.load %arg6[%c1_110, %c2_111, %c0_112, %c0_113] : memref<3x5x8x128xf32, #tpu.memory_space<vmem>>, vector<1x1x8x128xf32>
    %142 = vector.shape_cast %141 : vector<1x1x8x128xf32> to vector<8x128xf32>
    %143 = vector.shape_cast %125 : vector<8x128xf32> to vector<1x1x8x128xf32>
    tpu.vector_store %arg6[%c1_110, %c2_111, %c0_112, %c0_113], %143 {strides = array<i32>} : memref<3x5x8x128xf32, #tpu.memory_space<vmem>>, vector<1x1x8x128xf32>,
    %c2_114 = arith.constant 2 : index
    %c2_115 = arith.constant 2 : index
    %c0_116 = arith.constant 0 : index
    %c0_117 = arith.constant 0 : index
    %144 = vector.load %arg6[%c2_114, %c2_115, %c0_116, %c0_117] : memref<3x5x8x128xf32, #tpu.memory_space<vmem>>, vector<1x1x8x128xf32>
    %145 = vector.shape_cast %144 : vector<1x1x8x128xf32> to vector<8x128xf32>
    %146 = vector.shape_cast %133 : vector<8x128xf32> to vector<1x1x8x128xf32>
    tpu.vector_store %arg6[%c2_114, %c2_115, %c0_116, %c0_117], %146 {strides = array<i32>} : memref<3x5x8x128xf32, #tpu.memory_space<vmem>>, vector<1x1x8x128xf32>,
    %147 = tpu.concatenate %0, %119, %137 in 1 : vector<8x128xf32>, vector<8x128xf32>, vector<8x128xf32> -> vector<8x384xf32>
    %c3 = arith.constant 3 : index
    %c0_118 = arith.constant 0 : index
    %c0_119 = arith.constant 0 : index
    %148 = vector.load %arg5[%c3, %c0_118, %c0_119] : memref<5x1x512xf32, #tpu.memory_space<vmem>>, vector<1x1x128xf32>
    %149 = vector.shape_cast %148 : vector<1x1x128xf32> to vector<1x128xf32>
    %c3_120 = arith.constant 3 : index
    %c0_121 = arith.constant 0 : index
    %c128_122 = arith.constant 128 : index
    %150 = vector.load %arg5[%c3_120, %c0_121, %c128_122] : memref<5x1x512xf32, #tpu.memory_space<vmem>>, vector<1x1x128xf32>
    %151 = vector.shape_cast %150 : vector<1x1x128xf32> to vector<1x128xf32>
    %c3_123 = arith.constant 3 : index
    %c0_124 = arith.constant 0 : index
    %c256_125 = arith.constant 256 : index
    %152 = vector.load %arg5[%c3_123, %c0_124, %c256_125] : memref<5x1x512xf32, #tpu.memory_space<vmem>>, vector<1x1x256xf32>
    %153 = vector.shape_cast %152 : vector<1x1x256xf32> to vector<1x256xf32>
    %c3_126 = arith.constant 3 : index
    %c0_127 = arith.constant 0 : index
    %c0_128 = arith.constant 0 : index
    %154 = vector.load %arg2[%c3_126, %c0_127, %c0_128] : memref<5x384x128xf32, #tpu.memory_space<vmem>>, vector<1x384x128xf32>
    %155 = vector.shape_cast %154 : vector<1x384x128xf32> to vector<384x128xf32>
    %cst_129 = arith.constant dense<0.000000e+00> : vector<8x128xf32>
    %156 = tpu.matmul %147, %155, %cst_129 {dimension_numbers = #tpu.dot_dimension_numbers<[1], [0], [0], [1], [0, 0, 1, 1], [], []>} : vector<8x384xf32>, vector<384x128xf32>, vector<8x128xf32> -> vector<8x128xf32>
    %157 = vector.broadcast %149 : vector<1x128xf32> to vector<8x128xf32>
    %158 = arith.addf %156, %157 : vector<8x128xf32>
    %cst_130 = arith.constant 0.000000e+00 : f32
    %159 = vector.broadcast %cst_130 : f32 to vector<8x128xf32>
    %160 = arith.maximumf %158, %159 : vector<8x128xf32>
    %c3_131 = arith.constant 3 : index
    %c0_132 = arith.constant 0 : index
    %c0_133 = arith.constant 0 : index
    %161 = vector.load %arg3[%c3_131, %c0_132, %c0_133] : memref<5x128x128xf32, #tpu.memory_space<vmem>>, vector<1x128x128xf32>
    %162 = vector.shape_cast %161 : vector<1x128x128xf32> to vector<128x128xf32>
    %cst_134 = arith.constant dense<0.000000e+00> : vector<8x128xf32>
    %163 = tpu.matmul %160, %162, %cst_134 {dimension_numbers = #tpu.dot_dimension_numbers<[1], [0], [0], [1], [0, 0, 1, 1], [], []>} : vector<8x128xf32>, vector<128x128xf32>, vector<8x128xf32> -> vector<8x128xf32>
    %164 = vector.broadcast %151 : vector<1x128xf32> to vector<8x128xf32>
    %165 = arith.addf %163, %164 : vector<8x128xf32>
    %cst_135 = arith.constant 0.000000e+00 : f32
    %166 = vector.broadcast %cst_135 : f32 to vector<8x128xf32>
    %167 = arith.maximumf %165, %166 : vector<8x128xf32>
    %c3_136 = arith.constant 3 : index
    %c0_137 = arith.constant 0 : index
    %c0_138 = arith.constant 0 : index
    %168 = vector.load %arg4[%c3_136, %c0_137, %c0_138] : memref<5x128x256xf32, #tpu.memory_space<vmem>>, vector<1x128x256xf32>
    %169 = vector.shape_cast %168 : vector<1x128x256xf32> to vector<128x256xf32>
    %cst_139 = arith.constant dense<0.000000e+00> : vector<8x256xf32>
    %170 = tpu.matmul %167, %169, %cst_139 {dimension_numbers = #tpu.dot_dimension_numbers<[1], [0], [0], [1], [0, 0, 1, 1], [], []>} : vector<8x128xf32>, vector<128x256xf32>, vector<8x256xf32> -> vector<8x256xf32>
    %171 = vector.broadcast %153 : vector<1x256xf32> to vector<8x256xf32>
    %172 = arith.addf %170, %171 : vector<8x256xf32>
    %173 = vector.extract_strided_slice %172 {offsets = [0, 0], sizes = [8, 128], strides = [1, 1]} : vector<8x256xf32> to vector<8x128xf32>
    %174 = vector.extract_strided_slice %172 {offsets = [0, 128], sizes = [8, 128], strides = [1, 1]} : vector<8x256xf32> to vector<8x128xf32>
    %cst_140 = arith.constant 2.000000e+01 : f32
    %175 = vector.broadcast %cst_140 : f32 to vector<8x128xf32>
    %176 = arith.cmpf ogt, %174, %175 : vector<8x128xf32>
    %cst_141 = arith.constant 2.000000e+01 : f32
    %177 = vector.broadcast %cst_141 : f32 to vector<8x128xf32>
    %178 = arith.minimumf %174, %177 : vector<8x128xf32>
    %179 = math.exp %178 : vector<8x128xf32>
    %180 = math.log1p %179 : vector<8x128xf32>
    %181 = arith.select %176, %174, %180 : vector<8x128xi1>, vector<8x128xf32>
    %c3_142 = arith.constant 3 : index
    %c0_143 = arith.constant 0 : index
    %c0_144 = arith.constant 0 : index
    %182 = vector.load %arg1[%c3_142, %c0_143, %c0_144] : memref<5x8x128xf32, #tpu.memory_space<vmem>>, vector<1x8x128xf32>
    %183 = vector.shape_cast %182 : vector<1x8x128xf32> to vector<8x128xf32>
    %184 = arith.mulf %181, %183 : vector<8x128xf32>
    %185 = arith.addf %173, %184 : vector<8x128xf32>
    %c0_145 = arith.constant 0 : index
    %c3_146 = arith.constant 3 : index
    %c0_147 = arith.constant 0 : index
    %c0_148 = arith.constant 0 : index
    %186 = vector.load %arg6[%c0_145, %c3_146, %c0_147, %c0_148] : memref<3x5x8x128xf32, #tpu.memory_space<vmem>>, vector<1x1x8x128xf32>
    %187 = vector.shape_cast %186 : vector<1x1x8x128xf32> to vector<8x128xf32>
    %188 = vector.shape_cast %185 : vector<8x128xf32> to vector<1x1x8x128xf32>
    tpu.vector_store %arg6[%c0_145, %c3_146, %c0_147, %c0_148], %188 {strides = array<i32>} : memref<3x5x8x128xf32, #tpu.memory_space<vmem>>, vector<1x1x8x128xf32>,
    %c1_149 = arith.constant 1 : index
    %c3_150 = arith.constant 3 : index
    %c0_151 = arith.constant 0 : index
    %c0_152 = arith.constant 0 : index
    %189 = vector.load %arg6[%c1_149, %c3_150, %c0_151, %c0_152] : memref<3x5x8x128xf32, #tpu.memory_space<vmem>>, vector<1x1x8x128xf32>
    %190 = vector.shape_cast %189 : vector<1x1x8x128xf32> to vector<8x128xf32>
    %191 = vector.shape_cast %173 : vector<8x128xf32> to vector<1x1x8x128xf32>
    tpu.vector_store %arg6[%c1_149, %c3_150, %c0_151, %c0_152], %191 {strides = array<i32>} : memref<3x5x8x128xf32, #tpu.memory_space<vmem>>, vector<1x1x8x128xf32>,
    %c2_153 = arith.constant 2 : index
    %c3_154 = arith.constant 3 : index
    %c0_155 = arith.constant 0 : index
    %c0_156 = arith.constant 0 : index
    %192 = vector.load %arg6[%c2_153, %c3_154, %c0_155, %c0_156] : memref<3x5x8x128xf32, #tpu.memory_space<vmem>>, vector<1x1x8x128xf32>
    %193 = vector.shape_cast %192 : vector<1x1x8x128xf32> to vector<8x128xf32>
    %194 = vector.shape_cast %181 : vector<8x128xf32> to vector<1x1x8x128xf32>
    tpu.vector_store %arg6[%c2_153, %c3_154, %c0_155, %c0_156], %194 {strides = array<i32>} : memref<3x5x8x128xf32, #tpu.memory_space<vmem>>, vector<1x1x8x128xf32>,
    %195 = tpu.concatenate %0, %167, %185 in 1 : vector<8x128xf32>, vector<8x128xf32>, vector<8x128xf32> -> vector<8x384xf32>
    %c4 = arith.constant 4 : index
    %c0_157 = arith.constant 0 : index
    %c0_158 = arith.constant 0 : index
    %196 = vector.load %arg5[%c4, %c0_157, %c0_158] : memref<5x1x512xf32, #tpu.memory_space<vmem>>, vector<1x1x128xf32>
    %197 = vector.shape_cast %196 : vector<1x1x128xf32> to vector<1x128xf32>
    %c4_159 = arith.constant 4 : index
    %c0_160 = arith.constant 0 : index
    %c128_161 = arith.constant 128 : index
    %198 = vector.load %arg5[%c4_159, %c0_160, %c128_161] : memref<5x1x512xf32, #tpu.memory_space<vmem>>, vector<1x1x128xf32>
    %199 = vector.shape_cast %198 : vector<1x1x128xf32> to vector<1x128xf32>
    %c4_162 = arith.constant 4 : index
    %c0_163 = arith.constant 0 : index
    %c256_164 = arith.constant 256 : index
    %200 = vector.load %arg5[%c4_162, %c0_163, %c256_164] : memref<5x1x512xf32, #tpu.memory_space<vmem>>, vector<1x1x256xf32>
    %201 = vector.shape_cast %200 : vector<1x1x256xf32> to vector<1x256xf32>
    %c4_165 = arith.constant 4 : index
    %c0_166 = arith.constant 0 : index
    %c0_167 = arith.constant 0 : index
    %202 = vector.load %arg2[%c4_165, %c0_166, %c0_167] : memref<5x384x128xf32, #tpu.memory_space<vmem>>, vector<1x384x128xf32>
    %203 = vector.shape_cast %202 : vector<1x384x128xf32> to vector<384x128xf32>
    %cst_168 = arith.constant dense<0.000000e+00> : vector<8x128xf32>
    %204 = tpu.matmul %195, %203, %cst_168 {dimension_numbers = #tpu.dot_dimension_numbers<[1], [0], [0], [1], [0, 0, 1, 1], [], []>} : vector<8x384xf32>, vector<384x128xf32>, vector<8x128xf32> -> vector<8x128xf32>
    %205 = vector.broadcast %197 : vector<1x128xf32> to vector<8x128xf32>
    %206 = arith.addf %204, %205 : vector<8x128xf32>
    %cst_169 = arith.constant 0.000000e+00 : f32
    %207 = vector.broadcast %cst_169 : f32 to vector<8x128xf32>
    %208 = arith.maximumf %206, %207 : vector<8x128xf32>
    %c4_170 = arith.constant 4 : index
    %c0_171 = arith.constant 0 : index
    %c0_172 = arith.constant 0 : index
    %209 = vector.load %arg3[%c4_170, %c0_171, %c0_172] : memref<5x128x128xf32, #tpu.memory_space<vmem>>, vector<1x128x128xf32>
    %210 = vector.shape_cast %209 : vector<1x128x128xf32> to vector<128x128xf32>
    %cst_173 = arith.constant dense<0.000000e+00> : vector<8x128xf32>
    %211 = tpu.matmul %208, %210, %cst_173 {dimension_numbers = #tpu.dot_dimension_numbers<[1], [0], [0], [1], [0, 0, 1, 1], [], []>} : vector<8x128xf32>, vector<128x128xf32>, vector<8x128xf32> -> vector<8x128xf32>
    %212 = vector.broadcast %199 : vector<1x128xf32> to vector<8x128xf32>
    %213 = arith.addf %211, %212 : vector<8x128xf32>
    %cst_174 = arith.constant 0.000000e+00 : f32
    %214 = vector.broadcast %cst_174 : f32 to vector<8x128xf32>
    %215 = arith.maximumf %213, %214 : vector<8x128xf32>
    %c4_175 = arith.constant 4 : index
    %c0_176 = arith.constant 0 : index
    %c0_177 = arith.constant 0 : index
    %216 = vector.load %arg4[%c4_175, %c0_176, %c0_177] : memref<5x128x256xf32, #tpu.memory_space<vmem>>, vector<1x128x256xf32>
    %217 = vector.shape_cast %216 : vector<1x128x256xf32> to vector<128x256xf32>
    %cst_178 = arith.constant dense<0.000000e+00> : vector<8x256xf32>
    %218 = tpu.matmul %215, %217, %cst_178 {dimension_numbers = #tpu.dot_dimension_numbers<[1], [0], [0], [1], [0, 0, 1, 1], [], []>} : vector<8x128xf32>, vector<128x256xf32>, vector<8x256xf32> -> vector<8x256xf32>
    %219 = vector.broadcast %201 : vector<1x256xf32> to vector<8x256xf32>
    %220 = arith.addf %218, %219 : vector<8x256xf32>
    %221 = vector.extract_strided_slice %220 {offsets = [0, 0], sizes = [8, 128], strides = [1, 1]} : vector<8x256xf32> to vector<8x128xf32>
    %222 = vector.extract_strided_slice %220 {offsets = [0, 128], sizes = [8, 128], strides = [1, 1]} : vector<8x256xf32> to vector<8x128xf32>
    %cst_179 = arith.constant 2.000000e+01 : f32
    %223 = vector.broadcast %cst_179 : f32 to vector<8x128xf32>
    %224 = arith.cmpf ogt, %222, %223 : vector<8x128xf32>
    %cst_180 = arith.constant 2.000000e+01 : f32
    %225 = vector.broadcast %cst_180 : f32 to vector<8x128xf32>
    %226 = arith.minimumf %222, %225 : vector<8x128xf32>
    %227 = math.exp %226 : vector<8x128xf32>
    %228 = math.log1p %227 : vector<8x128xf32>
    %229 = arith.select %224, %222, %228 : vector<8x128xi1>, vector<8x128xf32>
    %c4_181 = arith.constant 4 : index
    %c0_182 = arith.constant 0 : index
    %c0_183 = arith.constant 0 : index
    %230 = vector.load %arg1[%c4_181, %c0_182, %c0_183] : memref<5x8x128xf32, #tpu.memory_space<vmem>>, vector<1x8x128xf32>
    %231 = vector.shape_cast %230 : vector<1x8x128xf32> to vector<8x128xf32>
    %232 = arith.mulf %229, %231 : vector<8x128xf32>
    %233 = arith.addf %221, %232 : vector<8x128xf32>
    %c0_184 = arith.constant 0 : index
    %c4_185 = arith.constant 4 : index
    %c0_186 = arith.constant 0 : index
    %c0_187 = arith.constant 0 : index
    %234 = vector.load %arg6[%c0_184, %c4_185, %c0_186, %c0_187] : memref<3x5x8x128xf32, #tpu.memory_space<vmem>>, vector<1x1x8x128xf32>
    %235 = vector.shape_cast %234 : vector<1x1x8x128xf32> to vector<8x128xf32>
    %236 = vector.shape_cast %233 : vector<8x128xf32> to vector<1x1x8x128xf32>
    tpu.vector_store %arg6[%c0_184, %c4_185, %c0_186, %c0_187], %236 {strides = array<i32>} : memref<3x5x8x128xf32, #tpu.memory_space<vmem>>, vector<1x1x8x128xf32>,
    %c1_188 = arith.constant 1 : index
    %c4_189 = arith.constant 4 : index
    %c0_190 = arith.constant 0 : index
    %c0_191 = arith.constant 0 : index
    %237 = vector.load %arg6[%c1_188, %c4_189, %c0_190, %c0_191] : memref<3x5x8x128xf32, #tpu.memory_space<vmem>>, vector<1x1x8x128xf32>
    %238 = vector.shape_cast %237 : vector<1x1x8x128xf32> to vector<8x128xf32>
    %239 = vector.shape_cast %221 : vector<8x128xf32> to vector<1x1x8x128xf32>
    tpu.vector_store %arg6[%c1_188, %c4_189, %c0_190, %c0_191], %239 {strides = array<i32>} : memref<3x5x8x128xf32, #tpu.memory_space<vmem>>, vector<1x1x8x128xf32>,
    %c2_192 = arith.constant 2 : index
    %c4_193 = arith.constant 4 : index
    %c0_194 = arith.constant 0 : index
    %c0_195 = arith.constant 0 : index
    %240 = vector.load %arg6[%c2_192, %c4_193, %c0_194, %c0_195] : memref<3x5x8x128xf32, #tpu.memory_space<vmem>>, vector<1x1x8x128xf32>
    %241 = vector.shape_cast %240 : vector<1x1x8x128xf32> to vector<8x128xf32>
    %242 = vector.shape_cast %229 : vector<8x128xf32> to vector<1x1x8x128xf32>
    tpu.vector_store %arg6[%c2_192, %c4_193, %c0_194, %c0_195], %242 {strides = array<i32>} : memref<3x5x8x128xf32, #tpu.memory_space<vmem>>, vector<1x1x8x128xf32>,
    return
  }
}

</mosaic_0001>

<llo_original>
// kernel: tpu_custom_call.1
$region0: #{tpu_custom_call.1}
  #allocation0 [shape = 'u32[]', space=smem, size = 0x4, offset = 0x4, fixed_abs, tag = 'smem constant byte address 0x4 - core index']
  #allocation1 [shape = 'u32[144,128]{1,0:T(1,128)}', space=vmem, size = 0x12000, scoped, tag = 'internal scratch']
  %s0 = inlined_call_operand.hbm [shape: f32[8,128], index: 0, kind: input, shape index: {}]
  %s1 = inlined_call_operand.hbm [shape: f32[5,8,128], index: 1, kind: input, shape index: {}]
  %s2 = inlined_call_operand.hbm [shape: f32[5,384,128], index: 2, kind: input, shape index: {}]
  %s3 = inlined_call_operand.hbm [shape: f32[5,128,128], index: 3, kind: input, shape index: {}]
  %s4 = inlined_call_operand.hbm [shape: f32[5,128,256], index: 4, kind: input, shape index: {}]
  %s5 = inlined_call_operand.hbm [shape: f32[5,1,512], index: 5, kind: input, shape index: {}]
  %s6 = inlined_call_operand.hbm [shape: f32[3,5,8,128], index: 6, kind: output, shape index: {}]
  %s7 = sld [smem:[#allocation0]]
  $region58: #{tpu_custom_call.1} parent=0
    _
  %s9 = ssub.s32 1, %s7
  %s10 = scalar_select 0, %s9, %s7
  $region1: #{tpu_custom_call.1} parent=0
    #allocation2 [shape = 'u8[4096]{0}', space=vmem, size = 0x1000, scoped, tag = 'input window, operand 0, single buffered']
    #allocation3 [shape = 's32[1]{0}', space=sflag, size = 0x4, scoped, tag = 'scoped memory for tpu_custom_call.1']
    #allocation4 [shape = 's32[1]{0}', space=sflag, size = 0x4, scoped, tag = 'scoped memory for tpu_custom_call.1']
    #allocation5 [shape = 'u8[20480]{0}', space=vmem, size = 0x5000, scoped, tag = 'input window, operand 1, single buffered']
    #allocation6 [shape = 's32[1]{0}', space=sflag, size = 0x4, scoped, tag = 'scoped memory for tpu_custom_call.1']
    #allocation7 [shape = 'u8[983040]{0}', space=vmem, size = 0xf0000, scoped, tag = 'input window, operand 2, single buffered']
    #allocation8 [shape = 'u8[327680]{0}', space=vmem, size = 0x50000, scoped, tag = 'input window, operand 3, single buffered']
    #allocation9 [shape = 's32[1]{0}', space=sflag, size = 0x4, scoped, tag = 'scoped memory for tpu_custom_call.1']
    #allocation10 [shape = 'u8[655360]{0}', space=vmem, size = 0xa0000, scoped, tag = 'input window, operand 4, single buffered']
    #allocation11 [shape = 'u8[10240]{0}', space=vmem, size = 0x2800, scoped, tag = 'input window, operand 5, single buffered']
    #allocation12 [shape = 's32[1]{0}', space=sflag, size = 0x4, scoped, tag = 'scoped memory for tpu_custom_call.1']
    #allocation13 [shape = 'u8[61440]{0}', space=vmem, size = 0xf000, scoped, tag = 'output window, operand 0, single buffered']
    %11 = vsyncpa [#allocation3], 0
    %12 = vsyncpa [#allocation6], 0
    %13 = vsyncpa [#allocation9], 0
    %14 = vsyncpa [#allocation12], 0
    %15 = vsyncpa [#allocation4], 0
    // Predicated region
    $region2: #{tpu_custom_call.1} parent=1 // pred_check
      _
    $region3: #{tpu_custom_call.1} parent=1 // pred_check_branch
      %17 = sbr.rel (0) target = $region5
    $region4: #{tpu_custom_call.1} parent=1 // pred_region
      %s19 = ssub.s32 128, 128
      %20 = vsyncadd [#allocation3], %s19
      %s22 = sshll.u32 [#allocation2], 4
      %s23 = int_to_ptr.vmem [resolvable:$true] %s22
      %25 = dma.hbm_to_vmem [thread:$0]  %s0, 128, %s23, [#allocation3]
    $region5: #{tpu_custom_call.1} parent=1 // pred_fallthru
      _
    // Predicated region
    $region6: #{tpu_custom_call.1} parent=1 // pred_check
      _
    $region7: #{tpu_custom_call.1} parent=1 // pred_check_branch
      %27 = sbr.rel (0) target = $region9
    $region8: #{tpu_custom_call.1} parent=1 // pred_region
      %s29 = ssub.s32 640, 640
      %30 = vsyncadd [#allocation6], %s29
      %s31 = sshll.u32 [#allocation5], 4
      %s32 = int_to_ptr.vmem [resolvable:$true] %s31
      %37 = dma.hbm_to_vmem [thread:$0]  %s1, 640, %s32, [#allocation6], 128, 128, 8
    $region9: #{tpu_custom_call.1} parent=1 // pred_fallthru
      _
    // Predicated region
    $region10: #{tpu_custom_call.1} parent=1 // pred_check
      _
    $region11: #{tpu_custom_call.1} parent=1 // pred_check_branch
      %39 = sbr.rel (0) target = $region13
    $region12: #{tpu_custom_call.1} parent=1 // pred_region
      %s41 = ssub.s32 30720, 30720
      %42 = vsyncadd [#allocation6], %s41
      %s43 = sshll.u32 [#allocation7], 4
      %s44 = int_to_ptr.vmem [resolvable:$true] %s43
      %49 = dma.hbm_to_vmem [thread:$0]  %s2, 30720, %s44, [#allocation6], 128, 128, 8
    $region13: #{tpu_custom_call.1} parent=1 // pred_fallthru
      _
    // Predicated region
    $region14: #{tpu_custom_call.1} parent=1 // pred_check
      _
    $region15: #{tpu_custom_call.1} parent=1 // pred_check_branch
      %51 = sbr.rel (0) target = $region17
    $region16: #{tpu_custom_call.1} parent=1 // pred_region
      %s53 = ssub.s32 10240, 10240
      %54 = vsyncadd [#allocation9], %s53
      %s55 = sshll.u32 [#allocation8], 4
      %s56 = int_to_ptr.vmem [resolvable:$true] %s55
      %61 = dma.hbm_to_vmem [thread:$0]  %s3, 10240, %s56, [#allocation9], 128, 128, 8
    $region17: #{tpu_custom_call.1} parent=1 // pred_fallthru
      _
    // Predicated region
    $region18: #{tpu_custom_call.1} parent=1 // pred_check
      _
    $region19: #{tpu_custom_call.1} parent=1 // pred_check_branch
      %63 = sbr.rel (0) target = $region21
    $region20: #{tpu_custom_call.1} parent=1 // pred_region
      %s65 = ssub.s32 20480, 20480
      %66 = vsyncadd [#allocation9], %s65
      %s67 = sshll.u32 [#allocation10], 4
      %s68 = int_to_ptr.vmem [resolvable:$true] %s67
      %73 = dma.hbm_to_vmem [thread:$0]  %s4, 20480, %s68, [#allocation9], 256, 256, 16
    $region21: #{tpu_custom_call.1} parent=1 // pred_fallthru
      _
    // Predicated region
    $region22: #{tpu_custom_call.1} parent=1 // pred_check
      _
    $region23: #{tpu_custom_call.1} parent=1 // pred_check_branch
      %75 = sbr.rel (0) target = $region25
    $region24: #{tpu_custom_call.1} parent=1 // pred_region
      %s77 = ssub.s32 320, 320
      %78 = vsyncadd [#allocation12], %s77
      %s79 = sshll.u32 [#allocation11], 4
      %s80 = int_to_ptr.vmem [resolvable:$true] %s79
      %85 = dma.hbm_to_vmem [thread:$0]  %s5, 320, %s80, [#allocation12], 64, 64, 4
    $region25: #{tpu_custom_call.1} parent=1 // pred_fallthru
      _
    // Predicated region
    $region26: #{tpu_custom_call.1} parent=1 // pred_check
      _
    $region27: #{tpu_custom_call.1} parent=1 // pred_check_branch
      %87 = sbr.rel (0) target = $region29
    $region28: #{tpu_custom_call.1} parent=1 // pred_region
      %88 = dma.done [#allocation3], 128
    $region29: #{tpu_custom_call.1} parent=1 // pred_fallthru
      _
    // Predicated region
    $region30: #{tpu_custom_call.1} parent=1 // pred_check
      _
    $region31: #{tpu_custom_call.1} parent=1 // pred_check_branch
      %90 = sbr.rel (0) target = $region33
    $region32: #{tpu_custom_call.1} parent=1 // pred_region
      %91 = dma.done [#allocation6], 640
    $region33: #{tpu_custom_call.1} parent=1 // pred_fallthru
      _
    // Predicated region
    $region34: #{tpu_custom_call.1} parent=1 // pred_check
      _
    $region35: #{tpu_custom_call.1} parent=1 // pred_check_branch
      %93 = sbr.rel (0) target = $region37
    $region36: #{tpu_custom_call.1} parent=1 // pred_region
      %94 = dma.done [#allocation6], 30720
    $region37: #{tpu_custom_call.1} parent=1 // pred_fallthru
      _
    // Predicated region
    $region38: #{tpu_custom_call.1} parent=1 // pred_check
      _
    $region39: #{tpu_custom_call.1} parent=1 // pred_check_branch
      %96 = sbr.rel (0) target = $region41
    $region40: #{tpu_custom_call.1} parent=1 // pred_region
      %97 = dma.done [#allocation9], 10240
    $region41: #{tpu_custom_call.1} parent=1 // pred_fallthru
      _
    // Predicated region
    $region42: #{tpu_custom_call.1} parent=1 // pred_check
      _
    $region43: #{tpu_custom_call.1} parent=1 // pred_check_branch
      %99 = sbr.rel (0) target = $region45
    $region44: #{tpu_custom_call.1} parent=1 // pred_region
      %100 = dma.done [#allocation9], 20480
    $region45: #{tpu_custom_call.1} parent=1 // pred_fallthru
      _
    // Predicated region
    $region46: #{tpu_custom_call.1} parent=1 // pred_check
      _
    $region47: #{tpu_custom_call.1} parent=1 // pred_check_branch
      %102 = sbr.rel (0) target = $region49
    $region48: #{tpu_custom_call.1} parent=1 // pred_region
      %103 = dma.done [#allocation12], 320
    $region49: #{tpu_custom_call.1} parent=1 // pred_fallthru
      _
    %v104 = vld [vmem:[#allocation2] sm:$0xff]
    %v105 = vld [vmem:[#allocation11] sm:$0x1]
    %v106 = vld [vmem:[#allocation11 + $0x1] sm:$0x1]
    %v107 = vld [vmem:[#allocation11 + $0x2] sm:$0x3]
    %v108 = vld [vmem:[#allocation7] sm:$0xff]
    %v109 = vld [vmem:[#allocation7 + $0x8] sm:$0xff]
    %v110 = vld [vmem:[#allocation7 + $0x10] sm:$0xff]
    %v111 = vld [vmem:[#allocation7 + $0x18] sm:$0xff]
    %v112 = vld [vmem:[#allocation7 + $0x20] sm:$0xff]
    %v113 = vld [vmem:[#allocation7 + $0x28] sm:$0xff]
    %v114 = vld [vmem:[#allocation7 + $0x30] sm:$0xff]
    %v115 = vld [vmem:[#allocation7 + $0x38] sm:$0xff]
    %v116 = vld [vmem:[#allocation7 + $0x40] sm:$0xff]
    %v117 = vld [vmem:[#allocation7 + $0x48] sm:$0xff]
    %v118 = vld [vmem:[#allocation7 + $0x50] sm:$0xff]
    %v119 = vld [vmem:[#allocation7 + $0x58] sm:$0xff]
    %v120 = vld [vmem:[#allocation7 + $0x60] sm:$0xff]
    %v121 = vld [vmem:[#allocation7 + $0x68] sm:$0xff]
    %v122 = vld [vmem:[#allocation7 + $0x70] sm:$0xff]
    %v123 = vld [vmem:[#allocation7 + $0x78] sm:$0xff]
    %v124 = vld [vmem:[#allocation7 + $0x80] sm:$0xff]
    %v125 = vld [vmem:[#allocation7 + $0x88] sm:$0xff]
    %v126 = vld [vmem:[#allocation7 + $0x90] sm:$0xff]
    %v127 = vld [vmem:[#allocation7 + $0x98] sm:$0xff]
    %v128 = vld [vmem:[#allocation7 + $0xa0] sm:$0xff]
    %v129 = vld [vmem:[#allocation7 + $0xa8] sm:$0xff]
    %v130 = vld [vmem:[#allocation7 + $0xb0] sm:$0xff]
    %v131 = vld [vmem:[#allocation7 + $0xb8] sm:$0xff]
    %v132 = vld [vmem:[#allocation7 + $0xc0] sm:$0xff]
    %v133 = vld [vmem:[#allocation7 + $0xc8] sm:$0xff]
    %v134 = vld [vmem:[#allocation7 + $0xd0] sm:$0xff]
    %v135 = vld [vmem:[#allocation7 + $0xd8] sm:$0xff]
    %v136 = vld [vmem:[#allocation7 + $0xe0] sm:$0xff]
    %v137 = vld [vmem:[#allocation7 + $0xe8] sm:$0xff]
    %v138 = vld [vmem:[#allocation7 + $0xf0] sm:$0xff]
    %v139 = vld [vmem:[#allocation7 + $0xf8] sm:$0xff]
    %v140 = vld [vmem:[#allocation7 + $0x100] sm:$0xff]
    %v141 = vld [vmem:[#allocation7 + $0x108] sm:$0xff]
    %v142 = vld [vmem:[#allocation7 + $0x110] sm:$0xff]
    %v143 = vld [vmem:[#allocation7 + $0x118] sm:$0xff]
    %v144 = vld [vmem:[#allocation7 + $0x120] sm:$0xff]
    %v145 = vld [vmem:[#allocation7 + $0x128] sm:$0xff]
    %v146 = vld [vmem:[#allocation7 + $0x130] sm:$0xff]
    %v147 = vld [vmem:[#allocation7 + $0x138] sm:$0xff]
    %v148 = vld [vmem:[#allocation7 + $0x140] sm:$0xff]
    %v149 = vld [vmem:[#allocation7 + $0x148] sm:$0xff]
    %v150 = vld [vmem:[#allocation7 + $0x150] sm:$0xff]
    %v151 = vld [vmem:[#allocation7 + $0x158] sm:$0xff]
    %v152 = vld [vmem:[#allocation7 + $0x160] sm:$0xff]
    %v153 = vld [vmem:[#allocation7 + $0x168] sm:$0xff]
    %v154 = vld [vmem:[#allocation7 + $0x170] sm:$0xff]
    %v155 = vld [vmem:[#allocation7 + $0x178] sm:$0xff]
    %v157 = vlaneseq
    %v158 = vshrl.u32 %v157, 7
    %v159 = vsub.s32 0, %v158
    %v160 = vrot.slane %v105, %v159
    %162 = vmatprep.subr.mxu0 0.0
    %163 = vmatpush1.msra.mxu0 %v108
    %164 = vmatprep.subr.mxu0 0.0
    %165 = vmatpush1.msra.mxu0 %v109
    %166 = vmatprep.subr.mxu0 0.0
    %167 = vmatpush1.msra.mxu0 %v110
    %168 = vmatprep.subr.mxu0 0.0
    %169 = vmatpush1.msra.mxu0 %v111
    %170 = vmatprep.subr.mxu0 0.0
    %171 = vmatpush1.msra.mxu0 %v112
    %172 = vmatprep.subr.mxu0 0.0
    %173 = vmatpush1.msra.mxu0 %v113
    %174 = vmatprep.subr.mxu0 0.0
    %175 = vmatpush1.msra.mxu0 %v114
    %176 = vmatprep.subr.mxu0 0.0
    %177 = vmatpush1.msra.mxu0 %v115
    %178 = vmatprep.subr.mxu0 0.0
    %179 = vmatpush1.msra.mxu0 %v116
    %180 = vmatprep.subr.mxu0 0.0
    %181 = vmatpush1.msra.mxu0 %v117
    %182 = vmatprep.subr.mxu0 0.0
    %183 = vmatpush1.msra.mxu0 %v118
    %184 = vmatprep.subr.mxu0 0.0
    %185 = vmatpush1.msra.mxu0 %v119
    %186 = vmatprep.subr.mxu0 0.0
    %187 = vmatpush1.msra.mxu0 %v120
    %188 = vmatprep.subr.mxu0 0.0
    %189 = vmatpush1.msra.mxu0 %v121
    %190 = vmatprep.subr.mxu0 0.0
    %191 = vmatpush1.msra.mxu0 %v122
    %192 = vmatprep.subr.mxu0 0.0
    %193 = vmatpush1.msra.mxu0 %v123
    %194 = vmatprep.subr.mxu0 0.0
    %195 = vmatpush1.msra.mxu0 %v124
    %196 = vmatprep.subr.mxu0 0.0
    %197 = vmatpush1.msra.mxu0 %v125
    %198 = vmatprep.subr.mxu0 0.0
    %199 = vmatpush1.msra.mxu0 %v126
    %200 = vmatprep.subr.mxu0 0.0
    %201 = vmatpush1.msra.mxu0 %v127
    %202 = vmatprep.subr.mxu0 0.0
    %203 = vmatpush1.msra.mxu0 %v128
    %204 = vmatprep.subr.mxu0 0.0
    %205 = vmatpush1.msra.mxu0 %v129
    %206 = vmatprep.subr.mxu0 0.0
    %207 = vmatpush1.msra.mxu0 %v130
    %208 = vmatprep.subr.mxu0 0.0
    %209 = vmatpush1.msra.mxu0 %v131
    %210 = vmatprep.subr.mxu0 0.0
    %211 = vmatpush1.msra.mxu0 %v132
    %212 = vmatprep.subr.mxu0 0.0
    %213 = vmatpush1.msra.mxu0 %v133
    %214 = vmatprep.subr.mxu0 0.0
    %215 = vmatpush1.msra.mxu0 %v134
    %216 = vmatprep.subr.mxu0 0.0
    %217 = vmatpush1.msra.mxu0 %v135
    %218 = vmatprep.subr.mxu0 0.0
    %219 = vmatpush1.msra.mxu0 %v136
    %220 = vmatprep.subr.mxu0 0.0
    %221 = vmatpush1.msra.mxu0 %v137
    %222 = vmatprep.subr.mxu0 0.0
    %223 = vmatpush1.msra.mxu0 %v138
    %224 = vmatprep.subr.mxu0 0.0
    %225 = vmatpush1.msra.mxu0 %v139
    %226 = vmatprep.mubr.f32.mxu0 0.0
    %227 = vmatmul.mubr.f32.gmra.mrb[0].mxu0 %v104
    %v228 = vpop.f32.mrb[0].mxu0
    %v229 = vadd.f32 %v160, %v228
    %v230 = vpop.f32.mrb[0].mxu0
    %231 = vdwg.mxu0
    %232 = vmatprep.subr.mxu0 0.0
    %233 = vmatpush1.msra.mxu0 %v140
    %234 = vmatprep.subr.mxu0 0.0
    %235 = vmatpush1.msra.mxu0 %v141
    %236 = vmatprep.subr.mxu0 0.0
    %237 = vmatpush1.msra.mxu0 %v142
    %238 = vmatprep.subr.mxu0 0.0
    %239 = vmatpush1.msra.mxu0 %v143
    %240 = vmatprep.subr.mxu0 0.0
    %241 = vmatpush1.msra.mxu0 %v144
    %242 = vmatprep.subr.mxu0 0.0
    %243 = vmatpush1.msra.mxu0 %v145
    %244 = vmatprep.subr.mxu0 0.0
    %245 = vmatpush1.msra.mxu0 %v146
    %246 = vmatprep.subr.mxu0 0.0
    %247 = vmatpush1.msra.mxu0 %v147
    %248 = vmatprep.subr.mxu0 0.0
    %249 = vmatpush1.msra.mxu0 %v148
    %250 = vmatprep.subr.mxu0 0.0
    %251 = vmatpush1.msra.mxu0 %v149
    %252 = vmatprep.subr.mxu0 0.0
    %253 = vmatpush1.msra.mxu0 %v150
    %254 = vmatprep.subr.mxu0 0.0
    %255 = vmatpush1.msra.mxu0 %v151
    %256 = vmatprep.subr.mxu0 0.0
    %257 = vmatpush1.msra.mxu0 %v152
    %258 = vmatprep.subr.mxu0 0.0
    %259 = vmatpush1.msra.mxu0 %v153
    %260 = vmatprep.subr.mxu0 0.0
    %261 = vmatpush1.msra.mxu0 %v154
    %262 = vmatprep.subr.mxu0 0.0
    %263 = vmatpush1.msra.mxu0 %v155
    %264 = vmatprep.subr.mxu0 0.0
    %265 = vmatpush1.msra.mxu0 0.0
    %266 = vmatprep.subr.mxu0 0.0
    %267 = vmatpush1.msra.mxu0 0.0
    %268 = vmatprep.subr.mxu0 0.0
    %269 = vmatpush1.msra.mxu0 0.0
    %270 = vmatprep.subr.mxu0 0.0
    %271 = vmatpush1.msra.mxu0 0.0
    %272 = vmatprep.subr.mxu0 0.0
    %273 = vmatpush1.msra.mxu0 0.0
    %274 = vmatprep.subr.mxu0 0.0
    %275 = vmatpush1.msra.mxu0 0.0
    %276 = vmatprep.subr.mxu0 0.0
    %277 = vmatpush1.msra.mxu0 0.0
    %278 = vmatprep.subr.mxu0 0.0
    %279 = vmatpush1.msra.mxu0 0.0
    %280 = vmatprep.subr.mxu0 0.0
    %281 = vmatpush1.msra.mxu0 0.0
    %282 = vmatprep.subr.mxu0 0.0
    %283 = vmatpush1.msra.mxu0 0.0
    %284 = vmatprep.subr.mxu0 0.0
    %285 = vmatpush1.msra.mxu0 0.0
    %286 = vmatprep.subr.mxu0 0.0
    %287 = vmatpush1.msra.mxu0 0.0
    %288 = vmatprep.subr.mxu0 0.0
    %289 = vmatpush1.msra.mxu0 0.0
    %290 = vmatprep.subr.mxu0 0.0
    %291 = vmatpush1.msra.mxu0 0.0
    %292 = vmatprep.subr.mxu0 0.0
    %293 = vmatpush1.msra.mxu0 0.0
    %294 = vmatprep.subr.mxu0 0.0
    %295 = vmatpush1.msra.mxu0 0.0
    %296 = vmatprep.mubr.f32.mxu0 0.0
    %297 = vmatmul.mubr.f32.gmra.mrb[0].mxu0 0.0
    %v298 = vpop.f32.mrb[0].mxu0
    %v299 = vadd.f32 %v229, %v298
    %v300 = vpop.f32.mrb[0].mxu0
    %301 = vdwg.mxu0
    %v302 = vmax.f32 %v299, 0.0
    %v303 = vld [vmem:[#allocation8] sm:$0xff]
    %v304 = vld [vmem:[#allocation8 + $0x8] sm:$0xff]
    %v305 = vld [vmem:[#allocation8 + $0x10] sm:$0xff]
    %v306 = vld [vmem:[#allocation8 + $0x18] sm:$0xff]
    %v307 = vld [vmem:[#allocation8 + $0x20] sm:$0xff]
    %v308 = vld [vmem:[#allocation8 + $0x28] sm:$0xff]
    %v309 = vld [vmem:[#allocation8 + $0x30] sm:$0xff]
    %v310 = vld [vmem:[#allocation8 + $0x38] sm:$0xff]
    %v311 = vld [vmem:[#allocation8 + $0x40] sm:$0xff]
    %v312 = vld [vmem:[#allocation8 + $0x48] sm:$0xff]
    %v313 = vld [vmem:[#allocation8 + $0x50] sm:$0xff]
    %v314 = vld [vmem:[#allocation8 + $0x58] sm:$0xff]
    %v315 = vld [vmem:[#allocation8 + $0x60] sm:$0xff]
    %v316 = vld [vmem:[#allocation8 + $0x68] sm:$0xff]
    %v317 = vld [vmem:[#allocation8 + $0x70] sm:$0xff]
    %v318 = vld [vmem:[#allocation8 + $0x78] sm:$0xff]
    %v320 = vlaneseq
    %v321 = vshrl.u32 %v320, 7
    %v322 = vsub.s32 0, %v321
    %v323 = vrot.slane %v106, %v322
    %325 = vmatprep.subr.mxu0 0.0
    %326 = vmatpush1.msra.mxu0 %v303
    %327 = vmatprep.subr.mxu0 0.0
    %328 = vmatpush1.msra.mxu0 %v304
    %329 = vmatprep.subr.mxu0 0.0
    %330 = vmatpush1.msra.mxu0 %v305
    %331 = vmatprep.subr.mxu0 0.0
    %332 = vmatpush1.msra.mxu0 %v306
    %333 = vmatprep.subr.mxu0 0.0
    %334 = vmatpush1.msra.mxu0 %v307
    %335 = vmatprep.subr.mxu0 0.0
    %336 = vmatpush1.msra.mxu0 %v308
    %337 = vmatprep.subr.mxu0 0.0
    %338 = vmatpush1.msra.mxu0 %v309
    %339 = vmatprep.subr.mxu0 0.0
    %340 = vmatpush1.msra.mxu0 %v310
    %341 = vmatprep.subr.mxu0 0.0
    %342 = vmatpush1.msra.mxu0 %v311
    %343 = vmatprep.subr.mxu0 0.0
    %344 = vmatpush1.msra.mxu0 %v312
    %345 = vmatprep.subr.mxu0 0.0
    %346 = vmatpush1.msra.mxu0 %v313
    %347 = vmatprep.subr.mxu0 0.0
    %348 = vmatpush1.msra.mxu0 %v314
    %349 = vmatprep.subr.mxu0 0.0
    %350 = vmatpush1.msra.mxu0 %v315
    %351 = vmatprep.subr.mxu0 0.0
    %352 = vmatpush1.msra.mxu0 %v316
    %353 = vmatprep.subr.mxu0 0.0
    %354 = vmatpush1.msra.mxu0 %v317
    %355 = vmatprep.subr.mxu0 0.0
    %356 = vmatpush1.msra.mxu0 %v318
    %357 = vmatprep.subr.mxu0 0.0
    %358 = vmatpush1.msra.mxu0 0.0
    %359 = vmatprep.subr.mxu0 0.0
    %360 = vmatpush1.msra.mxu0 0.0
    %361 = vmatprep.subr.mxu0 0.0
    %362 = vmatpush1.msra.mxu0 0.0
    %363 = vmatprep.subr.mxu0 0.0
    %364 = vmatpush1.msra.mxu0 0.0
    %365 = vmatprep.subr.mxu0 0.0
    %366 = vmatpush1.msra.mxu0 0.0
    %367 = vmatprep.subr.mxu0 0.0
    %368 = vmatpush1.msra.mxu0 0.0
    %369 = vmatprep.subr.mxu0 0.0
    %370 = vmatpush1.msra.mxu0 0.0
    %371 = vmatprep.subr.mxu0 0.0
    %372 = vmatpush1.msra.mxu0 0.0
    %373 = vmatprep.subr.mxu0 0.0
    %374 = vmatpush1.msra.mxu0 0.0
    %375 = vmatprep.subr.mxu0 0.0
    %376 = vmatpush1.msra.mxu0 0.0
    %377 = vmatprep.subr.mxu0 0.0
    %378 = vmatpush1.msra.mxu0 0.0
    %379 = vmatprep.subr.mxu0 0.0
    %380 = vmatpush1.msra.mxu0 0.0
    %381 = vmatprep.subr.mxu0 0.0
    %382 = vmatpush1.msra.mxu0 0.0
    %383 = vmatprep.subr.mxu0 0.0
    %384 = vmatpush1.msra.mxu0 0.0
    %385 = vmatprep.subr.mxu0 0.0
    %386 = vmatpush1.msra.mxu0 0.0
    %387 = vmatprep.subr.mxu0 0.0
    %388 = vmatpush1.msra.mxu0 0.0
    %389 = vmatprep.mubr.f32.mxu0 0.0
    %390 = vmatmul.mubr.f32.gmra.mrb[0].mxu0 %v302
    %v391 = vpop.f32.mrb[0].mxu0
    %v392 = vadd.f32 %v323, %v391
    %v393 = vpop.f32.mrb[0].mxu0
    %394 = vdwg.mxu0
    %v395 = vmax.f32 %v392, 0.0
    %v396 = vld [vmem:[#allocation10] sm:$0xff]
    %v397 = vld [vmem:[#allocation10 + $0x8] sm:$0xff]
    %v398 = vld [vmem:[#allocation10 + $0x10] sm:$0xff]
    %v399 = vld [vmem:[#allocation10 + $0x18] sm:$0xff]
    %v400 = vld [vmem:[#allocation10 + $0x20] sm:$0xff]
    %v401 = vld [vmem:[#allocation10 + $0x28] sm:$0xff]
    %v402 = vld [vmem:[#allocation10 + $0x30] sm:$0xff]
    %v403 = vld [vmem:[#allocation10 + $0x38] sm:$0xff]
    %v404 = vld [vmem:[#allocation10 + $0x40] sm:$0xff]
    %v405 = vld [vmem:[#allocation10 + $0x48] sm:$0xff]
    %v406 = vld [vmem:[#allocation10 + $0x50] sm:$0xff]
    %v407 = vld [vmem:[#allocation10 + $0x58] sm:$0xff]
    %v408 = vld [vmem:[#allocation10 + $0x60] sm:$0xff]
    %v409 = vld [vmem:[#allocation10 + $0x68] sm:$0xff]
    %v410 = vld [vmem:[#allocation10 + $0x70] sm:$0xff]
    %v411 = vld [vmem:[#allocation10 + $0x78] sm:$0xff]
    %v412 = vld [vmem:[#allocation10 + $0x80] sm:$0xff]
    %v413 = vld [vmem:[#allocation10 + $0x88] sm:$0xff]
    %v414 = vld [vmem:[#allocation10 + $0x90] sm:$0xff]
    %v415 = vld [vmem:[#allocation10 + $0x98] sm:$0xff]
    %v416 = vld [vmem:[#allocation10 + $0xa0] sm:$0xff]
    %v417 = vld [vmem:[#allocation10 + $0xa8] sm:$0xff]
    %v418 = vld [vmem:[#allocation10 + $0xb0] sm:$0xff]
    %v419 = vld [vmem:[#allocation10 + $0xb8] sm:$0xff]
    %v420 = vld [vmem:[#allocation10 + $0xc0] sm:$0xff]
    %v421 = vld [vmem:[#allocation10 + $0xc8] sm:$0xff]
    %v422 = vld [vmem:[#allocation10 + $0xd0] sm:$0xff]
    %v423 = vld [vmem:[#allocation10 + $0xd8] sm:$0xff]
    %v424 = vld [vmem:[#allocation10 + $0xe0] sm:$0xff]
    %v425 = vld [vmem:[#allocation10 + $0xe8] sm:$0xff]
    %v426 = vld [vmem:[#allocation10 + $0xf0] sm:$0xff]
    %v427 = vld [vmem:[#allocation10 + $0xf8] sm:$0xff]
    %v429 = vlaneseq
    %v430 = vshrl.u32 %v429, 7
    %v431 = vsub.s32 0, %v430
    %v432 = vrot.slane %v107, %v431
    %v433 = vlaneseq
    %v434 = vshrl.u32 %v433, 7
    %v435 = vsub.s32 1, %v434
    %v436 = vrot.slane %v107, %v435
    %439 = vmatprep.subr.mxu0 %v397
    %440 = vmatpush1.msra.mxu0 %v396
    %441 = vmatprep.subr.mxu0 %v399
    %442 = vmatpush1.msra.mxu0 %v398
    %443 = vmatprep.subr.mxu0 %v401
    %444 = vmatpush1.msra.mxu0 %v400
    %445 = vmatprep.subr.mxu0 %v403
    %446 = vmatpush1.msra.mxu0 %v402
    %447 = vmatprep.subr.mxu0 %v405
    %448 = vmatpush1.msra.mxu0 %v404
    %449 = vmatprep.subr.mxu0 %v407
    %450 = vmatpush1.msra.mxu0 %v406
    %451 = vmatprep.subr.mxu0 %v409
    %452 = vmatpush1.msra.mxu0 %v408
    %453 = vmatprep.subr.mxu0 %v411
    %454 = vmatpush1.msra.mxu0 %v410
    %455 = vmatprep.subr.mxu0 %v413
    %456 = vmatpush1.msra.mxu0 %v412
    %457 = vmatprep.subr.mxu0 %v415
    %458 = vmatpush1.msra.mxu0 %v414
    %459 = vmatprep.subr.mxu0 %v417
    %460 = vmatpush1.msra.mxu0 %v416
    %461 = vmatprep.subr.mxu0 %v419
    %462 = vmatpush1.msra.mxu0 %v418
    %463 = vmatprep.subr.mxu0 %v421
    %464 = vmatpush1.msra.mxu0 %v420
    %465 = vmatprep.subr.mxu0 %v423
    %466 = vmatpush1.msra.mxu0 %v422
    %467 = vmatprep.subr.mxu0 %v425
    %468 = vmatpush1.msra.mxu0 %v424
    %469 = vmatprep.subr.mxu0 %v427
    %470 = vmatpush1.msra.mxu0 %v426
    %471 = vmatprep.subr.mxu0 0.0
    %472 = vmatpush1.msra.mxu0 0.0
    %473 = vmatprep.subr.mxu0 0.0
    %474 = vmatpush1.msra.mxu0 0.0
    %475 = vmatprep.subr.mxu0 0.0
    %476 = vmatpush1.msra.mxu0 0.0
    %477 = vmatprep.subr.mxu0 0.0
    %478 = vmatpush1.msra.mxu0 0.0
    %479 = vmatprep.subr.mxu0 0.0
    %480 = vmatpush1.msra.mxu0 0.0
    %481 = vmatprep.subr.mxu0 0.0
    %482 = vmatpush1.msra.mxu0 0.0
    %483 = vmatprep.subr.mxu0 0.0
    %484 = vmatpush1.msra.mxu0 0.0
    %485 = vmatprep.subr.mxu0 0.0
    %486 = vmatpush1.msra.mxu0 0.0
    %487 = vmatprep.subr.mxu0 0.0
    %488 = vmatpush1.msra.mxu0 0.0
    %489 = vmatprep.subr.mxu0 0.0
    %490 = vmatpush1.msra.mxu0 0.0
    %491 = vmatprep.subr.mxu0 0.0
    %492 = vmatpush1.msra.mxu0 0.0
    %493 = vmatprep.subr.mxu0 0.0
    %494 = vmatpush1.msra.mxu0 0.0
    %495 = vmatprep.subr.mxu0 0.0
    %496 = vmatpush1.msra.mxu0 0.0
    %497 = vmatprep.subr.mxu0 0.0
    %498 = vmatpush1.msra.mxu0 0.0
    %499 = vmatprep.subr.mxu0 0.0
    %500 = vmatpush1.msra.mxu0 0.0
    %501 = vmatprep.subr.mxu0 0.0
    %502 = vmatpush1.msra.mxu0 0.0
    %503 = vmatprep.mubr.f32.mxu0 0.0
    %504 = vmatmul.mubr.f32.gmra.mrb[0].mxu0 %v395
    %v505 = vpop.f32.mrb[0].mxu0
    %v506 = vadd.f32 %v432, %v505
    %v507 = vpop.f32.mrb[0].mxu0
    %v508 = vadd.f32 %v436, %v507
    %509 = vdwg.mxu0
    %vm510 = vcmp.gt.f32.partialorder %v508, 20.0
    %v511 = vmin.f32 %v508, 20.0
    %v512 = vmul.f32 %v511, 1.442695
    %v513 = vpow.pop %v512
    %v514 = vadd.f32 %v513, 1.0
    %v515 = vlog2.pop %v514
    %v516 = vmul.f32 %v515, 0.6931472
    %v517 = vmul.f32 -0.5, %v513
    %v518 = vadd.f32 %v517, 1.0
    %v519 = vmul.f32 %v518, %v513
    %v520 = vand.u32 2147483647, %v513
    %vm521 = vcmp.lt.f32.partialorder %v520, 0.0004427343
    %v522 = vsel %vm521, %v519, %v516
    %v523 = vsel %vm510, %v508, %v522
    %v524 = vld [vmem:[#allocation5] sm:$0xff]
    %v525 = vmul.f32 %v523, %v524
    %v526 = vadd.f32 %v506, %v525
    %527 = vst [vmem:[#allocation13] sm:$0xff] %v526
    %s528 = scalar_lea.vmem [#allocation13], 40
    %529 = vst [vmem:[%s528] sm:$0xff] %v506
    %s530 = scalar_lea.vmem [#allocation13], 80
    %531 = vst [vmem:[%s530] sm:$0xff] %v523
    %s532 = scalar_lea.vmem [#allocation11], 4
    %v533 = vld [vmem:[%s532] sm:$0x1]
    %v534 = vld [vmem:[%s532 + $0x1] sm:$0x1]
    %v535 = vld [vmem:[%s532 + $0x2] sm:$0x3]
    %s536 = scalar_lea.vmem [#allocation7], 384
    %v537 = vld [vmem:[%s536] sm:$0xff]
    %v538 = vld [vmem:[%s536 + $0x8] sm:$0xff]
    %v539 = vld [vmem:[%s536 + $0x10] sm:$0xff]
    %v540 = vld [vmem:[%s536 + $0x18] sm:$0xff]
    %v541 = vld [vmem:[%s536 + $0x20] sm:$0xff]
    %v542 = vld [vmem:[%s536 + $0x28] sm:$0xff]
    %v543 = vld [vmem:[%s536 + $0x30] sm:$0xff]
    %v544 = vld [vmem:[%s536 + $0x38] sm:$0xff]
    %v545 = vld [vmem:[%s536 + $0x40] sm:$0xff]
    %v546 = vld [vmem:[%s536 + $0x48] sm:$0xff]
    %v547 = vld [vmem:[%s536 + $0x50] sm:$0xff]
    %v548 = vld [vmem:[%s536 + $0x58] sm:$0xff]
    %v549 = vld [vmem:[%s536 + $0x60] sm:$0xff]
    %v550 = vld [vmem:[%s536 + $0x68] sm:$0xff]
    %v551 = vld [vmem:[%s536 + $0x70] sm:$0xff]
    %v552 = vld [vmem:[%s536 + $0x78] sm:$0xff]
    %v553 = vld [vmem:[%s536 + $0x80] sm:$0xff]
    %v554 = vld [vmem:[%s536 + $0x88] sm:$0xff]
    %v555 = vld [vmem:[%s536 + $0x90] sm:$0xff]
    %v556 = vld [vmem:[%s536 + $0x98] sm:$0xff]
    %v557 = vld [vmem:[%s536 + $0xa0] sm:$0xff]
    %v558 = vld [vmem:[%s536 + $0xa8] sm:$0xff]
    %v559 = vld [vmem:[%s536 + $0xb0] sm:$0xff]
    %v560 = vld [vmem:[%s536 + $0xb8] sm:$0xff]
    %v561 = vld [vmem:[%s536 + $0xc0] sm:$0xff]
    %v562 = vld [vmem:[%s536 + $0xc8] sm:$0xff]
    %v563 = vld [vmem:[%s536 + $0xd0] sm:$0xff]
    %v564 = vld [vmem:[%s536 + $0xd8] sm:$0xff]
    %v565 = vld [vmem:[%s536 + $0xe0] sm:$0xff]
    %v566 = vld [vmem:[%s536 + $0xe8] sm:$0xff]
    %v567 = vld [vmem:[%s536 + $0xf0] sm:$0xff]
    %v568 = vld [vmem:[%s536 + $0xf8] sm:$0xff]
    %v569 = vld [vmem:[%s536 + $0x100] sm:$0xff]
    %v570 = vld [vmem:[%s536 + $0x108] sm:$0xff]
    %v571 = vld [vmem:[%s536 + $0x110] sm:$0xff]
    %v572 = vld [vmem:[%s536 + $0x118] sm:$0xff]
    %v573 = vld [vmem:[%s536 + $0x120] sm:$0xff]
    %v574 = vld [vmem:[%s536 + $0x128] sm:$0xff]
    %v575 = vld [vmem:[%s536 + $0x130] sm:$0xff]
    %v576 = vld [vmem:[%s536 + $0x138] sm:$0xff]
    %v577 = vld [vmem:[%s536 + $0x140] sm:$0xff]
    %v578 = vld [vmem:[%s536 + $0x148] sm:$0xff]
    %v579 = vld [vmem:[%s536 + $0x150] sm:$0xff]
    %v580 = vld [vmem:[%s536 + $0x158] sm:$0xff]
    %v581 = vld [vmem:[%s536 + $0x160] sm:$0xff]
    %v582 = vld [vmem:[%s536 + $0x168] sm:$0xff]
    %v583 = vld [vmem:[%s536 + $0x170] sm:$0xff]
    %v584 = vld [vmem:[%s536 + $0x178] sm:$0xff]
    %v586 = vlaneseq
    %v587 = vshrl.u32 %v586, 7
    %v588 = vsub.s32 0, %v587
    %v589 = vrot.slane %v533, %v588
    %591 = vmatprep.subr.mxu0 0.0
    %592 = vmatpush1.msra.mxu0 %v537
    %593 = vmatprep.subr.mxu0 0.0
    %594 = vmatpush1.msra.mxu0 %v538
    %595 = vmatprep.subr.mxu0 0.0
    %596 = vmatpush1.msra.mxu0 %v539
    %597 = vmatprep.subr.mxu0 0.0
    %598 = vmatpush1.msra.mxu0 %v540
    %599 = vmatprep.subr.mxu0 0.0
    %600 = vmatpush1.msra.mxu0 %v541
    %601 = vmatprep.subr.mxu0 0.0
    %602 = vmatpush1.msra.mxu0 %v542
    %603 = vmatprep.subr.mxu0 0.0
    %604 = vmatpush1.msra.mxu0 %v543
    %605 = vmatprep.subr.mxu0 0.0
    %606 = vmatpush1.msra.mxu0 %v544
    %607 = vmatprep.subr.mxu0 0.0
    %608 = vmatpush1.msra.mxu0 %v545
    %609 = vmatprep.subr.mxu0 0.0
    %610 = vmatpush1.msra.mxu0 %v546
    %611 = vmatprep.subr.mxu0 0.0
    %612 = vmatpush1.msra.mxu0 %v547
    %613 = vmatprep.subr.mxu0 0.0
    %614 = vmatpush1.msra.mxu0 %v548
    %615 = vmatprep.subr.mxu0 0.0
    %616 = vmatpush1.msra.mxu0 %v549
    %617 = vmatprep.subr.mxu0 0.0
    %618 = vmatpush1.msra.mxu0 %v550
    %619 = vmatprep.subr.mxu0 0.0
    %620 = vmatpush1.msra.mxu0 %v551
    %621 = vmatprep.subr.mxu0 0.0
    %622 = vmatpush1.msra.mxu0 %v552
    %623 = vmatprep.subr.mxu0 0.0
    %624 = vmatpush1.msra.mxu0 %v553
    %625 = vmatprep.subr.mxu0 0.0
    %626 = vmatpush1.msra.mxu0 %v554
    %627 = vmatprep.subr.mxu0 0.0
    %628 = vmatpush1.msra.mxu0 %v555
    %629 = vmatprep.subr.mxu0 0.0
    %630 = vmatpush1.msra.mxu0 %v556
    %631 = vmatprep.subr.mxu0 0.0
    %632 = vmatpush1.msra.mxu0 %v557
    %633 = vmatprep.subr.mxu0 0.0
    %634 = vmatpush1.msra.mxu0 %v558
    %635 = vmatprep.subr.mxu0 0.0
    %636 = vmatpush1.msra.mxu0 %v559
    %637 = vmatprep.subr.mxu0 0.0
    %638 = vmatpush1.msra.mxu0 %v560
    %639 = vmatprep.subr.mxu0 0.0
    %640 = vmatpush1.msra.mxu0 %v561
    %641 = vmatprep.subr.mxu0 0.0
    %642 = vmatpush1.msra.mxu0 %v562
    %643 = vmatprep.subr.mxu0 0.0
    %644 = vmatpush1.msra.mxu0 %v563
    %645 = vmatprep.subr.mxu0 0.0
    %646 = vmatpush1.msra.mxu0 %v564
    %647 = vmatprep.subr.mxu0 0.0
    %648 = vmatpush1.msra.mxu0 %v565
    %649 = vmatprep.subr.mxu0 0.0
    %650 = vmatpush1.msra.mxu0 %v566
    %651 = vmatprep.subr.mxu0 0.0
    %652 = vmatpush1.msra.mxu0 %v567
    %653 = vmatprep.subr.mxu0 0.0
    %654 = vmatpush1.msra.mxu0 %v568
    %655 = vmatprep.mubr.f32.mxu0 %v395
    %656 = vmatmul.mubr.f32.gmra.mrb[0].mxu0 %v104
    %v657 = vpop.f32.mrb[0].mxu0
    %v658 = vadd.f32 %v589, %v657
    %v659 = vpop.f32.mrb[0].mxu0
    %660 = vdwg.mxu0
    %661 = vmatprep.subr.mxu0 0.0
    %662 = vmatpush1.msra.mxu0 %v569
    %663 = vmatprep.subr.mxu0 0.0
    %664 = vmatpush1.msra.mxu0 %v570
    %665 = vmatprep.subr.mxu0 0.0
    %666 = vmatpush1.msra.mxu0 %v571
    %667 = vmatprep.subr.mxu0 0.0
    %668 = vmatpush1.msra.mxu0 %v572
    %669 = vmatprep.subr.mxu0 0.0
    %670 = vmatpush1.msra.mxu0 %v573
    %671 = vmatprep.subr.mxu0 0.0
    %672 = vmatpush1.msra.mxu0 %v574
    %673 = vmatprep.subr.mxu0 0.0
    %674 = vmatpush1.msra.mxu0 %v575
    %675 = vmatprep.subr.mxu0 0.0
    %676 = vmatpush1.msra.mxu0 %v576
    %677 = vmatprep.subr.mxu0 0.0
    %678 = vmatpush1.msra.mxu0 %v577
    %679 = vmatprep.subr.mxu0 0.0
    %680 = vmatpush1.msra.mxu0 %v578
    %681 = vmatprep.subr.mxu0 0.0
    %682 = vmatpush1.msra.mxu0 %v579
    %683 = vmatprep.subr.mxu0 0.0
    %684 = vmatpush1.msra.mxu0 %v580
    %685 = vmatprep.subr.mxu0 0.0
    %686 = vmatpush1.msra.mxu0 %v581
    %687 = vmatprep.subr.mxu0 0.0
    %688 = vmatpush1.msra.mxu0 %v582
    %689 = vmatprep.subr.mxu0 0.0
    %690 = vmatpush1.msra.mxu0 %v583
    %691 = vmatprep.subr.mxu0 0.0
    %692 = vmatpush1.msra.mxu0 %v584
    %693 = vmatprep.subr.mxu0 0.0
    %694 = vmatpush1.msra.mxu0 0.0
    %695 = vmatprep.subr.mxu0 0.0
    %696 = vmatpush1.msra.mxu0 0.0
    %697 = vmatprep.subr.mxu0 0.0
    %698 = vmatpush1.msra.mxu0 0.0
    %699 = vmatprep.subr.mxu0 0.0
    %700 = vmatpush1.msra.mxu0 0.0
    %701 = vmatprep.subr.mxu0 0.0
    %702 = vmatpush1.msra.mxu0 0.0
    %703 = vmatprep.subr.mxu0 0.0
    %704 = vmatpush1.msra.mxu0 0.0
    %705 = vmatprep.subr.mxu0 0.0
    %706 = vmatpush1.msra.mxu0 0.0
    %707 = vmatprep.subr.mxu0 0.0
    %708 = vmatpush1.msra.mxu0 0.0
    %709 = vmatprep.subr.mxu0 0.0
    %710 = vmatpush1.msra.mxu0 0.0
    %711 = vmatprep.subr.mxu0 0.0
    %712 = vmatpush1.msra.mxu0 0.0
    %713 = vmatprep.subr.mxu0 0.0
    %714 = vmatpush1.msra.mxu0 0.0
    %715 = vmatprep.subr.mxu0 0.0
    %716 = vmatpush1.msra.mxu0 0.0
    %717 = vmatprep.subr.mxu0 0.0
    %718 = vmatpush1.msra.mxu0 0.0
    %719 = vmatprep.subr.mxu0 0.0
    %720 = vmatpush1.msra.mxu0 0.0
    %721 = vmatprep.subr.mxu0 0.0
    %722 = vmatpush1.msra.mxu0 0.0
    %723 = vmatprep.subr.mxu0 0.0
    %724 = vmatpush1.msra.mxu0 0.0
    %725 = vmatprep.mubr.f32.mxu0 0.0
    %726 = vmatmul.mubr.f32.gmra.mrb[0].mxu0 %v526
    %v727 = vpop.f32.mrb[0].mxu0
    %v728 = vadd.f32 %v658, %v727
    %v729 = vpop.f32.mrb[0].mxu0
    %730 = vdwg.mxu0
    %v731 = vmax.f32 %v728, 0.0
    %s732 = scalar_lea.vmem [#allocation8], 128
    %v733 = vld [vmem:[%s732] sm:$0xff]
    %v734 = vld [vmem:[%s732 + $0x8] sm:$0xff]
    %v735 = vld [vmem:[%s732 + $0x10] sm:$0xff]
    %v736 = vld [vmem:[%s732 + $0x18] sm:$0xff]
    %v737 = vld [vmem:[%s732 + $0x20] sm:$0xff]
    %v738 = vld [vmem:[%s732 + $0x28] sm:$0xff]
    %v739 = vld [vmem:[%s732 + $0x30] sm:$0xff]
    %v740 = vld [vmem:[%s732 + $0x38] sm:$0xff]
    %v741 = vld [vmem:[%s732 + $0x40] sm:$0xff]
    %v742 = vld [vmem:[%s732 + $0x48] sm:$0xff]
    %v743 = vld [vmem:[%s732 + $0x50] sm:$0xff]
    %v744 = vld [vmem:[%s732 + $0x58] sm:$0xff]
    %v745 = vld [vmem:[%s732 + $0x60] sm:$0xff]
    %v746 = vld [vmem:[%s732 + $0x68] sm:$0xff]
    %v747 = vld [vmem:[%s732 + $0x70] sm:$0xff]
    %v748 = vld [vmem:[%s732 + $0x78] sm:$0xff]
    %v750 = vlaneseq
    %v751 = vshrl.u32 %v750, 7
    %v752 = vsub.s32 0, %v751
    %v753 = vrot.slane %v534, %v752
    %755 = vmatprep.subr.mxu0 0.0
    %756 = vmatpush1.msra.mxu0 %v733
    %757 = vmatprep.subr.mxu0 0.0
    %758 = vmatpush1.msra.mxu0 %v734
    %759 = vmatprep.subr.mxu0 0.0
    %760 = vmatpush1.msra.mxu0 %v735
    %761 = vmatprep.subr.mxu0 0.0
    %762 = vmatpush1.msra.mxu0 %v736
    %763 = vmatprep.subr.mxu0 0.0
    %764 = vmatpush1.msra.mxu0 %v737
    %765 = vmatprep.subr.mxu0 0.0
    %766 = vmatpush1.msra.mxu0 %v738
    %767 = vmatprep.subr.mxu0 0.0
    %768 = vmatpush1.msra.mxu0 %v739
    %769 = vmatprep.subr.mxu0 0.0
    %770 = vmatpush1.msra.mxu0 %v740
    %771 = vmatprep.subr.mxu0 0.0
    %772 = vmatpush1.msra.mxu0 %v741
    %773 = vmatprep.subr.mxu0 0.0
    %774 = vmatpush1.msra.mxu0 %v742
    %775 = vmatprep.subr.mxu0 0.0
    %776 = vmatpush1.msra.mxu0 %v743
    %777 = vmatprep.subr.mxu0 0.0
    %778 = vmatpush1.msra.mxu0 %v744
    %779 = vmatprep.subr.mxu0 0.0
    %780 = vmatpush1.msra.mxu0 %v745
    %781 = vmatprep.subr.mxu0 0.0
    %782 = vmatpush1.msra.mxu0 %v746
    %783 = vmatprep.subr.mxu0 0.0
    %784 = vmatpush1.msra.mxu0 %v747
    %785 = vmatprep.subr.mxu0 0.0
    %786 = vmatpush1.msra.mxu0 %v748
    %787 = vmatprep.subr.mxu0 0.0
    %788 = vmatpush1.msra.mxu0 0.0
    %789 = vmatprep.subr.mxu0 0.0
    %790 = vmatpush1.msra.mxu0 0.0
    %791 = vmatprep.subr.mxu0 0.0
    %792 = vmatpush1.msra.mxu0 0.0
    %793 = vmatprep.subr.mxu0 0.0
    %794 = vmatpush1.msra.mxu0 0.0
    %795 = vmatprep.subr.mxu0 0.0
    %796 = vmatpush1.msra.mxu0 0.0
    %797 = vmatprep.subr.mxu0 0.0
    %798 = vmatpush1.msra.mxu0 0.0
    %799 = vmatprep.subr.mxu0 0.0
    %800 = vmatpush1.msra.mxu0 0.0
    %801 = vmatprep.subr.mxu0 0.0
    %802 = vmatpush1.msra.mxu0 0.0
    %803 = vmatprep.subr.mxu0 0.0
    %804 = vmatpush1.msra.mxu0 0.0
    %805 = vmatprep.subr.mxu0 0.0
    %806 = vmatpush1.msra.mxu0 0.0
    %807 = vmatprep.subr.mxu0 0.0
    %808 = vmatpush1.msra.mxu0 0.0
    %809 = vmatprep.subr.mxu0 0.0
    %810 = vmatpush1.msra.mxu0 0.0
    %811 = vmatprep.subr.mxu0 0.0
    %812 = vmatpush1.msra.mxu0 0.0
    %813 = vmatprep.subr.mxu0 0.0
    %814 = vmatpush1.msra.mxu0 0.0
    %815 = vmatprep.subr.mxu0 0.0
    %816 = vmatpush1.msra.mxu0 0.0
    %817 = vmatprep.subr.mxu0 0.0
    %818 = vmatpush1.msra.mxu0 0.0
    %819 = vmatprep.mubr.f32.mxu0 0.0
    %820 = vmatmul.mubr.f32.gmra.mrb[0].mxu0 %v731
    %v821 = vpop.f32.mrb[0].mxu0
    %v822 = vadd.f32 %v753, %v821
    %v823 = vpop.f32.mrb[0].mxu0
    %824 = vdwg.mxu0
    %v825 = vmax.f32 %v822, 0.0
    %s826 = scalar_lea.vmem [#allocation10], 256
    %v827 = vld [vmem:[%s826] sm:$0xff]
    %v828 = vld [vmem:[%s826 + $0x8] sm:$0xff]
    %v829 = vld [vmem:[%s826 + $0x10] sm:$0xff]
    %v830 = vld [vmem:[%s826 + $0x18] sm:$0xff]
    %v831 = vld [vmem:[%s826 + $0x20] sm:$0xff]
    %v832 = vld [vmem:[%s826 + $0x28] sm:$0xff]
    %v833 = vld [vmem:[%s826 + $0x30] sm:$0xff]
    %v834 = vld [vmem:[%s826 + $0x38] sm:$0xff]
    %v835 = vld [vmem:[%s826 + $0x40] sm:$0xff]
    %v836 = vld [vmem:[%s826 + $0x48] sm:$0xff]
    %v837 = vld [vmem:[%s826 + $0x50] sm:$0xff]
    %v838 = vld [vmem:[%s826 + $0x58] sm:$0xff]
    %v839 = vld [vmem:[%s826 + $0x60] sm:$0xff]
    %v840 = vld [vmem:[%s826 + $0x68] sm:$0xff]
    %v841 = vld [vmem:[%s826 + $0x70] sm:$0xff]
    %v842 = vld [vmem:[%s826 + $0x78] sm:$0xff]
    %v843 = vld [vmem:[%s826 + $0x80] sm:$0xff]
    %v844 = vld [vmem:[%s826 + $0x88] sm:$0xff]
    %v845 = vld [vmem:[%s826 + $0x90] sm:$0xff]
    %v846 = vld [vmem:[%s826 + $0x98] sm:$0xff]
    %v847 = vld [vmem:[%s826 + $0xa0] sm:$0xff]
    %v848 = vld [vmem:[%s826 + $0xa8] sm:$0xff]
    %v849 = vld [vmem:[%s826 + $0xb0] sm:$0xff]
    %v850 = vld [vmem:[%s826 + $0xb8] sm:$0xff]
    %v851 = vld [vmem:[%s826 + $0xc0] sm:$0xff]
    %v852 = vld [vmem:[%s826 + $0xc8] sm:$0xff]
    %v853 = vld [vmem:[%s826 + $0xd0] sm:$0xff]
    %v854 = vld [vmem:[%s826 + $0xd8] sm:$0xff]
    %v855 = vld [vmem:[%s826 + $0xe0] sm:$0xff]
    %v856 = vld [vmem:[%s826 + $0xe8] sm:$0xff]
    %v857 = vld [vmem:[%s826 + $0xf0] sm:$0xff]
    %v858 = vld [vmem:[%s826 + $0xf8] sm:$0xff]
    %v860 = vlaneseq
    %v861 = vshrl.u32 %v860, 7
    %v862 = vsub.s32 0, %v861
    %v863 = vrot.slane %v535, %v862
    %v864 = vlaneseq
    %v865 = vshrl.u32 %v864, 7
    %v866 = vsub.s32 1, %v865
    %v867 = vrot.slane %v535, %v866
    %870 = vmatprep.subr.mxu0 %v828
    %871 = vmatpush1.msra.mxu0 %v827
    %872 = vmatprep.subr.mxu0 %v830
    %873 = vmatpush1.msra.mxu0 %v829
    %874 = vmatprep.subr.mxu0 %v832
    %875 = vmatpush1.msra.mxu0 %v831
    %876 = vmatprep.subr.mxu0 %v834
    %877 = vmatpush1.msra.mxu0 %v833
    %878 = vmatprep.subr.mxu0 %v836
    %879 = vmatpush1.msra.mxu0 %v835
    %880 = vmatprep.subr.mxu0 %v838
    %881 = vmatpush1.msra.mxu0 %v837
    %882 = vmatprep.subr.mxu0 %v840
    %883 = vmatpush1.msra.mxu0 %v839
    %884 = vmatprep.subr.mxu0 %v842
    %885 = vmatpush1.msra.mxu0 %v841
    %886 = vmatprep.subr.mxu0 %v844
    %887 = vmatpush1.msra.mxu0 %v843
    %888 = vmatprep.subr.mxu0 %v846
    %889 = vmatpush1.msra.mxu0 %v845
    %890 = vmatprep.subr.mxu0 %v848
    %891 = vmatpush1.msra.mxu0 %v847
    %892 = vmatprep.subr.mxu0 %v850
    %893 = vmatpush1.msra.mxu0 %v849
    %894 = vmatprep.subr.mxu0 %v852
    %895 = vmatpush1.msra.mxu0 %v851
    %896 = vmatprep.subr.mxu0 %v854
    %897 = vmatpush1.msra.mxu0 %v853
    %898 = vmatprep.subr.mxu0 %v856
    %899 = vmatpush1.msra.mxu0 %v855
    %900 = vmatprep.subr.mxu0 %v858
    %901 = vmatpush1.msra.mxu0 %v857
    %902 = vmatprep.subr.mxu0 0.0
    %903 = vmatpush1.msra.mxu0 0.0
    %904 = vmatprep.subr.mxu0 0.0
    %905 = vmatpush1.msra.mxu0 0.0
    %906 = vmatprep.subr.mxu0 0.0
    %907 = vmatpush1.msra.mxu0 0.0
    %908 = vmatprep.subr.mxu0 0.0
    %909 = vmatpush1.msra.mxu0 0.0
    %910 = vmatprep.subr.mxu0 0.0
    %911 = vmatpush1.msra.mxu0 0.0
    %912 = vmatprep.subr.mxu0 0.0
    %913 = vmatpush1.msra.mxu0 0.0
    %914 = vmatprep.subr.mxu0 0.0
    %915 = vmatpush1.msra.mxu0 0.0
    %916 = vmatprep.subr.mxu0 0.0
    %917 = vmatpush1.msra.mxu0 0.0
    %918 = vmatprep.subr.mxu0 0.0
    %919 = vmatpush1.msra.mxu0 0.0
    %920 = vmatprep.subr.mxu0 0.0
    %921 = vmatpush1.msra.mxu0 0.0
    %922 = vmatprep.subr.mxu0 0.0
    %923 = vmatpush1.msra.mxu0 0.0
    %924 = vmatprep.subr.mxu0 0.0
    %925 = vmatpush1.msra.mxu0 0.0
    %926 = vmatprep.subr.mxu0 0.0
    %927 = vmatpush1.msra.mxu0 0.0
    %928 = vmatprep.subr.mxu0 0.0
    %929 = vmatpush1.msra.mxu0 0.0
    %930 = vmatprep.subr.mxu0 0.0
    %931 = vmatpush1.msra.mxu0 0.0
    %932 = vmatprep.subr.mxu0 0.0
    %933 = vmatpush1.msra.mxu0 0.0
    %934 = vmatprep.mubr.f32.mxu0 0.0
    %935 = vmatmul.mubr.f32.gmra.mrb[0].mxu0 %v825
    %v936 = vpop.f32.mrb[0].mxu0
    %v937 = vadd.f32 %v863, %v936
    %v938 = vpop.f32.mrb[0].mxu0
    %v939 = vadd.f32 %v867, %v938
    %940 = vdwg.mxu0
    %vm941 = vcmp.gt.f32.partialorder %v939, 20.0
    %v942 = vmin.f32 %v939, 20.0
    %v943 = vmul.f32 %v942, 1.442695
    %v944 = vpow.pop %v943
    %v945 = vadd.f32 %v944, 1.0
    %v946 = vlog2.pop %v945
    %v947 = vmul.f32 %v946, 0.6931472
    %v948 = vmul.f32 -0.5, %v944
    %v949 = vadd.f32 %v948, 1.0
    %v950 = vmul.f32 %v949, %v944
    %v951 = vand.u32 2147483647, %v944
    %vm952 = vcmp.lt.f32.partialorder %v951, 0.0004427343
    %v953 = vsel %vm952, %v950, %v947
    %v954 = vsel %vm941, %v939, %v953
    %s955 = scalar_lea.vmem [#allocation5], 8
    %v956 = vld [vmem:[%s955] sm:$0xff]
    %v957 = vmul.f32 %v954, %v956
    %v958 = vadd.f32 %v937, %v957
    %s959 = scalar_lea.vmem [#allocation13], 8
    %960 = vst [vmem:[%s959] sm:$0xff] %v958
    %s961 = scalar_lea.vmem [#allocation13], 48
    %962 = vst [vmem:[%s961] sm:$0xff] %v937
    %s963 = scalar_lea.vmem [#allocation13], 88
    %964 = vst [vmem:[%s963] sm:$0xff] %v954
    %s965 = scalar_lea.vmem [#allocation11], 8
    %v966 = vld [vmem:[%s965] sm:$0x1]
    %v967 = vld [vmem:[%s965 + $0x1] sm:$0x1]
    %v968 = vld [vmem:[%s965 + $0x2] sm:$0x3]
    %s969 = scalar_lea.vmem [#allocation7], 768
    %v970 = vld [vmem:[%s969] sm:$0xff]
    %v971 = vld [vmem:[%s969 + $0x8] sm:$0xff]
    %v972 = vld [vmem:[%s969 + $0x10] sm:$0xff]
    %v973 = vld [vmem:[%s969 + $0x18] sm:$0xff]
    %v974 = vld [vmem:[%s969 + $0x20] sm:$0xff]
    %v975 = vld [vmem:[%s969 + $0x28] sm:$0xff]
    %v976 = vld [vmem:[%s969 + $0x30] sm:$0xff]
    %v977 = vld [vmem:[%s969 + $0x38] sm:$0xff]
    %v978 = vld [vmem:[%s969 + $0x40] sm:$0xff]
    %v979 = vld [vmem:[%s969 + $0x48] sm:$0xff]
    %v980 = vld [vmem:[%s969 + $0x50] sm:$0xff]
    %v981 = vld [vmem:[%s969 + $0x58] sm:$0xff]
    %v982 = vld [vmem:[%s969 + $0x60] sm:$0xff]
    %v983 = vld [vmem:[%s969 + $0x68] sm:$0xff]
    %v984 = vld [vmem:[%s969 + $0x70] sm:$0xff]
    %v985 = vld [vmem:[%s969 + $0x78] sm:$0xff]
    %v986 = vld [vmem:[%s969 + $0x80] sm:$0xff]
    %v987 = vld [vmem:[%s969 + $0x88] sm:$0xff]
    %v988 = vld [vmem:[%s969 + $0x90] sm:$0xff]
    %v989 = vld [vmem:[%s969 + $0x98] sm:$0xff]
    %v990 = vld [vmem:[%s969 + $0xa0] sm:$0xff]
    %v991 = vld [vmem:[%s969 + $0xa8] sm:$0xff]
    %v992 = vld [vmem:[%s969 + $0xb0] sm:$0xff]
    %v993 = vld [vmem:[%s969 + $0xb8] sm:$0xff]
    %v994 = vld [vmem:[%s969 + $0xc0] sm:$0xff]
    %v995 = vld [vmem:[%s969 + $0xc8] sm:$0xff]
    %v996 = vld [vmem:[%s969 + $0xd0] sm:$0xff]
    %v997 = vld [vmem:[%s969 + $0xd8] sm:$0xff]
    %v998 = vld [vmem:[%s969 + $0xe0] sm:$0xff]
    %v999 = vld [vmem:[%s969 + $0xe8] sm:$0xff]
    %v1000 = vld [vmem:[%s969 + $0xf0] sm:$0xff]
    %v1001 = vld [vmem:[%s969 + $0xf8] sm:$0xff]
    %v1002 = vld [vmem:[%s969 + $0x100] sm:$0xff]
    %v1003 = vld [vmem:[%s969 + $0x108] sm:$0xff]
    %v1004 = vld [vmem:[%s969 + $0x110] sm:$0xff]
    %v1005 = vld [vmem:[%s969 + $0x118] sm:$0xff]
    %v1006 = vld [vmem:[%s969 + $0x120] sm:$0xff]
    %v1007 = vld [vmem:[%s969 + $0x128] sm:$0xff]
    %v1008 = vld [vmem:[%s969 + $0x130] sm:$0xff]
    %v1009 = vld [vmem:[%s969 + $0x138] sm:$0xff]
    %v1010 = vld [vmem:[%s969 + $0x140] sm:$0xff]
    %v1011 = vld [vmem:[%s969 + $0x148] sm:$0xff]
    %v1012 = vld [vmem:[%s969 + $0x150] sm:$0xff]
    %v1013 = vld [vmem:[%s969 + $0x158] sm:$0xff]
    %v1014 = vld [vmem:[%s969 + $0x160] sm:$0xff]
    %v1015 = vld [vmem:[%s969 + $0x168] sm:$0xff]
    %v1016 = vld [vmem:[%s969 + $0x170] sm:$0xff]
    %v1017 = vld [vmem:[%s969 + $0x178] sm:$0xff]
    %v1019 = vlaneseq
    %v1020 = vshrl.u32 %v1019, 7
    %v1021 = vsub.s32 0, %v1020
    %v1022 = vrot.slane %v966, %v1021
    %1024 = vmatprep.subr.mxu0 0.0
    %1025 = vmatpush1.msra.mxu0 %v970
    %1026 = vmatprep.subr.mxu0 0.0
    %1027 = vmatpush1.msra.mxu0 %v971
    %1028 = vmatprep.subr.mxu0 0.0
    %1029 = vmatpush1.msra.mxu0 %v972
    %1030 = vmatprep.subr.mxu0 0.0
    %1031 = vmatpush1.msra.mxu0 %v973
    %1032 = vmatprep.subr.mxu0 0.0
    %1033 = vmatpush1.msra.mxu0 %v974
    %1034 = vmatprep.subr.mxu0 0.0
    %1035 = vmatpush1.msra.mxu0 %v975
    %1036 = vmatprep.subr.mxu0 0.0
    %1037 = vmatpush1.msra.mxu0 %v976
    %1038 = vmatprep.subr.mxu0 0.0
    %1039 = vmatpush1.msra.mxu0 %v977
    %1040 = vmatprep.subr.mxu0 0.0
    %1041 = vmatpush1.msra.mxu0 %v978
    %1042 = vmatprep.subr.mxu0 0.0
    %1043 = vmatpush1.msra.mxu0 %v979
    %1044 = vmatprep.subr.mxu0 0.0
    %1045 = vmatpush1.msra.mxu0 %v980
    %1046 = vmatprep.subr.mxu0 0.0
    %1047 = vmatpush1.msra.mxu0 %v981
    %1048 = vmatprep.subr.mxu0 0.0
    %1049 = vmatpush1.msra.mxu0 %v982
    %1050 = vmatprep.subr.mxu0 0.0
    %1051 = vmatpush1.msra.mxu0 %v983
    %1052 = vmatprep.subr.mxu0 0.0
    %1053 = vmatpush1.msra.mxu0 %v984
    %1054 = vmatprep.subr.mxu0 0.0
    %1055 = vmatpush1.msra.mxu0 %v985
    %1056 = vmatprep.subr.mxu0 0.0
    %1057 = vmatpush1.msra.mxu0 %v986
    %1058 = vmatprep.subr.mxu0 0.0
    %1059 = vmatpush1.msra.mxu0 %v987
    %1060 = vmatprep.subr.mxu0 0.0
    %1061 = vmatpush1.msra.mxu0 %v988
    %1062 = vmatprep.subr.mxu0 0.0
    %1063 = vmatpush1.msra.mxu0 %v989
    %1064 = vmatprep.subr.mxu0 0.0
    %1065 = vmatpush1.msra.mxu0 %v990
    %1066 = vmatprep.subr.mxu0 0.0
    %1067 = vmatpush1.msra.mxu0 %v991
    %1068 = vmatprep.subr.mxu0 0.0
    %1069 = vmatpush1.msra.mxu0 %v992
    %1070 = vmatprep.subr.mxu0 0.0
    %1071 = vmatpush1.msra.mxu0 %v993
    %1072 = vmatprep.subr.mxu0 0.0
    %1073 = vmatpush1.msra.mxu0 %v994
    %1074 = vmatprep.subr.mxu0 0.0
    %1075 = vmatpush1.msra.mxu0 %v995
    %1076 = vmatprep.subr.mxu0 0.0
    %1077 = vmatpush1.msra.mxu0 %v996
    %1078 = vmatprep.subr.mxu0 0.0
    %1079 = vmatpush1.msra.mxu0 %v997
    %1080 = vmatprep.subr.mxu0 0.0
    %1081 = vmatpush1.msra.mxu0 %v998
    %1082 = vmatprep.subr.mxu0 0.0
    %1083 = vmatpush1.msra.mxu0 %v999
    %1084 = vmatprep.subr.mxu0 0.0
    %1085 = vmatpush1.msra.mxu0 %v1000
    %1086 = vmatprep.subr.mxu0 0.0
    %1087 = vmatpush1.msra.mxu0 %v1001
    %1088 = vmatprep.mubr.f32.mxu0 %v825
    %1089 = vmatmul.mubr.f32.gmra.mrb[0].mxu0 %v104
    %v1090 = vpop.f32.mrb[0].mxu0
    %v1091 = vadd.f32 %v1022, %v1090
    %v1092 = vpop.f32.mrb[0].mxu0
    %1093 = vdwg.mxu0
    %1094 = vmatprep.subr.mxu0 0.0
    %1095 = vmatpush1.msra.mxu0 %v1002
    %1096 = vmatprep.subr.mxu0 0.0
    %1097 = vmatpush1.msra.mxu0 %v1003
    %1098 = vmatprep.subr.mxu0 0.0
    %1099 = vmatpush1.msra.mxu0 %v1004
    %1100 = vmatprep.subr.mxu0 0.0
    %1101 = vmatpush1.msra.mxu0 %v1005
    %1102 = vmatprep.subr.mxu0 0.0
    %1103 = vmatpush1.msra.mxu0 %v1006
    %1104 = vmatprep.subr.mxu0 0.0
    %1105 = vmatpush1.msra.mxu0 %v1007
    %1106 = vmatprep.subr.mxu0 0.0
    %1107 = vmatpush1.msra.mxu0 %v1008
    %1108 = vmatprep.subr.mxu0 0.0
    %1109 = vmatpush1.msra.mxu0 %v1009
    %1110 = vmatprep.subr.mxu0 0.0
    %1111 = vmatpush1.msra.mxu0 %v1010
    %1112 = vmatprep.subr.mxu0 0.0
    %1113 = vmatpush1.msra.mxu0 %v1011
    %1114 = vmatprep.subr.mxu0 0.0
    %1115 = vmatpush1.msra.mxu0 %v1012
    %1116 = vmatprep.subr.mxu0 0.0
    %1117 = vmatpush1.msra.mxu0 %v1013
    %1118 = vmatprep.subr.mxu0 0.0
    %1119 = vmatpush1.msra.mxu0 %v1014
    %1120 = vmatprep.subr.mxu0 0.0
    %1121 = vmatpush1.msra.mxu0 %v1015
    %1122 = vmatprep.subr.mxu0 0.0
    %1123 = vmatpush1.msra.mxu0 %v1016
    %1124 = vmatprep.subr.mxu0 0.0
    %1125 = vmatpush1.msra.mxu0 %v1017
    %1126 = vmatprep.subr.mxu0 0.0
    %1127 = vmatpush1.msra.mxu0 0.0
    %1128 = vmatprep.subr.mxu0 0.0
    %1129 = vmatpush1.msra.mxu0 0.0
    %1130 = vmatprep.subr.mxu0 0.0
    %1131 = vmatpush1.msra.mxu0 0.0
    %1132 = vmatprep.subr.mxu0 0.0
    %1133 = vmatpush1.msra.mxu0 0.0
    %1134 = vmatprep.subr.mxu0 0.0
    %1135 = vmatpush1.msra.mxu0 0.0
    %1136 = vmatprep.subr.mxu0 0.0
    %1137 = vmatpush1.msra.mxu0 0.0
    %1138 = vmatprep.subr.mxu0 0.0
    %1139 = vmatpush1.msra.mxu0 0.0
    %1140 = vmatprep.subr.mxu0 0.0
    %1141 = vmatpush1.msra.mxu0 0.0
    %1142 = vmatprep.subr.mxu0 0.0
    %1143 = vmatpush1.msra.mxu0 0.0
    %1144 = vmatprep.subr.mxu0 0.0
    %1145 = vmatpush1.msra.mxu0 0.0
    %1146 = vmatprep.subr.mxu0 0.0
    %1147 = vmatpush1.msra.mxu0 0.0
    %1148 = vmatprep.subr.mxu0 0.0
    %1149 = vmatpush1.msra.mxu0 0.0
    %1150 = vmatprep.subr.mxu0 0.0
    %1151 = vmatpush1.msra.mxu0 0.0
    %1152 = vmatprep.subr.mxu0 0.0
    %1153 = vmatpush1.msra.mxu0 0.0
    %1154 = vmatprep.subr.mxu0 0.0
    %1155 = vmatpush1.msra.mxu0 0.0
    %1156 = vmatprep.subr.mxu0 0.0
    %1157 = vmatpush1.msra.mxu0 0.0
    %1158 = vmatprep.mubr.f32.mxu0 0.0
    %1159 = vmatmul.mubr.f32.gmra.mrb[0].mxu0 %v958
    %v1160 = vpop.f32.mrb[0].mxu0
    %v1161 = vadd.f32 %v1091, %v1160
    %v1162 = vpop.f32.mrb[0].mxu0
    %1163 = vdwg.mxu0
    %v1164 = vmax.f32 %v1161, 0.0
    %s1165 = scalar_lea.vmem [#allocation8], 256
    %v1166 = vld [vmem:[%s1165] sm:$0xff]
    %v1167 = vld [vmem:[%s1165 + $0x8] sm:$0xff]
    %v1168 = vld [vmem:[%s1165 + $0x10] sm:$0xff]
    %v1169 = vld [vmem:[%s1165 + $0x18] sm:$0xff]
    %v1170 = vld [vmem:[%s1165 + $0x20] sm:$0xff]
    %v1171 = vld [vmem:[%s1165 + $0x28] sm:$0xff]
    %v1172 = vld [vmem:[%s1165 + $0x30] sm:$0xff]
    %v1173 = vld [vmem:[%s1165 + $0x38] sm:$0xff]
    %v1174 = vld [vmem:[%s1165 + $0x40] sm:$0xff]
    %v1175 = vld [vmem:[%s1165 + $0x48] sm:$0xff]
    %v1176 = vld [vmem:[%s1165 + $0x50] sm:$0xff]
    %v1177 = vld [vmem:[%s1165 + $0x58] sm:$0xff]
    %v1178 = vld [vmem:[%s1165 + $0x60] sm:$0xff]
    %v1179 = vld [vmem:[%s1165 + $0x68] sm:$0xff]
    %v1180 = vld [vmem:[%s1165 + $0x70] sm:$0xff]
    %v1181 = vld [vmem:[%s1165 + $0x78] sm:$0xff]
    %v1183 = vlaneseq
    %v1184 = vshrl.u32 %v1183, 7
    %v1185 = vsub.s32 0, %v1184
    %v1186 = vrot.slane %v967, %v1185
    %1188 = vmatprep.subr.mxu0 0.0
    %1189 = vmatpush1.msra.mxu0 %v1166
    %1190 = vmatprep.subr.mxu0 0.0
    %1191 = vmatpush1.msra.mxu0 %v1167
    %1192 = vmatprep.subr.mxu0 0.0
    %1193 = vmatpush1.msra.mxu0 %v1168
    %1194 = vmatprep.subr.mxu0 0.0
    %1195 = vmatpush1.msra.mxu0 %v1169
    %1196 = vmatprep.subr.mxu0 0.0
    %1197 = vmatpush1.msra.mxu0 %v1170
    %1198 = vmatprep.subr.mxu0 0.0
    %1199 = vmatpush1.msra.mxu0 %v1171
    %1200 = vmatprep.subr.mxu0 0.0
    %1201 = vmatpush1.msra.mxu0 %v1172
    %1202 = vmatprep.subr.mxu0 0.0
    %1203 = vmatpush1.msra.mxu0 %v1173
    %1204 = vmatprep.subr.mxu0 0.0
    %1205 = vmatpush1.msra.mxu0 %v1174
    %1206 = vmatprep.subr.mxu0 0.0
    %1207 = vmatpush1.msra.mxu0 %v1175
    %1208 = vmatprep.subr.mxu0 0.0
    %1209 = vmatpush1.msra.mxu0 %v1176
    %1210 = vmatprep.subr.mxu0 0.0
    %1211 = vmatpush1.msra.mxu0 %v1177
    %1212 = vmatprep.subr.mxu0 0.0
    %1213 = vmatpush1.msra.mxu0 %v1178
    %1214 = vmatprep.subr.mxu0 0.0
    %1215 = vmatpush1.msra.mxu0 %v1179
    %1216 = vmatprep.subr.mxu0 0.0
    %1217 = vmatpush1.msra.mxu0 %v1180
    %1218 = vmatprep.subr.mxu0 0.0
    %1219 = vmatpush1.msra.mxu0 %v1181
    %1220 = vmatprep.subr.mxu0 0.0
    %1221 = vmatpush1.msra.mxu0 0.0
    %1222 = vmatprep.subr.mxu0 0.0
    %1223 = vmatpush1.msra.mxu0 0.0
    %1224 = vmatprep.subr.mxu0 0.0
    %1225 = vmatpush1.msra.mxu0 0.0
    %1226 = vmatprep.subr.mxu0 0.0
    %1227 = vmatpush1.msra.mxu0 0.0
    %1228 = vmatprep.subr.mxu0 0.0
    %1229 = vmatpush1.msra.mxu0 0.0
    %1230 = vmatprep.subr.mxu0 0.0
    %1231 = vmatpush1.msra.mxu0 0.0
    %1232 = vmatprep.subr.mxu0 0.0
    %1233 = vmatpush1.msra.mxu0 0.0
    %1234 = vmatprep.subr.mxu0 0.0
    %1235 = vmatpush1.msra.mxu0 0.0
    %1236 = vmatprep.subr.mxu0 0.0
    %1237 = vmatpush1.msra.mxu0 0.0
    %1238 = vmatprep.subr.mxu0 0.0
    %1239 = vmatpush1.msra.mxu0 0.0
    %1240 = vmatprep.subr.mxu0 0.0
    %1241 = vmatpush1.msra.mxu0 0.0
    %1242 = vmatprep.subr.mxu0 0.0
    %1243 = vmatpush1.msra.mxu0 0.0
    %1244 = vmatprep.subr.mxu0 0.0
    %1245 = vmatpush1.msra.mxu0 0.0
    %1246 = vmatprep.subr.mxu0 0.0
    %1247 = vmatpush1.msra.mxu0 0.0
    %1248 = vmatprep.subr.mxu0 0.0
    %1249 = vmatpush1.msra.mxu0 0.0
    %1250 = vmatprep.subr.mxu0 0.0
    %1251 = vmatpush1.msra.mxu0 0.0
    %1252 = vmatprep.mubr.f32.mxu0 0.0
    %1253 = vmatmul.mubr.f32.gmra.mrb[0].mxu0 %v1164
    %v1254 = vpop.f32.mrb[0].mxu0
    %v1255 = vadd.f32 %v1186, %v1254
    %v1256 = vpop.f32.mrb[0].mxu0
    %1257 = vdwg.mxu0
    %v1258 = vmax.f32 %v1255, 0.0
    %s1259 = scalar_lea.vmem [#allocation10], 512
    %v1260 = vld [vmem:[%s1259] sm:$0xff]
    %v1261 = vld [vmem:[%s1259 + $0x8] sm:$0xff]
    %v1262 = vld [vmem:[%s1259 + $0x10] sm:$0xff]
    %v1263 = vld [vmem:[%s1259 + $0x18] sm:$0xff]
    %v1264 = vld [vmem:[%s1259 + $0x20] sm:$0xff]
    %v1265 = vld [vmem:[%s1259 + $0x28] sm:$0xff]
    %v1266 = vld [vmem:[%s1259 + $0x30] sm:$0xff]
    %v1267 = vld [vmem:[%s1259 + $0x38] sm:$0xff]
    %v1268 = vld [vmem:[%s1259 + $0x40] sm:$0xff]
    %v1269 = vld [vmem:[%s1259 + $0x48] sm:$0xff]
    %v1270 = vld [vmem:[%s1259 + $0x50] sm:$0xff]
    %v1271 = vld [vmem:[%s1259 + $0x58] sm:$0xff]
    %v1272 = vld [vmem:[%s1259 + $0x60] sm:$0xff]
    %v1273 = vld [vmem:[%s1259 + $0x68] sm:$0xff]
    %v1274 = vld [vmem:[%s1259 + $0x70] sm:$0xff]
    %v1275 = vld [vmem:[%s1259 + $0x78] sm:$0xff]
    %v1276 = vld [vmem:[%s1259 + $0x80] sm:$0xff]
    %v1277 = vld [vmem:[%s1259 + $0x88] sm:$0xff]
    %v1278 = vld [vmem:[%s1259 + $0x90] sm:$0xff]
    %v1279 = vld [vmem:[%s1259 + $0x98] sm:$0xff]
    %v1280 = vld [vmem:[%s1259 + $0xa0] sm:$0xff]
    %v1281 = vld [vmem:[%s1259 + $0xa8] sm:$0xff]
    %v1282 = vld [vmem:[%s1259 + $0xb0] sm:$0xff]
    %v1283 = vld [vmem:[%s1259 + $0xb8] sm:$0xff]
    %v1284 = vld [vmem:[%s1259 + $0xc0] sm:$0xff]
    %v1285 = vld [vmem:[%s1259 + $0xc8] sm:$0xff]
    %v1286 = vld [vmem:[%s1259 + $0xd0] sm:$0xff]
    %v1287 = vld [vmem:[%s1259 + $0xd8] sm:$0xff]
    %v1288 = vld [vmem:[%s1259 + $0xe0] sm:$0xff]
    %v1289 = vld [vmem:[%s1259 + $0xe8] sm:$0xff]
    %v1290 = vld [vmem:[%s1259 + $0xf0] sm:$0xff]
    %v1291 = vld [vmem:[%s1259 + $0xf8] sm:$0xff]
    %v1293 = vlaneseq
    %v1294 = vshrl.u32 %v1293, 7
    %v1295 = vsub.s32 0, %v1294
    %v1296 = vrot.slane %v968, %v1295
    %v1297 = vlaneseq
    %v1298 = vshrl.u32 %v1297, 7
    %v1299 = vsub.s32 1, %v1298
    %v1300 = vrot.slane %v968, %v1299
    %1303 = vmatprep.subr.mxu0 %v1261
    %1304 = vmatpush1.msra.mxu0 %v1260
    %1305 = vmatprep.subr.mxu0 %v1263
    %1306 = vmatpush1.msra.mxu0 %v1262
    %1307 = vmatprep.subr.mxu0 %v1265
    %1308 = vmatpush1.msra.mxu0 %v1264
    %1309 = vmatprep.subr.mxu0 %v1267
    %1310 = vmatpush1.msra.mxu0 %v1266
    %1311 = vmatprep.subr.mxu0 %v1269
    %1312 = vmatpush1.msra.mxu0 %v1268
    %1313 = vmatprep.subr.mxu0 %v1271
    %1314 = vmatpush1.msra.mxu0 %v1270
    %1315 = vmatprep.subr.mxu0 %v1273
    %1316 = vmatpush1.msra.mxu0 %v1272
    %1317 = vmatprep.subr.mxu0 %v1275
    %1318 = vmatpush1.msra.mxu0 %v1274
    %1319 = vmatprep.subr.mxu0 %v1277
    %1320 = vmatpush1.msra.mxu0 %v1276
    %1321 = vmatprep.subr.mxu0 %v1279
    %1322 = vmatpush1.msra.mxu0 %v1278
    %1323 = vmatprep.subr.mxu0 %v1281
    %1324 = vmatpush1.msra.mxu0 %v1280
    %1325 = vmatprep.subr.mxu0 %v1283
    %1326 = vmatpush1.msra.mxu0 %v1282
    %1327 = vmatprep.subr.mxu0 %v1285
    %1328 = vmatpush1.msra.mxu0 %v1284
    %1329 = vmatprep.subr.mxu0 %v1287
    %1330 = vmatpush1.msra.mxu0 %v1286
    %1331 = vmatprep.subr.mxu0 %v1289
    %1332 = vmatpush1.msra.mxu0 %v1288
    %1333 = vmatprep.subr.mxu0 %v1291
    %1334 = vmatpush1.msra.mxu0 %v1290
    %1335 = vmatprep.subr.mxu0 0.0
    %1336 = vmatpush1.msra.mxu0 0.0
    %1337 = vmatprep.subr.mxu0 0.0
    %1338 = vmatpush1.msra.mxu0 0.0
    %1339 = vmatprep.subr.mxu0 0.0
    %1340 = vmatpush1.msra.mxu0 0.0
    %1341 = vmatprep.subr.mxu0 0.0
    %1342 = vmatpush1.msra.mxu0 0.0
    %1343 = vmatprep.subr.mxu0 0.0
    %1344 = vmatpush1.msra.mxu0 0.0
    %1345 = vmatprep.subr.mxu0 0.0
    %1346 = vmatpush1.msra.mxu0 0.0
    %1347 = vmatprep.subr.mxu0 0.0
    %1348 = vmatpush1.msra.mxu0 0.0
    %1349 = vmatprep.subr.mxu0 0.0
    %1350 = vmatpush1.msra.mxu0 0.0
    %1351 = vmatprep.subr.mxu0 0.0
    %1352 = vmatpush1.msra.mxu0 0.0
    %1353 = vmatprep.subr.mxu0 0.0
    %1354 = vmatpush1.msra.mxu0 0.0
    %1355 = vmatprep.subr.mxu0 0.0
    %1356 = vmatpush1.msra.mxu0 0.0
    %1357 = vmatprep.subr.mxu0 0.0
    %1358 = vmatpush1.msra.mxu0 0.0
    %1359 = vmatprep.subr.mxu0 0.0
    %1360 = vmatpush1.msra.mxu0 0.0
    %1361 = vmatprep.subr.mxu0 0.0
    %1362 = vmatpush1.msra.mxu0 0.0
    %1363 = vmatprep.subr.mxu0 0.0
    %1364 = vmatpush1.msra.mxu0 0.0
    %1365 = vmatprep.subr.mxu0 0.0
    %1366 = vmatpush1.msra.mxu0 0.0
    %1367 = vmatprep.mubr.f32.mxu0 0.0
    %1368 = vmatmul.mubr.f32.gmra.mrb[0].mxu0 %v1258
    %v1369 = vpop.f32.mrb[0].mxu0
    %v1370 = vadd.f32 %v1296, %v1369
    %v1371 = vpop.f32.mrb[0].mxu0
    %v1372 = vadd.f32 %v1300, %v1371
    %1373 = vdwg.mxu0
    %vm1374 = vcmp.gt.f32.partialorder %v1372, 20.0
    %v1375 = vmin.f32 %v1372, 20.0
    %v1376 = vmul.f32 %v1375, 1.442695
    %v1377 = vpow.pop %v1376
    %v1378 = vadd.f32 %v1377, 1.0
    %v1379 = vlog2.pop %v1378
    %v1380 = vmul.f32 %v1379, 0.6931472
    %v1381 = vmul.f32 -0.5, %v1377
    %v1382 = vadd.f32 %v1381, 1.0
    %v1383 = vmul.f32 %v1382, %v1377
    %v1384 = vand.u32 2147483647, %v1377
    %vm1385 = vcmp.lt.f32.partialorder %v1384, 0.0004427343
    %v1386 = vsel %vm1385, %v1383, %v1380
    %v1387 = vsel %vm1374, %v1372, %v1386
    %s1388 = scalar_lea.vmem [#allocation5], 16
    %v1389 = vld [vmem:[%s1388] sm:$0xff]
    %v1390 = vmul.f32 %v1387, %v1389
    %v1391 = vadd.f32 %v1370, %v1390
    %s1392 = scalar_lea.vmem [#allocation13], 16
    %1393 = vst [vmem:[%s1392] sm:$0xff] %v1391
    %s1394 = scalar_lea.vmem [#allocation13], 56
    %1395 = vst [vmem:[%s1394] sm:$0xff] %v1370
    %s1396 = scalar_lea.vmem [#allocation13], 96
    %1397 = vst [vmem:[%s1396] sm:$0xff] %v1387
    %s1398 = scalar_lea.vmem [#allocation11], 12
    %v1399 = vld [vmem:[%s1398] sm:$0x1]
    %v1400 = vld [vmem:[%s1398 + $0x1] sm:$0x1]
    %v1401 = vld [vmem:[%s1398 + $0x2] sm:$0x3]
    %s1402 = scalar_lea.vmem [#allocation7], 1152
    %v1403 = vld [vmem:[%s1402] sm:$0xff]
    %v1404 = vld [vmem:[%s1402 + $0x8] sm:$0xff]
    %v1405 = vld [vmem:[%s1402 + $0x10] sm:$0xff]
    %v1406 = vld [vmem:[%s1402 + $0x18] sm:$0xff]
    %v1407 = vld [vmem:[%s1402 + $0x20] sm:$0xff]
    %v1408 = vld [vmem:[%s1402 + $0x28] sm:$0xff]
    %v1409 = vld [vmem:[%s1402 + $0x30] sm:$0xff]
    %v1410 = vld [vmem:[%s1402 + $0x38] sm:$0xff]
    %v1411 = vld [vmem:[%s1402 + $0x40] sm:$0xff]
    %v1412 = vld [vmem:[%s1402 + $0x48] sm:$0xff]
    %v1413 = vld [vmem:[%s1402 + $0x50] sm:$0xff]
    %v1414 = vld [vmem:[%s1402 + $0x58] sm:$0xff]
    %v1415 = vld [vmem:[%s1402 + $0x60] sm:$0xff]
    %v1416 = vld [vmem:[%s1402 + $0x68] sm:$0xff]
    %v1417 = vld [vmem:[%s1402 + $0x70] sm:$0xff]
    %v1418 = vld [vmem:[%s1402 + $0x78] sm:$0xff]
    %v1419 = vld [vmem:[%s1402 + $0x80] sm:$0xff]
    %v1420 = vld [vmem:[%s1402 + $0x88] sm:$0xff]
    %v1421 = vld [vmem:[%s1402 + $0x90] sm:$0xff]
    %v1422 = vld [vmem:[%s1402 + $0x98] sm:$0xff]
    %v1423 = vld [vmem:[%s1402 + $0xa0] sm:$0xff]
    %v1424 = vld [vmem:[%s1402 + $0xa8] sm:$0xff]
    %v1425 = vld [vmem:[%s1402 + $0xb0] sm:$0xff]
    %v1426 = vld [vmem:[%s1402 + $0xb8] sm:$0xff]
    %v1427 = vld [vmem:[%s1402 + $0xc0] sm:$0xff]
    %v1428 = vld [vmem:[%s1402 + $0xc8] sm:$0xff]
    %v1429 = vld [vmem:[%s1402 + $0xd0] sm:$0xff]
    %v1430 = vld [vmem:[%s1402 + $0xd8] sm:$0xff]
    %v1431 = vld [vmem:[%s1402 + $0xe0] sm:$0xff]
    %v1432 = vld [vmem:[%s1402 + $0xe8] sm:$0xff]
    %v1433 = vld [vmem:[%s1402 + $0xf0] sm:$0xff]
    %v1434 = vld [vmem:[%s1402 + $0xf8] sm:$0xff]
    %v1435 = vld [vmem:[%s1402 + $0x100] sm:$0xff]
    %v1436 = vld [vmem:[%s1402 + $0x108] sm:$0xff]
    %v1437 = vld [vmem:[%s1402 + $0x110] sm:$0xff]
    %v1438 = vld [vmem:[%s1402 + $0x118] sm:$0xff]
    %v1439 = vld [vmem:[%s1402 + $0x120] sm:$0xff]
    %v1440 = vld [vmem:[%s1402 + $0x128] sm:$0xff]
    %v1441 = vld [vmem:[%s1402 + $0x130] sm:$0xff]
    %v1442 = vld [vmem:[%s1402 + $0x138] sm:$0xff]
    %v1443 = vld [vmem:[%s1402 + $0x140] sm:$0xff]
    %v1444 = vld [vmem:[%s1402 + $0x148] sm:$0xff]
    %v1445 = vld [vmem:[%s1402 + $0x150] sm:$0xff]
    %v1446 = vld [vmem:[%s1402 + $0x158] sm:$0xff]
    %v1447 = vld [vmem:[%s1402 + $0x160] sm:$0xff]
    %v1448 = vld [vmem:[%s1402 + $0x168] sm:$0xff]
    %v1449 = vld [vmem:[%s1402 + $0x170] sm:$0xff]
    %v1450 = vld [vmem:[%s1402 + $0x178] sm:$0xff]
    %v1452 = vlaneseq
    %v1453 = vshrl.u32 %v1452, 7
    %v1454 = vsub.s32 0, %v1453
    %v1455 = vrot.slane %v1399, %v1454
    %1457 = vmatprep.subr.mxu0 0.0
    %1458 = vmatpush1.msra.mxu0 %v1403
    %1459 = vmatprep.subr.mxu0 0.0
    %1460 = vmatpush1.msra.mxu0 %v1404
    %1461 = vmatprep.subr.mxu0 0.0
    %1462 = vmatpush1.msra.mxu0 %v1405
    %1463 = vmatprep.subr.mxu0 0.0
    %1464 = vmatpush1.msra.mxu0 %v1406
    %1465 = vmatprep.subr.mxu0 0.0
    %1466 = vmatpush1.msra.mxu0 %v1407
    %1467 = vmatprep.subr.mxu0 0.0
    %1468 = vmatpush1.msra.mxu0 %v1408
    %1469 = vmatprep.subr.mxu0 0.0
    %1470 = vmatpush1.msra.mxu0 %v1409
    %1471 = vmatprep.subr.mxu0 0.0
    %1472 = vmatpush1.msra.mxu0 %v1410
    %1473 = vmatprep.subr.mxu0 0.0
    %1474 = vmatpush1.msra.mxu0 %v1411
    %1475 = vmatprep.subr.mxu0 0.0
    %1476 = vmatpush1.msra.mxu0 %v1412
    %1477 = vmatprep.subr.mxu0 0.0
    %1478 = vmatpush1.msra.mxu0 %v1413
    %1479 = vmatprep.subr.mxu0 0.0
    %1480 = vmatpush1.msra.mxu0 %v1414
    %1481 = vmatprep.subr.mxu0 0.0
    %1482 = vmatpush1.msra.mxu0 %v1415
    %1483 = vmatprep.subr.mxu0 0.0
    %1484 = vmatpush1.msra.mxu0 %v1416
    %1485 = vmatprep.subr.mxu0 0.0
    %1486 = vmatpush1.msra.mxu0 %v1417
    %1487 = vmatprep.subr.mxu0 0.0
    %1488 = vmatpush1.msra.mxu0 %v1418
    %1489 = vmatprep.subr.mxu0 0.0
    %1490 = vmatpush1.msra.mxu0 %v1419
    %1491 = vmatprep.subr.mxu0 0.0
    %1492 = vmatpush1.msra.mxu0 %v1420
    %1493 = vmatprep.subr.mxu0 0.0
    %1494 = vmatpush1.msra.mxu0 %v1421
    %1495 = vmatprep.subr.mxu0 0.0
    %1496 = vmatpush1.msra.mxu0 %v1422
    %1497 = vmatprep.subr.mxu0 0.0
    %1498 = vmatpush1.msra.mxu0 %v1423
    %1499 = vmatprep.subr.mxu0 0.0
    %1500 = vmatpush1.msra.mxu0 %v1424
    %1501 = vmatprep.subr.mxu0 0.0
    %1502 = vmatpush1.msra.mxu0 %v1425
    %1503 = vmatprep.subr.mxu0 0.0
    %1504 = vmatpush1.msra.mxu0 %v1426
    %1505 = vmatprep.subr.mxu0 0.0
    %1506 = vmatpush1.msra.mxu0 %v1427
    %1507 = vmatprep.subr.mxu0 0.0
    %1508 = vmatpush1.msra.mxu0 %v1428
    %1509 = vmatprep.subr.mxu0 0.0
    %1510 = vmatpush1.msra.mxu0 %v1429
    %1511 = vmatprep.subr.mxu0 0.0
    %1512 = vmatpush1.msra.mxu0 %v1430
    %1513 = vmatprep.subr.mxu0 0.0
    %1514 = vmatpush1.msra.mxu0 %v1431
    %1515 = vmatprep.subr.mxu0 0.0
    %1516 = vmatpush1.msra.mxu0 %v1432
    %1517 = vmatprep.subr.mxu0 0.0
    %1518 = vmatpush1.msra.mxu0 %v1433
    %1519 = vmatprep.subr.mxu0 0.0
    %1520 = vmatpush1.msra.mxu0 %v1434
    %1521 = vmatprep.mubr.f32.mxu0 %v1258
    %1522 = vmatmul.mubr.f32.gmra.mrb[0].mxu0 %v104
    %v1523 = vpop.f32.mrb[0].mxu0
    %v1524 = vadd.f32 %v1455, %v1523
    %v1525 = vpop.f32.mrb[0].mxu0
    %1526 = vdwg.mxu0
    %1527 = vmatprep.subr.mxu0 0.0
    %1528 = vmatpush1.msra.mxu0 %v1435
    %1529 = vmatprep.subr.mxu0 0.0
    %1530 = vmatpush1.msra.mxu0 %v1436
    %1531 = vmatprep.subr.mxu0 0.0
    %1532 = vmatpush1.msra.mxu0 %v1437
    %1533 = vmatprep.subr.mxu0 0.0
    %1534 = vmatpush1.msra.mxu0 %v1438
    %1535 = vmatprep.subr.mxu0 0.0
    %1536 = vmatpush1.msra.mxu0 %v1439
    %1537 = vmatprep.subr.mxu0 0.0
    %1538 = vmatpush1.msra.mxu0 %v1440
    %1539 = vmatprep.subr.mxu0 0.0
    %1540 = vmatpush1.msra.mxu0 %v1441
    %1541 = vmatprep.subr.mxu0 0.0
    %1542 = vmatpush1.msra.mxu0 %v1442
    %1543 = vmatprep.subr.mxu0 0.0
    %1544 = vmatpush1.msra.mxu0 %v1443
    %1545 = vmatprep.subr.mxu0 0.0
    %1546 = vmatpush1.msra.mxu0 %v1444
    %1547 = vmatprep.subr.mxu0 0.0
    %1548 = vmatpush1.msra.mxu0 %v1445
    %1549 = vmatprep.subr.mxu0 0.0
    %1550 = vmatpush1.msra.mxu0 %v1446
    %1551 = vmatprep.subr.mxu0 0.0
    %1552 = vmatpush1.msra.mxu0 %v1447
    %1553 = vmatprep.subr.mxu0 0.0
    %1554 = vmatpush1.msra.mxu0 %v1448
    %1555 = vmatprep.subr.mxu0 0.0
    %1556 = vmatpush1.msra.mxu0 %v1449
    %1557 = vmatprep.subr.mxu0 0.0
    %1558 = vmatpush1.msra.mxu0 %v1450
    %1559 = vmatprep.subr.mxu0 0.0
    %1560 = vmatpush1.msra.mxu0 0.0
    %1561 = vmatprep.subr.mxu0 0.0
    %1562 = vmatpush1.msra.mxu0 0.0
    %1563 = vmatprep.subr.mxu0 0.0
    %1564 = vmatpush1.msra.mxu0 0.0
    %1565 = vmatprep.subr.mxu0 0.0
    %1566 = vmatpush1.msra.mxu0 0.0
    %1567 = vmatprep.subr.mxu0 0.0
    %1568 = vmatpush1.msra.mxu0 0.0
    %1569 = vmatprep.subr.mxu0 0.0
    %1570 = vmatpush1.msra.mxu0 0.0
    %1571 = vmatprep.subr.mxu0 0.0
    %1572 = vmatpush1.msra.mxu0 0.0
    %1573 = vmatprep.subr.mxu0 0.0
    %1574 = vmatpush1.msra.mxu0 0.0
    %1575 = vmatprep.subr.mxu0 0.0
    %1576 = vmatpush1.msra.mxu0 0.0
    %1577 = vmatprep.subr.mxu0 0.0
    %1578 = vmatpush1.msra.mxu0 0.0
    %1579 = vmatprep.subr.mxu0 0.0
    %1580 = vmatpush1.msra.mxu0 0.0
    %1581 = vmatprep.subr.mxu0 0.0
    %1582 = vmatpush1.msra.mxu0 0.0
    %1583 = vmatprep.subr.mxu0 0.0
    %1584 = vmatpush1.msra.mxu0 0.0
    %1585 = vmatprep.subr.mxu0 0.0
    %1586 = vmatpush1.msra.mxu0 0.0
    %1587 = vmatprep.subr.mxu0 0.0
    %1588 = vmatpush1.msra.mxu0 0.0
    %1589 = vmatprep.subr.mxu0 0.0
    %1590 = vmatpush1.msra.mxu0 0.0
    %1591 = vmatprep.mubr.f32.mxu0 0.0
    %1592 = vmatmul.mubr.f32.gmra.mrb[0].mxu0 %v1391
    %v1593 = vpop.f32.mrb[0].mxu0
    %v1594 = vadd.f32 %v1524, %v1593
    %v1595 = vpop.f32.mrb[0].mxu0
    %1596 = vdwg.mxu0
    %v1597 = vmax.f32 %v1594, 0.0
    %s1598 = scalar_lea.vmem [#allocation8], 384
    %v1599 = vld [vmem:[%s1598] sm:$0xff]
    %v1600 = vld [vmem:[%s1598 + $0x8] sm:$0xff]
    %v1601 = vld [vmem:[%s1598 + $0x10] sm:$0xff]
    %v1602 = vld [vmem:[%s1598 + $0x18] sm:$0xff]
    %v1603 = vld [vmem:[%s1598 + $0x20] sm:$0xff]
    %v1604 = vld [vmem:[%s1598 + $0x28] sm:$0xff]
    %v1605 = vld [vmem:[%s1598 + $0x30] sm:$0xff]
    %v1606 = vld [vmem:[%s1598 + $0x38] sm:$0xff]
    %v1607 = vld [vmem:[%s1598 + $0x40] sm:$0xff]
    %v1608 = vld [vmem:[%s1598 + $0x48] sm:$0xff]
    %v1609 = vld [vmem:[%s1598 + $0x50] sm:$0xff]
    %v1610 = vld [vmem:[%s1598 + $0x58] sm:$0xff]
    %v1611 = vld [vmem:[%s1598 + $0x60] sm:$0xff]
    %v1612 = vld [vmem:[%s1598 + $0x68] sm:$0xff]
    %v1613 = vld [vmem:[%s1598 + $0x70] sm:$0xff]
    %v1614 = vld [vmem:[%s1598 + $0x78] sm:$0xff]
    %v1616 = vlaneseq
    %v1617 = vshrl.u32 %v1616, 7
    %v1618 = vsub.s32 0, %v1617
    %v1619 = vrot.slane %v1400, %v1618
    %1621 = vmatprep.subr.mxu0 0.0
    %1622 = vmatpush1.msra.mxu0 %v1599
    %1623 = vmatprep.subr.mxu0 0.0
    %1624 = vmatpush1.msra.mxu0 %v1600
    %1625 = vmatprep.subr.mxu0 0.0
    %1626 = vmatpush1.msra.mxu0 %v1601
    %1627 = vmatprep.subr.mxu0 0.0
    %1628 = vmatpush1.msra.mxu0 %v1602
    %1629 = vmatprep.subr.mxu0 0.0
    %1630 = vmatpush1.msra.mxu0 %v1603
    %1631 = vmatprep.subr.mxu0 0.0
    %1632 = vmatpush1.msra.mxu0 %v1604
    %1633 = vmatprep.subr.mxu0 0.0
    %1634 = vmatpush1.msra.mxu0 %v1605
    %1635 = vmatprep.subr.mxu0 0.0
    %1636 = vmatpush1.msra.mxu0 %v1606
    %1637 = vmatprep.subr.mxu0 0.0
    %1638 = vmatpush1.msra.mxu0 %v1607
    %1639 = vmatprep.subr.mxu0 0.0
    %1640 = vmatpush1.msra.mxu0 %v1608
    %1641 = vmatprep.subr.mxu0 0.0
    %1642 = vmatpush1.msra.mxu0 %v1609
    %1643 = vmatprep.subr.mxu0 0.0
    %1644 = vmatpush1.msra.mxu0 %v1610
    %1645 = vmatprep.subr.mxu0 0.0
    %1646 = vmatpush1.msra.mxu0 %v1611
    %1647 = vmatprep.subr.mxu0 0.0
    %1648 = vmatpush1.msra.mxu0 %v1612
    %1649 = vmatprep.subr.mxu0 0.0
    %1650 = vmatpush1.msra.mxu0 %v1613
    %1651 = vmatprep.subr.mxu0 0.0
    %1652 = vmatpush1.msra.mxu0 %v1614
    %1653 = vmatprep.subr.mxu0 0.0
    %1654 = vmatpush1.msra.mxu0 0.0
    %1655 = vmatprep.subr.mxu0 0.0
    %1656 = vmatpush1.msra.mxu0 0.0
    %1657 = vmatprep.subr.mxu0 0.0
    %1658 = vmatpush1.msra.mxu0 0.0
    %1659 = vmatprep.subr.mxu0 0.0
    %1660 = vmatpush1.msra.mxu0 0.0
    %1661 = vmatprep.subr.mxu0 0.0
    %1662 = vmatpush1.msra.mxu0 0.0
    %1663 = vmatprep.subr.mxu0 0.0
    %1664 = vmatpush1.msra.mxu0 0.0
    %1665 = vmatprep.subr.mxu0 0.0
    %1666 = vmatpush1.msra.mxu0 0.0
    %1667 = vmatprep.subr.mxu0 0.0
    %1668 = vmatpush1.msra.mxu0 0.0
    %1669 = vmatprep.subr.mxu0 0.0
    %1670 = vmatpush1.msra.mxu0 0.0
    %1671 = vmatprep.subr.mxu0 0.0
    %1672 = vmatpush1.msra.mxu0 0.0
    %1673 = vmatprep.subr.mxu0 0.0
    %1674 = vmatpush1.msra.mxu0 0.0
    %1675 = vmatprep.subr.mxu0 0.0
    %1676 = vmatpush1.msra.mxu0 0.0
    %1677 = vmatprep.subr.mxu0 0.0
    %1678 = vmatpush1.msra.mxu0 0.0
    %1679 = vmatprep.subr.mxu0 0.0
    %1680 = vmatpush1.msra.mxu0 0.0
    %1681 = vmatprep.subr.mxu0 0.0
    %1682 = vmatpush1.msra.mxu0 0.0
    %1683 = vmatprep.subr.mxu0 0.0
    %1684 = vmatpush1.msra.mxu0 0.0
    %1685 = vmatprep.mubr.f32.mxu0 0.0
    %1686 = vmatmul.mubr.f32.gmra.mrb[0].mxu0 %v1597
    %v1687 = vpop.f32.mrb[0].mxu0
    %v1688 = vadd.f32 %v1619, %v1687
    %v1689 = vpop.f32.mrb[0].mxu0
    %1690 = vdwg.mxu0
    %v1691 = vmax.f32 %v1688, 0.0
    %s1692 = scalar_lea.vmem [#allocation10], 768
    %v1693 = vld [vmem:[%s1692] sm:$0xff]
    %v1694 = vld [vmem:[%s1692 + $0x8] sm:$0xff]
    %v1695 = vld [vmem:[%s1692 + $0x10] sm:$0xff]
    %v1696 = vld [vmem:[%s1692 + $0x18] sm:$0xff]
    %v1697 = vld [vmem:[%s1692 + $0x20] sm:$0xff]
    %v1698 = vld [vmem:[%s1692 + $0x28] sm:$0xff]
    %v1699 = vld [vmem:[%s1692 + $0x30] sm:$0xff]
    %v1700 = vld [vmem:[%s1692 + $0x38] sm:$0xff]
    %v1701 = vld [vmem:[%s1692 + $0x40] sm:$0xff]
    %v1702 = vld [vmem:[%s1692 + $0x48] sm:$0xff]
    %v1703 = vld [vmem:[%s1692 + $0x50] sm:$0xff]
    %v1704 = vld [vmem:[%s1692 + $0x58] sm:$0xff]
    %v1705 = vld [vmem:[%s1692 + $0x60] sm:$0xff]
    %v1706 = vld [vmem:[%s1692 + $0x68] sm:$0xff]
    %v1707 = vld [vmem:[%s1692 + $0x70] sm:$0xff]
    %v1708 = vld [vmem:[%s1692 + $0x78] sm:$0xff]
    %v1709 = vld [vmem:[%s1692 + $0x80] sm:$0xff]
    %v1710 = vld [vmem:[%s1692 + $0x88] sm:$0xff]
    %v1711 = vld [vmem:[%s1692 + $0x90] sm:$0xff]
    %v1712 = vld [vmem:[%s1692 + $0x98] sm:$0xff]
    %v1713 = vld [vmem:[%s1692 + $0xa0] sm:$0xff]
    %v1714 = vld [vmem:[%s1692 + $0xa8] sm:$0xff]
    %v1715 = vld [vmem:[%s1692 + $0xb0] sm:$0xff]
    %v1716 = vld [vmem:[%s1692 + $0xb8] sm:$0xff]
    %v1717 = vld [vmem:[%s1692 + $0xc0] sm:$0xff]
    %v1718 = vld [vmem:[%s1692 + $0xc8] sm:$0xff]
    %v1719 = vld [vmem:[%s1692 + $0xd0] sm:$0xff]
    %v1720 = vld [vmem:[%s1692 + $0xd8] sm:$0xff]
    %v1721 = vld [vmem:[%s1692 + $0xe0] sm:$0xff]
    %v1722 = vld [vmem:[%s1692 + $0xe8] sm:$0xff]
    %v1723 = vld [vmem:[%s1692 + $0xf0] sm:$0xff]
    %v1724 = vld [vmem:[%s1692 + $0xf8] sm:$0xff]
    %v1726 = vlaneseq
    %v1727 = vshrl.u32 %v1726, 7
    %v1728 = vsub.s32 0, %v1727
    %v1729 = vrot.slane %v1401, %v1728
    %v1730 = vlaneseq
    %v1731 = vshrl.u32 %v1730, 7
    %v1732 = vsub.s32 1, %v1731
    %v1733 = vrot.slane %v1401, %v1732
    %1736 = vmatprep.subr.mxu0 %v1694
    %1737 = vmatpush1.msra.mxu0 %v1693
    %1738 = vmatprep.subr.mxu0 %v1696
    %1739 = vmatpush1.msra.mxu0 %v1695
    %1740 = vmatprep.subr.mxu0 %v1698
    %1741 = vmatpush1.msra.mxu0 %v1697
    %1742 = vmatprep.subr.mxu0 %v1700
    %1743 = vmatpush1.msra.mxu0 %v1699
    %1744 = vmatprep.subr.mxu0 %v1702
    %1745 = vmatpush1.msra.mxu0 %v1701
    %1746 = vmatprep.subr.mxu0 %v1704
    %1747 = vmatpush1.msra.mxu0 %v1703
    %1748 = vmatprep.subr.mxu0 %v1706
    %1749 = vmatpush1.msra.mxu0 %v1705
    %1750 = vmatprep.subr.mxu0 %v1708
    %1751 = vmatpush1.msra.mxu0 %v1707
    %1752 = vmatprep.subr.mxu0 %v1710
    %1753 = vmatpush1.msra.mxu0 %v1709
    %1754 = vmatprep.subr.mxu0 %v1712
    %1755 = vmatpush1.msra.mxu0 %v1711
    %1756 = vmatprep.subr.mxu0 %v1714
    %1757 = vmatpush1.msra.mxu0 %v1713
    %1758 = vmatprep.subr.mxu0 %v1716
    %1759 = vmatpush1.msra.mxu0 %v1715
    %1760 = vmatprep.subr.mxu0 %v1718
    %1761 = vmatpush1.msra.mxu0 %v1717
    %1762 = vmatprep.subr.mxu0 %v1720
    %1763 = vmatpush1.msra.mxu0 %v1719
    %1764 = vmatprep.subr.mxu0 %v1722
    %1765 = vmatpush1.msra.mxu0 %v1721
    %1766 = vmatprep.subr.mxu0 %v1724
    %1767 = vmatpush1.msra.mxu0 %v1723
    %1768 = vmatprep.subr.mxu0 0.0
    %1769 = vmatpush1.msra.mxu0 0.0
    %1770 = vmatprep.subr.mxu0 0.0
    %1771 = vmatpush1.msra.mxu0 0.0
    %1772 = vmatprep.subr.mxu0 0.0
    %1773 = vmatpush1.msra.mxu0 0.0
    %1774 = vmatprep.subr.mxu0 0.0
    %1775 = vmatpush1.msra.mxu0 0.0
    %1776 = vmatprep.subr.mxu0 0.0
    %1777 = vmatpush1.msra.mxu0 0.0
    %1778 = vmatprep.subr.mxu0 0.0
    %1779 = vmatpush1.msra.mxu0 0.0
    %1780 = vmatprep.subr.mxu0 0.0
    %1781 = vmatpush1.msra.mxu0 0.0
    %1782 = vmatprep.subr.mxu0 0.0
    %1783 = vmatpush1.msra.mxu0 0.0
    %1784 = vmatprep.subr.mxu0 0.0
    %1785 = vmatpush1.msra.mxu0 0.0
    %1786 = vmatprep.subr.mxu0 0.0
    %1787 = vmatpush1.msra.mxu0 0.0
    %1788 = vmatprep.subr.mxu0 0.0
    %1789 = vmatpush1.msra.mxu0 0.0
    %1790 = vmatprep.subr.mxu0 0.0
    %1791 = vmatpush1.msra.mxu0 0.0
    %1792 = vmatprep.subr.mxu0 0.0
    %1793 = vmatpush1.msra.mxu0 0.0
    %1794 = vmatprep.subr.mxu0 0.0
    %1795 = vmatpush1.msra.mxu0 0.0
    %1796 = vmatprep.subr.mxu0 0.0
    %1797 = vmatpush1.msra.mxu0 0.0
    %1798 = vmatprep.subr.mxu0 0.0
    %1799 = vmatpush1.msra.mxu0 0.0
    %1800 = vmatprep.mubr.f32.mxu0 0.0
    %1801 = vmatmul.mubr.f32.gmra.mrb[0].mxu0 %v1691
    %v1802 = vpop.f32.mrb[0].mxu0
    %v1803 = vadd.f32 %v1729, %v1802
    %v1804 = vpop.f32.mrb[0].mxu0
    %v1805 = vadd.f32 %v1733, %v1804
    %1806 = vdwg.mxu0
    %vm1807 = vcmp.gt.f32.partialorder %v1805, 20.0
    %v1808 = vmin.f32 %v1805, 20.0
    %v1809 = vmul.f32 %v1808, 1.442695
    %v1810 = vpow.pop %v1809
    %v1811 = vadd.f32 %v1810, 1.0
    %v1812 = vlog2.pop %v1811
    %v1813 = vmul.f32 %v1812, 0.6931472
    %v1814 = vmul.f32 -0.5, %v1810
    %v1815 = vadd.f32 %v1814, 1.0
    %v1816 = vmul.f32 %v1815, %v1810
    %v1817 = vand.u32 2147483647, %v1810
    %vm1818 = vcmp.lt.f32.partialorder %v1817, 0.0004427343
    %v1819 = vsel %vm1818, %v1816, %v1813
    %v1820 = vsel %vm1807, %v1805, %v1819
    %s1821 = scalar_lea.vmem [#allocation5], 24
    %v1822 = vld [vmem:[%s1821] sm:$0xff]
    %v1823 = vmul.f32 %v1820, %v1822
    %v1824 = vadd.f32 %v1803, %v1823
    %s1825 = scalar_lea.vmem [#allocation13], 24
    %1826 = vst [vmem:[%s1825] sm:$0xff] %v1824
    %s1827 = scalar_lea.vmem [#allocation13], 64
    %1828 = vst [vmem:[%s1827] sm:$0xff] %v1803
    %s1829 = scalar_lea.vmem [#allocation13], 104
    %1830 = vst [vmem:[%s1829] sm:$0xff] %v1820
    %s1831 = scalar_lea.vmem [#allocation11], 16
    %v1832 = vld [vmem:[%s1831] sm:$0x1]
    %v1833 = vld [vmem:[%s1831 + $0x1] sm:$0x1]
    %v1834 = vld [vmem:[%s1831 + $0x2] sm:$0x3]
    %s1835 = scalar_lea.vmem [#allocation7], 1536
    %v1836 = vld [vmem:[%s1835] sm:$0xff]
    %v1837 = vld [vmem:[%s1835 + $0x8] sm:$0xff]
    %v1838 = vld [vmem:[%s1835 + $0x10] sm:$0xff]
    %v1839 = vld [vmem:[%s1835 + $0x18] sm:$0xff]
    %v1840 = vld [vmem:[%s1835 + $0x20] sm:$0xff]
    %v1841 = vld [vmem:[%s1835 + $0x28] sm:$0xff]
    %v1842 = vld [vmem:[%s1835 + $0x30] sm:$0xff]
    %v1843 = vld [vmem:[%s1835 + $0x38] sm:$0xff]
    %v1844 = vld [vmem:[%s1835 + $0x40] sm:$0xff]
    %v1845 = vld [vmem:[%s1835 + $0x48] sm:$0xff]
    %v1846 = vld [vmem:[%s1835 + $0x50] sm:$0xff]
    %v1847 = vld [vmem:[%s1835 + $0x58] sm:$0xff]
    %v1848 = vld [vmem:[%s1835 + $0x60] sm:$0xff]
    %v1849 = vld [vmem:[%s1835 + $0x68] sm:$0xff]
    %v1850 = vld [vmem:[%s1835 + $0x70] sm:$0xff]
    %v1851 = vld [vmem:[%s1835 + $0x78] sm:$0xff]
    %v1852 = vld [vmem:[%s1835 + $0x80] sm:$0xff]
    %v1853 = vld [vmem:[%s1835 + $0x88] sm:$0xff]
    %v1854 = vld [vmem:[%s1835 + $0x90] sm:$0xff]
    %v1855 = vld [vmem:[%s1835 + $0x98] sm:$0xff]
    %v1856 = vld [vmem:[%s1835 + $0xa0] sm:$0xff]
    %v1857 = vld [vmem:[%s1835 + $0xa8] sm:$0xff]
    %v1858 = vld [vmem:[%s1835 + $0xb0] sm:$0xff]
    %v1859 = vld [vmem:[%s1835 + $0xb8] sm:$0xff]
    %v1860 = vld [vmem:[%s1835 + $0xc0] sm:$0xff]
    %v1861 = vld [vmem:[%s1835 + $0xc8] sm:$0xff]
    %v1862 = vld [vmem:[%s1835 + $0xd0] sm:$0xff]
    %v1863 = vld [vmem:[%s1835 + $0xd8] sm:$0xff]
    %v1864 = vld [vmem:[%s1835 + $0xe0] sm:$0xff]
    %v1865 = vld [vmem:[%s1835 + $0xe8] sm:$0xff]
    %v1866 = vld [vmem:[%s1835 + $0xf0] sm:$0xff]
    %v1867 = vld [vmem:[%s1835 + $0xf8] sm:$0xff]
    %v1868 = vld [vmem:[%s1835 + $0x100] sm:$0xff]
    %v1869 = vld [vmem:[%s1835 + $0x108] sm:$0xff]
    %v1870 = vld [vmem:[%s1835 + $0x110] sm:$0xff]
    %v1871 = vld [vmem:[%s1835 + $0x118] sm:$0xff]
    %v1872 = vld [vmem:[%s1835 + $0x120] sm:$0xff]
    %v1873 = vld [vmem:[%s1835 + $0x128] sm:$0xff]
    %v1874 = vld [vmem:[%s1835 + $0x130] sm:$0xff]
    %v1875 = vld [vmem:[%s1835 + $0x138] sm:$0xff]
    %v1876 = vld [vmem:[%s1835 + $0x140] sm:$0xff]
    %v1877 = vld [vmem:[%s1835 + $0x148] sm:$0xff]
    %v1878 = vld [vmem:[%s1835 + $0x150] sm:$0xff]
    %v1879 = vld [vmem:[%s1835 + $0x158] sm:$0xff]
    %v1880 = vld [vmem:[%s1835 + $0x160] sm:$0xff]
    %v1881 = vld [vmem:[%s1835 + $0x168] sm:$0xff]
    %v1882 = vld [vmem:[%s1835 + $0x170] sm:$0xff]
    %v1883 = vld [vmem:[%s1835 + $0x178] sm:$0xff]
    %v1885 = vlaneseq
    %v1886 = vshrl.u32 %v1885, 7
    %v1887 = vsub.s32 0, %v1886
    %v1888 = vrot.slane %v1832, %v1887
    %1890 = vmatprep.subr.mxu0 0.0
    %1891 = vmatpush1.msra.mxu0 %v1836
    %1892 = vmatprep.subr.mxu0 0.0
    %1893 = vmatpush1.msra.mxu0 %v1837
    %1894 = vmatprep.subr.mxu0 0.0
    %1895 = vmatpush1.msra.mxu0 %v1838
    %1896 = vmatprep.subr.mxu0 0.0
    %1897 = vmatpush1.msra.mxu0 %v1839
    %1898 = vmatprep.subr.mxu0 0.0
    %1899 = vmatpush1.msra.mxu0 %v1840
    %1900 = vmatprep.subr.mxu0 0.0
    %1901 = vmatpush1.msra.mxu0 %v1841
    %1902 = vmatprep.subr.mxu0 0.0
    %1903 = vmatpush1.msra.mxu0 %v1842
    %1904 = vmatprep.subr.mxu0 0.0
    %1905 = vmatpush1.msra.mxu0 %v1843
    %1906 = vmatprep.subr.mxu0 0.0
    %1907 = vmatpush1.msra.mxu0 %v1844
    %1908 = vmatprep.subr.mxu0 0.0
    %1909 = vmatpush1.msra.mxu0 %v1845
    %1910 = vmatprep.subr.mxu0 0.0
    %1911 = vmatpush1.msra.mxu0 %v1846
    %1912 = vmatprep.subr.mxu0 0.0
    %1913 = vmatpush1.msra.mxu0 %v1847
    %1914 = vmatprep.subr.mxu0 0.0
    %1915 = vmatpush1.msra.mxu0 %v1848
    %1916 = vmatprep.subr.mxu0 0.0
    %1917 = vmatpush1.msra.mxu0 %v1849
    %1918 = vmatprep.subr.mxu0 0.0
    %1919 = vmatpush1.msra.mxu0 %v1850
    %1920 = vmatprep.subr.mxu0 0.0
    %1921 = vmatpush1.msra.mxu0 %v1851
    %1922 = vmatprep.subr.mxu0 0.0
    %1923 = vmatpush1.msra.mxu0 %v1852
    %1924 = vmatprep.subr.mxu0 0.0
    %1925 = vmatpush1.msra.mxu0 %v1853
    %1926 = vmatprep.subr.mxu0 0.0
    %1927 = vmatpush1.msra.mxu0 %v1854
    %1928 = vmatprep.subr.mxu0 0.0
    %1929 = vmatpush1.msra.mxu0 %v1855
    %1930 = vmatprep.subr.mxu0 0.0
    %1931 = vmatpush1.msra.mxu0 %v1856
    %1932 = vmatprep.subr.mxu0 0.0
    %1933 = vmatpush1.msra.mxu0 %v1857
    %1934 = vmatprep.subr.mxu0 0.0
    %1935 = vmatpush1.msra.mxu0 %v1858
    %1936 = vmatprep.subr.mxu0 0.0
    %1937 = vmatpush1.msra.mxu0 %v1859
    %1938 = vmatprep.subr.mxu0 0.0
    %1939 = vmatpush1.msra.mxu0 %v1860
    %1940 = vmatprep.subr.mxu0 0.0
    %1941 = vmatpush1.msra.mxu0 %v1861
    %1942 = vmatprep.subr.mxu0 0.0
    %1943 = vmatpush1.msra.mxu0 %v1862
    %1944 = vmatprep.subr.mxu0 0.0
    %1945 = vmatpush1.msra.mxu0 %v1863
    %1946 = vmatprep.subr.mxu0 0.0
    %1947 = vmatpush1.msra.mxu0 %v1864
    %1948 = vmatprep.subr.mxu0 0.0
    %1949 = vmatpush1.msra.mxu0 %v1865
    %1950 = vmatprep.subr.mxu0 0.0
    %1951 = vmatpush1.msra.mxu0 %v1866
    %1952 = vmatprep.subr.mxu0 0.0
    %1953 = vmatpush1.msra.mxu0 %v1867
    %1954 = vmatprep.mubr.f32.mxu0 %v1691
    %1955 = vmatmul.mubr.f32.gmra.mrb[0].mxu0 %v104
    %v1956 = vpop.f32.mrb[0].mxu0
    %v1957 = vadd.f32 %v1888, %v1956
    %v1958 = vpop.f32.mrb[0].mxu0
    %1959 = vdwg.mxu0
    %1960 = vmatprep.subr.mxu0 0.0
    %1961 = vmatpush1.msra.mxu0 %v1868
    %1962 = vmatprep.subr.mxu0 0.0
    %1963 = vmatpush1.msra.mxu0 %v1869
    %1964 = vmatprep.subr.mxu0 0.0
    %1965 = vmatpush1.msra.mxu0 %v1870
    %1966 = vmatprep.subr.mxu0 0.0
    %1967 = vmatpush1.msra.mxu0 %v1871
    %1968 = vmatprep.subr.mxu0 0.0
    %1969 = vmatpush1.msra.mxu0 %v1872
    %1970 = vmatprep.subr.mxu0 0.0
    %1971 = vmatpush1.msra.mxu0 %v1873
    %1972 = vmatprep.subr.mxu0 0.0
    %1973 = vmatpush1.msra.mxu0 %v1874
    %1974 = vmatprep.subr.mxu0 0.0
    %1975 = vmatpush1.msra.mxu0 %v1875
    %1976 = vmatprep.subr.mxu0 0.0
    %1977 = vmatpush1.msra.mxu0 %v1876
    %1978 = vmatprep.subr.mxu0 0.0
    %1979 = vmatpush1.msra.mxu0 %v1877
    %1980 = vmatprep.subr.mxu0 0.0
    %1981 = vmatpush1.msra.mxu0 %v1878
    %1982 = vmatprep.subr.mxu0 0.0
    %1983 = vmatpush1.msra.mxu0 %v1879
    %1984 = vmatprep.subr.mxu0 0.0
    %1985 = vmatpush1.msra.mxu0 %v1880
    %1986 = vmatprep.subr.mxu0 0.0
    %1987 = vmatpush1.msra.mxu0 %v1881
    %1988 = vmatprep.subr.mxu0 0.0
    %1989 = vmatpush1.msra.mxu0 %v1882
    %1990 = vmatprep.subr.mxu0 0.0
    %1991 = vmatpush1.msra.mxu0 %v1883
    %1992 = vmatprep.subr.mxu0 0.0
    %1993 = vmatpush1.msra.mxu0 0.0
    %1994 = vmatprep.subr.mxu0 0.0
    %1995 = vmatpush1.msra.mxu0 0.0
    %1996 = vmatprep.subr.mxu0 0.0
    %1997 = vmatpush1.msra.mxu0 0.0
    %1998 = vmatprep.subr.mxu0 0.0
    %1999 = vmatpush1.msra.mxu0 0.0
    %2000 = vmatprep.subr.mxu0 0.0
    %2001 = vmatpush1.msra.mxu0 0.0
    %2002 = vmatprep.subr.mxu0 0.0
    %2003 = vmatpush1.msra.mxu0 0.0
    %2004 = vmatprep.subr.mxu0 0.0
    %2005 = vmatpush1.msra.mxu0 0.0
    %2006 = vmatprep.subr.mxu0 0.0
    %2007 = vmatpush1.msra.mxu0 0.0
    %2008 = vmatprep.subr.mxu0 0.0
    %2009 = vmatpush1.msra.mxu0 0.0
    %2010 = vmatprep.subr.mxu0 0.0
    %2011 = vmatpush1.msra.mxu0 0.0
    %2012 = vmatprep.subr.mxu0 0.0
    %2013 = vmatpush1.msra.mxu0 0.0
    %2014 = vmatprep.subr.mxu0 0.0
    %2015 = vmatpush1.msra.mxu0 0.0
    %2016 = vmatprep.subr.mxu0 0.0
    %2017 = vmatpush1.msra.mxu0 0.0
    %2018 = vmatprep.subr.mxu0 0.0
    %2019 = vmatpush1.msra.mxu0 0.0
    %2020 = vmatprep.subr.mxu0 0.0
    %2021 = vmatpush1.msra.mxu0 0.0
    %2022 = vmatprep.subr.mxu0 0.0
    %2023 = vmatpush1.msra.mxu0 0.0
    %2024 = vmatprep.mubr.f32.mxu0 0.0
    %2025 = vmatmul.mubr.f32.gmra.mrb[0].mxu0 %v1824
    %v2026 = vpop.f32.mrb[0].mxu0
    %v2027 = vadd.f32 %v1957, %v2026
    %v2028 = vpop.f32.mrb[0].mxu0
    %2029 = vdwg.mxu0
    %v2030 = vmax.f32 %v2027, 0.0
    %s2031 = scalar_lea.vmem [#allocation8], 512
    %v2032 = vld [vmem:[%s2031] sm:$0xff]
    %v2033 = vld [vmem:[%s2031 + $0x8] sm:$0xff]
    %v2034 = vld [vmem:[%s2031 + $0x10] sm:$0xff]
    %v2035 = vld [vmem:[%s2031 + $0x18] sm:$0xff]
    %v2036 = vld [vmem:[%s2031 + $0x20] sm:$0xff]
    %v2037 = vld [vmem:[%s2031 + $0x28] sm:$0xff]
    %v2038 = vld [vmem:[%s2031 + $0x30] sm:$0xff]
    %v2039 = vld [vmem:[%s2031 + $0x38] sm:$0xff]
    %v2040 = vld [vmem:[%s2031 + $0x40] sm:$0xff]
    %v2041 = vld [vmem:[%s2031 + $0x48] sm:$0xff]
    %v2042 = vld [vmem:[%s2031 + $0x50] sm:$0xff]
    %v2043 = vld [vmem:[%s2031 + $0x58] sm:$0xff]
    %v2044 = vld [vmem:[%s2031 + $0x60] sm:$0xff]
    %v2045 = vld [vmem:[%s2031 + $0x68] sm:$0xff]
    %v2046 = vld [vmem:[%s2031 + $0x70] sm:$0xff]
    %v2047 = vld [vmem:[%s2031 + $0x78] sm:$0xff]
    %v2049 = vlaneseq
    %v2050 = vshrl.u32 %v2049, 7
    %v2051 = vsub.s32 0, %v2050
    %v2052 = vrot.slane %v1833, %v2051
    %2054 = vmatprep.subr.mxu0 0.0
    %2055 = vmatpush1.msra.mxu0 %v2032
    %2056 = vmatprep.subr.mxu0 0.0
    %2057 = vmatpush1.msra.mxu0 %v2033
    %2058 = vmatprep.subr.mxu0 0.0
    %2059 = vmatpush1.msra.mxu0 %v2034
    %2060 = vmatprep.subr.mxu0 0.0
    %2061 = vmatpush1.msra.mxu0 %v2035
    %2062 = vmatprep.subr.mxu0 0.0
    %2063 = vmatpush1.msra.mxu0 %v2036
    %2064 = vmatprep.subr.mxu0 0.0
    %2065 = vmatpush1.msra.mxu0 %v2037
    %2066 = vmatprep.subr.mxu0 0.0
    %2067 = vmatpush1.msra.mxu0 %v2038
    %2068 = vmatprep.subr.mxu0 0.0
    %2069 = vmatpush1.msra.mxu0 %v2039
    %2070 = vmatprep.subr.mxu0 0.0
    %2071 = vmatpush1.msra.mxu0 %v2040
    %2072 = vmatprep.subr.mxu0 0.0
    %2073 = vmatpush1.msra.mxu0 %v2041
    %2074 = vmatprep.subr.mxu0 0.0
    %2075 = vmatpush1.msra.mxu0 %v2042
    %2076 = vmatprep.subr.mxu0 0.0
    %2077 = vmatpush1.msra.mxu0 %v2043
    %2078 = vmatprep.subr.mxu0 0.0
    %2079 = vmatpush1.msra.mxu0 %v2044
    %2080 = vmatprep.subr.mxu0 0.0
    %2081 = vmatpush1.msra.mxu0 %v2045
    %2082 = vmatprep.subr.mxu0 0.0
    %2083 = vmatpush1.msra.mxu0 %v2046
    %2084 = vmatprep.subr.mxu0 0.0
    %2085 = vmatpush1.msra.mxu0 %v2047
    %2086 = vmatprep.subr.mxu0 0.0
    %2087 = vmatpush1.msra.mxu0 0.0
    %2088 = vmatprep.subr.mxu0 0.0
    %2089 = vmatpush1.msra.mxu0 0.0
    %2090 = vmatprep.subr.mxu0 0.0
    %2091 = vmatpush1.msra.mxu0 0.0
    %2092 = vmatprep.subr.mxu0 0.0
    %2093 = vmatpush1.msra.mxu0 0.0
    %2094 = vmatprep.subr.mxu0 0.0
    %2095 = vmatpush1.msra.mxu0 0.0
    %2096 = vmatprep.subr.mxu0 0.0
    %2097 = vmatpush1.msra.mxu0 0.0
    %2098 = vmatprep.subr.mxu0 0.0
    %2099 = vmatpush1.msra.mxu0 0.0
    %2100 = vmatprep.subr.mxu0 0.0
    %2101 = vmatpush1.msra.mxu0 0.0
    %2102 = vmatprep.subr.mxu0 0.0
    %2103 = vmatpush1.msra.mxu0 0.0
    %2104 = vmatprep.subr.mxu0 0.0
    %2105 = vmatpush1.msra.mxu0 0.0
    %2106 = vmatprep.subr.mxu0 0.0
    %2107 = vmatpush1.msra.mxu0 0.0
    %2108 = vmatprep.subr.mxu0 0.0
    %2109 = vmatpush1.msra.mxu0 0.0
    %2110 = vmatprep.subr.mxu0 0.0
    %2111 = vmatpush1.msra.mxu0 0.0
    %2112 = vmatprep.subr.mxu0 0.0
    %2113 = vmatpush1.msra.mxu0 0.0
    %2114 = vmatprep.subr.mxu0 0.0
    %2115 = vmatpush1.msra.mxu0 0.0
    %2116 = vmatprep.subr.mxu0 0.0
    %2117 = vmatpush1.msra.mxu0 0.0
    %2118 = vmatprep.mubr.f32.mxu0 0.0
    %2119 = vmatmul.mubr.f32.gmra.mrb[0].mxu0 %v2030
    %v2120 = vpop.f32.mrb[0].mxu0
    %v2121 = vadd.f32 %v2052, %v2120
    %v2122 = vpop.f32.mrb[0].mxu0
    %2123 = vdwg.mxu0
    %v2124 = vmax.f32 %v2121, 0.0
    %s2125 = scalar_lea.vmem [#allocation10], 1024
    %v2126 = vld [vmem:[%s2125] sm:$0xff]
    %v2127 = vld [vmem:[%s2125 + $0x8] sm:$0xff]
    %v2128 = vld [vmem:[%s2125 + $0x10] sm:$0xff]
    %v2129 = vld [vmem:[%s2125 + $0x18] sm:$0xff]
    %v2130 = vld [vmem:[%s2125 + $0x20] sm:$0xff]
    %v2131 = vld [vmem:[%s2125 + $0x28] sm:$0xff]
    %v2132 = vld [vmem:[%s2125 + $0x30] sm:$0xff]
    %v2133 = vld [vmem:[%s2125 + $0x38] sm:$0xff]
    %v2134 = vld [vmem:[%s2125 + $0x40] sm:$0xff]
    %v2135 = vld [vmem:[%s2125 + $0x48] sm:$0xff]
    %v2136 = vld [vmem:[%s2125 + $0x50] sm:$0xff]
    %v2137 = vld [vmem:[%s2125 + $0x58] sm:$0xff]
    %v2138 = vld [vmem:[%s2125 + $0x60] sm:$0xff]
    %v2139 = vld [vmem:[%s2125 + $0x68] sm:$0xff]
    %v2140 = vld [vmem:[%s2125 + $0x70] sm:$0xff]
    %v2141 = vld [vmem:[%s2125 + $0x78] sm:$0xff]
    %v2142 = vld [vmem:[%s2125 + $0x80] sm:$0xff]
    %v2143 = vld [vmem:[%s2125 + $0x88] sm:$0xff]
    %v2144 = vld [vmem:[%s2125 + $0x90] sm:$0xff]
    %v2145 = vld [vmem:[%s2125 + $0x98] sm:$0xff]
    %v2146 = vld [vmem:[%s2125 + $0xa0] sm:$0xff]
    %v2147 = vld [vmem:[%s2125 + $0xa8] sm:$0xff]
    %v2148 = vld [vmem:[%s2125 + $0xb0] sm:$0xff]
    %v2149 = vld [vmem:[%s2125 + $0xb8] sm:$0xff]
    %v2150 = vld [vmem:[%s2125 + $0xc0] sm:$0xff]
    %v2151 = vld [vmem:[%s2125 + $0xc8] sm:$0xff]
    %v2152 = vld [vmem:[%s2125 + $0xd0] sm:$0xff]
    %v2153 = vld [vmem:[%s2125 + $0xd8] sm:$0xff]
    %v2154 = vld [vmem:[%s2125 + $0xe0] sm:$0xff]
    %v2155 = vld [vmem:[%s2125 + $0xe8] sm:$0xff]
    %v2156 = vld [vmem:[%s2125 + $0xf0] sm:$0xff]
    %v2157 = vld [vmem:[%s2125 + $0xf8] sm:$0xff]
    %v2159 = vlaneseq
    %v2160 = vshrl.u32 %v2159, 7
    %v2161 = vsub.s32 0, %v2160
    %v2162 = vrot.slane %v1834, %v2161
    %v2163 = vlaneseq
    %v2164 = vshrl.u32 %v2163, 7
    %v2165 = vsub.s32 1, %v2164
    %v2166 = vrot.slane %v1834, %v2165
    %2169 = vmatprep.subr.mxu0 %v2127
    %2170 = vmatpush1.msra.mxu0 %v2126
    %2171 = vmatprep.subr.mxu0 %v2129
    %2172 = vmatpush1.msra.mxu0 %v2128
    %2173 = vmatprep.subr.mxu0 %v2131
    %2174 = vmatpush1.msra.mxu0 %v2130
    %2175 = vmatprep.subr.mxu0 %v2133
    %2176 = vmatpush1.msra.mxu0 %v2132
    %2177 = vmatprep.subr.mxu0 %v2135
    %2178 = vmatpush1.msra.mxu0 %v2134
    %2179 = vmatprep.subr.mxu0 %v2137
    %2180 = vmatpush1.msra.mxu0 %v2136
    %2181 = vmatprep.subr.mxu0 %v2139
    %2182 = vmatpush1.msra.mxu0 %v2138
    %2183 = vmatprep.subr.mxu0 %v2141
    %2184 = vmatpush1.msra.mxu0 %v2140
    %2185 = vmatprep.subr.mxu0 %v2143
    %2186 = vmatpush1.msra.mxu0 %v2142
    %2187 = vmatprep.subr.mxu0 %v2145
    %2188 = vmatpush1.msra.mxu0 %v2144
    %2189 = vmatprep.subr.mxu0 %v2147
    %2190 = vmatpush1.msra.mxu0 %v2146
    %2191 = vmatprep.subr.mxu0 %v2149
    %2192 = vmatpush1.msra.mxu0 %v2148
    %2193 = vmatprep.subr.mxu0 %v2151
    %2194 = vmatpush1.msra.mxu0 %v2150
    %2195 = vmatprep.subr.mxu0 %v2153
    %2196 = vmatpush1.msra.mxu0 %v2152
    %2197 = vmatprep.subr.mxu0 %v2155
    %2198 = vmatpush1.msra.mxu0 %v2154
    %2199 = vmatprep.subr.mxu0 %v2157
    %2200 = vmatpush1.msra.mxu0 %v2156
    %2201 = vmatprep.subr.mxu0 0.0
    %2202 = vmatpush1.msra.mxu0 0.0
    %2203 = vmatprep.subr.mxu0 0.0
    %2204 = vmatpush1.msra.mxu0 0.0
    %2205 = vmatprep.subr.mxu0 0.0
    %2206 = vmatpush1.msra.mxu0 0.0
    %2207 = vmatprep.subr.mxu0 0.0
    %2208 = vmatpush1.msra.mxu0 0.0
    %2209 = vmatprep.subr.mxu0 0.0
    %2210 = vmatpush1.msra.mxu0 0.0
    %2211 = vmatprep.subr.mxu0 0.0
    %2212 = vmatpush1.msra.mxu0 0.0
    %2213 = vmatprep.subr.mxu0 0.0
    %2214 = vmatpush1.msra.mxu0 0.0
    %2215 = vmatprep.subr.mxu0 0.0
    %2216 = vmatpush1.msra.mxu0 0.0
    %2217 = vmatprep.subr.mxu0 0.0
    %2218 = vmatpush1.msra.mxu0 0.0
    %2219 = vmatprep.subr.mxu0 0.0
    %2220 = vmatpush1.msra.mxu0 0.0
    %2221 = vmatprep.subr.mxu0 0.0
    %2222 = vmatpush1.msra.mxu0 0.0
    %2223 = vmatprep.subr.mxu0 0.0
    %2224 = vmatpush1.msra.mxu0 0.0
    %2225 = vmatprep.subr.mxu0 0.0
    %2226 = vmatpush1.msra.mxu0 0.0
    %2227 = vmatprep.subr.mxu0 0.0
    %2228 = vmatpush1.msra.mxu0 0.0
    %2229 = vmatprep.subr.mxu0 0.0
    %2230 = vmatpush1.msra.mxu0 0.0
    %2231 = vmatprep.subr.mxu0 0.0
    %2232 = vmatpush1.msra.mxu0 0.0
    %2233 = vmatprep.mubr.f32.mxu0 0.0
    %2234 = vmatmul.mubr.f32.gmra.mrb[0].mxu0 %v2124
    %v2235 = vpop.f32.mrb[0].mxu0
    %v2236 = vadd.f32 %v2162, %v2235
    %v2237 = vpop.f32.mrb[0].mxu0
    %v2238 = vadd.f32 %v2166, %v2237
    %2239 = vdwg.mxu0
    %vm2240 = vcmp.gt.f32.partialorder %v2238, 20.0
    %v2241 = vmin.f32 %v2238, 20.0
    %v2242 = vmul.f32 %v2241, 1.442695
    %v2243 = vpow.pop %v2242
    %v2244 = vadd.f32 %v2243, 1.0
    %v2245 = vlog2.pop %v2244
    %v2246 = vmul.f32 %v2245, 0.6931472
    %v2247 = vmul.f32 -0.5, %v2243
    %v2248 = vadd.f32 %v2247, 1.0
    %v2249 = vmul.f32 %v2248, %v2243
    %v2250 = vand.u32 2147483647, %v2243
    %vm2251 = vcmp.lt.f32.partialorder %v2250, 0.0004427343
    %v2252 = vsel %vm2251, %v2249, %v2246
    %v2253 = vsel %vm2240, %v2238, %v2252
    %s2254 = scalar_lea.vmem [#allocation5], 32
    %v2255 = vld [vmem:[%s2254] sm:$0xff]
    %v2256 = vmul.f32 %v2253, %v2255
    %v2257 = vadd.f32 %v2236, %v2256
    %s2258 = scalar_lea.vmem [#allocation13], 32
    %2259 = vst [vmem:[%s2258] sm:$0xff] %v2257
    %s2260 = scalar_lea.vmem [#allocation13], 72
    %2261 = vst [vmem:[%s2260] sm:$0xff] %v2236
    %s2262 = scalar_lea.vmem [#allocation13], 112
    %2263 = vst [vmem:[%s2262] sm:$0xff] %v2253
    // Predicated region
    $region50: #{tpu_custom_call.1} parent=1 // pred_check
      _
    $region51: #{tpu_custom_call.1} parent=1 // pred_check_branch
      %2265 = sbr.rel (0) target = $region53
    $region52: #{tpu_custom_call.1} parent=1 // pred_region
      %s2267 = ssub.s32 1920, 1920
      %2268 = vsyncadd [#allocation4], %s2267
      %s2269 = sshll.u32 [#allocation13], 4
      %s2270 = int_to_ptr.vmem [resolvable:$true] %s2269
      %2275 = dma.vmem_to_hbm [thread:$0]  %s2270, 1920, %s6, [#allocation4], 128, 128, 8
    $region53: #{tpu_custom_call.1} parent=1 // pred_fallthru
      _
    // Predicated region
    $region54: #{tpu_custom_call.1} parent=1 // pred_check
      _
    $region55: #{tpu_custom_call.1} parent=1 // pred_check_branch
      %2277 = sbr.rel (0) target = $region57
    $region56: #{tpu_custom_call.1} parent=1 // pred_region
      %2278 = dma.done [#allocation4], 1920
    $region57: #{tpu_custom_call.1} parent=1 // pred_fallthru
      _
    %2279 = vsyncpa [#allocation3], 1
    %2280 = vsyncpa [#allocation6], 1
    %2281 = vsyncpa [#allocation9], 1
    %2282 = vsyncpa [#allocation12], 1
    %2283 = vsyncpa [#allocation4], 1

</llo_original>
